<compile_context>
chip_gen: v7x
topology: tpu7x:2x2x1
jax: 0.10.0
libtpu: 0.0.40
codegen_flags: <defaults>
</compile_context>

<pallas_src>
import functools
import math

import jax
import jax.numpy as jnp
import numpy as np
from jax.experimental import pallas as pl
from jax.experimental.pallas import tpu as pltpu


def transformer_kernel(x_ref, w_emb_ref, b_emb_ref, pos_ref,
                       g1_ref, be1_ref, wqkv_ref, bqkv_ref, wpr_ref, bpr_ref,
                       g2_ref, be2_ref, w1_ref, bf1_ref, w2_ref, bf2_ref,
                       pool_ref, wh_ref, bh_ref, out_ref, *, n_head):
    T, E = pos_ref.shape
    L = wqkv_ref.shape[0]
    Dh = E // n_head
    scale = 1.0 / math.sqrt(Dh)

    # ---- to_embedding: Linear(1, E) applied to x.unfold(1,1,1), + pos embedding ----
    xv = x_ref[0]                                     # (T, 1) f32
    h = xv * w_emb_ref[...] + b_emb_ref[...] + pos_ref[...]        # (T, E)

    def layer_norm(z, g, b):
        mu = jnp.mean(z, axis=-1, keepdims=True)
        zc = z - mu
        var = jnp.mean(zc * zc, axis=-1, keepdims=True)
        return zc * jax.lax.rsqrt(var + 1e-5) * g + b

    # ---- transformer blocks (static layer loop, L is small) -----------------------
    for l in range(L):
        # --- self-attention on ln1(h) ---
        xn = layer_norm(h, g1_ref[l], be1_ref[l])
        qkv = jnp.dot(xn, wqkv_ref[l],
                      preferred_element_type=jnp.float32) + bqkv_ref[l]   # (T, 3E)

        y = jnp.zeros((T, E), jnp.float32)        # projected attention output accum
        for hd in range(n_head):
            q = qkv[:, hd * Dh:(hd + 1) * Dh]                             # (T, Dh)
            k = qkv[:, E + hd * Dh:E + (hd + 1) * Dh]                     # (T, Dh)
            v = qkv[:, 2 * E + hd * Dh:2 * E + (hd + 1) * Dh]             # (T, Dh)
            att = jax.lax.dot_general(                                    # q @ k^T
                q, k, (((1,), (1,)), ((), ())),
                preferred_element_type=jnp.float32) * scale               # (T, T)
            att = att - jnp.max(att, axis=-1, keepdims=True)
            att = jnp.exp(att)
            att = att / jnp.sum(att, axis=-1, keepdims=True)              # softmax
            yh = jnp.dot(att, v, preferred_element_type=jnp.float32)      # (T, Dh)
            # accumulate this head's slice of the output projection
            y = y + jnp.dot(yh, wpr_ref[l, hd],
                            preferred_element_type=jnp.float32)           # (T, E)
        h = h + y + bpr_ref[l]                                            # residual 1

        # --- feed-forward on ln2(h) ---
        xn2 = layer_norm(h, g2_ref[l], be2_ref[l])
        f = jnp.dot(xn2, w1_ref[l], preferred_element_type=jnp.float32) + bf1_ref[l]
        # GELU (tanh approximation of nn.GELU())
        f = 0.5 * f * (1.0 + jnp.tanh(0.7978845608028654
                                      * (f + 0.044715 * f * f * f)))
        f = jnp.dot(f, w2_ref[l], preferred_element_type=jnp.float32) + bf2_ref[l]
        h = h + f                                                         # residual 2

    # ---- suffix-mean pooling as one MXU matmul: pool (P, T) @ h (T, E) -------------
    pooled = jnp.dot(pool_ref[...], h, preferred_element_type=jnp.float32)   # (P, E)

    # ---- head: Conv1d(P, P, kernel_size=E, groups=P) == per-row dot product --------
    out = jnp.sum(pooled * wh_ref[...], axis=-1, keepdims=True) + bh_ref[...]  # (P,1)
    out_ref[0] = out


def _zero_index_map(n):
    zeros = (0,) * n
    return lambda b: zeros


def point_transformer2_forward(x, time, params, *, n_head):
    """x: (batch, n_lags) float32.  `time` is unused by the reference forward."""
    del time
    B, T = x.shape
    E = params["pos"].shape[1]
    P = params["wh"].shape[0]
    assert E % n_head == 0 and P <= T

    # suffix-mean pooling matrix: row i-1 averages the last i tokens
    pool_np = np.zeros((P, T), np.float32)
    for i in range(1, P + 1):
        pool_np[i - 1, T - i:] = 1.0 / i
    pool = jnp.asarray(pool_np)

    x3 = x.astype(jnp.float32)[:, :, None]          # == x.unfold(dim=1, size=1, step=1)
    args = (x3, params["w_emb"], params["b_emb"], params["pos"],
            params["g1"], params["be1"], params["wqkv"], params["bqkv"],
            params["wproj"], params["bproj"], params["g2"], params["be2"],
            params["w1"], params["bf1"], params["w2"], params["bf2"],
            pool, params["wh"], params["bh"])

    in_specs = ([pl.BlockSpec((1, T, 1), lambda b: (b, 0, 0))]
                + [pl.BlockSpec(a.shape, _zero_index_map(a.ndim)) for a in args[1:]])

    out = pl.pallas_call(
        functools.partial(transformer_kernel, n_head=n_head),
        out_shape=jax.ShapeDtypeStruct((B, P, 1), jnp.float32),
        grid=(B,),
        in_specs=in_specs,
        out_specs=pl.BlockSpec((1, P, 1), lambda b: (b, 0, 0)),
        compiler_params=pltpu.CompilerParams(
            dimension_semantics=("parallel",)),
    )(*args)
    return out[:, :, 0]                             # (B, period)


def init_params(key, n_lags, n_embed, n_head, n_layers, mlp_dim, period):
    E, M, T, L, P = n_embed, mlp_dim, n_lags, n_layers, period
    Dh = E // n_head
    u = jax.random.uniform
    ks = list(jax.random.split(key, 3 + L))
    k_emb, k_pos, k_head = ks[0], ks[1], ks[2]
    layer_keys = ks[3:3 + L]

    def linear(k, fan_in, shape_w, shape_b):
        s = 1.0 / np.sqrt(fan_in)
        kw, kb = jax.random.split(k)
        return (u(kw, shape_w, jnp.float32, -s, s),
                u(kb, shape_b, jnp.float32, -s, s))

    # to_embedding: Linear(1, E); weight stored transposed (1, E)
    w_emb, b_emb = linear(k_emb, 1, (1, E), (1, E))
    pos = jax.random.normal(k_pos, (T, E), jnp.float32)

    wqkv, bqkv, wproj, bproj, w1, bf1, w2, bf2 = [], [], [], [], [], [], [], []
    for kl in layer_keys:
        k1, k2, k3, k4 = jax.random.split(kl, 4)
        wq, bq = linear(k1, E, (E, 3 * E), (1, 3 * E))   # fused [Wq | Wk | Wv]
        wp, bp = linear(k2, E, (E, E), (1, E))           # attn output proj
        wa, ba = linear(k3, E, (E, M), (1, M))           # FFN up
        wb, bb = linear(k4, M, (M, E), (1, E))           # FFN down
        wqkv.append(wq); bqkv.append(bq)
        # pre-split the output projection rows per head: (E, E) -> (n_head, Dh, E)
        wproj.append(wp.reshape(n_head, Dh, E)); bproj.append(bp)
        w1.append(wa); bf1.append(ba)
        w2.append(wb); bf2.append(bb)

    # head: Conv1d(P, P, kernel_size=E, groups=P): weight (P,1,E) -> (P,E), bias (P,1)
    wh, bh = linear(k_head, E, (P, E), (P, 1))

    return {
        "w_emb": w_emb, "b_emb": b_emb, "pos": pos,
        "g1": jnp.ones((L, 1, E), jnp.float32),
        "be1": jnp.zeros((L, 1, E), jnp.float32),
        "wqkv": jnp.stack(wqkv), "bqkv": jnp.stack(bqkv),
        "wproj": jnp.stack(wproj), "bproj": jnp.stack(bproj),
        "g2": jnp.ones((L, 1, E), jnp.float32),
        "be2": jnp.zeros((L, 1, E), jnp.float32),
        "w1": jnp.stack(w1), "bf1": jnp.stack(bf1),
        "w2": jnp.stack(w2), "bf2": jnp.stack(bf2),
        "wh": wh, "bh": bh,
    }


if __name__ == "__main__":
    # Small deterministic example consistent with the module's forward:
    #   x: (batch, n_lags); n_embed divisible by n_head; period <= n_lags.
    batch, n_lags = 2, 8
    n_embed, n_head, n_layers, mlp_dim, period = 32, 4, 2, 64, 4

    key = jax.random.PRNGKey(0)
    k_x, k_t, k_p = jax.random.split(key, 3)
    x = jax.random.normal(k_x, (batch, n_lags), jnp.float32)
    time = jax.random.normal(k_t, (batch, n_lags), jnp.float32)   # unused by forward
    params = init_params(k_p, n_lags, n_embed, n_head, n_layers, mlp_dim, period)

    out = point_transformer2_forward(x, time, params, n_head=n_head)
    jax.block_until_ready(out)
    assert out.shape == (batch, period), out.shape
    assert bool(jnp.all(jnp.isfinite(out)))
    print("KERNEL_OK")
</pallas_src>

<mosaic_0001>
module attributes {stable_mosaic.version = 11 : i64} {
  func.func @transformer_kernel(%arg0: i32, %arg1: memref<1x8x1xf32, #tpu.memory_space<vmem>>, %arg2: memref<1x32xf32, #tpu.memory_space<vmem>>, %arg3: memref<1x32xf32, #tpu.memory_space<vmem>>, %arg4: memref<8x32xf32, #tpu.memory_space<vmem>>, %arg5: memref<2x1x32xf32, #tpu.memory_space<vmem>>, %arg6: memref<2x1x32xf32, #tpu.memory_space<vmem>>, %arg7: memref<2x32x96xf32, #tpu.memory_space<vmem>>, %arg8: memref<2x1x96xf32, #tpu.memory_space<vmem>>, %arg9: memref<2x4x8x32xf32, #tpu.memory_space<vmem>>, %arg10: memref<2x1x32xf32, #tpu.memory_space<vmem>>, %arg11: memref<2x1x32xf32, #tpu.memory_space<vmem>>, %arg12: memref<2x1x32xf32, #tpu.memory_space<vmem>>, %arg13: memref<2x32x64xf32, #tpu.memory_space<vmem>>, %arg14: memref<2x1x64xf32, #tpu.memory_space<vmem>>, %arg15: memref<2x64x32xf32, #tpu.memory_space<vmem>>, %arg16: memref<2x1x32xf32, #tpu.memory_space<vmem>>, %arg17: memref<4x8xf32, #tpu.memory_space<vmem>>, %arg18: memref<4x32xf32, #tpu.memory_space<vmem>>, %arg19: memref<4x1xf32, #tpu.memory_space<vmem>>, %arg20: memref<1x4x1xf32, #tpu.memory_space<vmem>>) attributes {dimension_semantics = [#tpu.dimension_semantics<parallel>], iteration_bounds = array<i64: 2>, scalar_prefetch = 0 : i64, scratch_operands = 0 : i64, tpu.core_type = #tpu.core_type<tc>, window_params = [{transform_indices = @transform_0, window_bounds = array<i64: 1, 8, 1>}, {pipeline_mode = #tpu.pipeline_mode<synchronous>, transform_indices = @transform_1, window_bounds = array<i64: 1, 32>}, {pipeline_mode = #tpu.pipeline_mode<synchronous>, transform_indices = @transform_2, window_bounds = array<i64: 1, 32>}, {pipeline_mode = #tpu.pipeline_mode<synchronous>, transform_indices = @transform_3, window_bounds = array<i64: 8, 32>}, {pipeline_mode = #tpu.pipeline_mode<synchronous>, transform_indices = @transform_4, window_bounds = array<i64: 2, 1, 32>}, {pipeline_mode = #tpu.pipeline_mode<synchronous>, transform_indices = @transform_5, window_bounds = array<i64: 2, 1, 32>}, {pipeline_mode = #tpu.pipeline_mode<synchronous>, transform_indices = @transform_6, window_bounds = array<i64: 2, 32, 96>}, {pipeline_mode = #tpu.pipeline_mode<synchronous>, transform_indices = @transform_7, window_bounds = array<i64: 2, 1, 96>}, {pipeline_mode = #tpu.pipeline_mode<synchronous>, transform_indices = @transform_8, window_bounds = array<i64: 2, 4, 8, 32>}, {pipeline_mode = #tpu.pipeline_mode<synchronous>, transform_indices = @transform_9, window_bounds = array<i64: 2, 1, 32>}, {pipeline_mode = #tpu.pipeline_mode<synchronous>, transform_indices = @transform_10, window_bounds = array<i64: 2, 1, 32>}, {pipeline_mode = #tpu.pipeline_mode<synchronous>, transform_indices = @transform_11, window_bounds = array<i64: 2, 1, 32>}, {pipeline_mode = #tpu.pipeline_mode<synchronous>, transform_indices = @transform_12, window_bounds = array<i64: 2, 32, 64>}, {pipeline_mode = #tpu.pipeline_mode<synchronous>, transform_indices = @transform_13, window_bounds = array<i64: 2, 1, 64>}, {pipeline_mode = #tpu.pipeline_mode<synchronous>, transform_indices = @transform_14, window_bounds = array<i64: 2, 64, 32>}, {pipeline_mode = #tpu.pipeline_mode<synchronous>, transform_indices = @transform_15, window_bounds = array<i64: 2, 1, 32>}, {pipeline_mode = #tpu.pipeline_mode<synchronous>, transform_indices = @transform_16, window_bounds = array<i64: 4, 8>}, {pipeline_mode = #tpu.pipeline_mode<synchronous>, transform_indices = @transform_17, window_bounds = array<i64: 4, 32>}, {pipeline_mode = #tpu.pipeline_mode<synchronous>, transform_indices = @transform_18, window_bounds = array<i64: 4, 1>}, {transform_indices = @transform_19, window_bounds = array<i64: 1, 4, 1>}]} {
    %c0 = arith.constant 0 : index
    %c0_0 = arith.constant 0 : index
    %c0_1 = arith.constant 0 : index
    %0 = vector.load %arg1[%c0, %c0_0, %c0_1] : memref<1x8x1xf32, #tpu.memory_space<vmem>>, vector<1x8x1xf32>
    %1 = vector.shape_cast %0 : vector<1x8x1xf32> to vector<8x1xf32>
    %c0_2 = arith.constant 0 : index
    %c0_3 = arith.constant 0 : index
    %2 = vector.load %arg2[%c0_2, %c0_3] : memref<1x32xf32, #tpu.memory_space<vmem>>, vector<1x32xf32>
    %3 = vector.broadcast %1 : vector<8x1xf32> to vector<8x32xf32>
    %4 = vector.broadcast %2 : vector<1x32xf32> to vector<8x32xf32>
    %5 = arith.mulf %3, %4 : vector<8x32xf32>
    %c0_4 = arith.constant 0 : index
    %c0_5 = arith.constant 0 : index
    %6 = vector.load %arg3[%c0_4, %c0_5] : memref<1x32xf32, #tpu.memory_space<vmem>>, vector<1x32xf32>
    %7 = vector.broadcast %6 : vector<1x32xf32> to vector<8x32xf32>
    %8 = arith.addf %5, %7 : vector<8x32xf32>
    %c0_6 = arith.constant 0 : index
    %c0_7 = arith.constant 0 : index
    %9 = vector.load %arg4[%c0_6, %c0_7] : memref<8x32xf32, #tpu.memory_space<vmem>>, vector<8x32xf32>
    %10 = arith.addf %8, %9 : vector<8x32xf32>
    %c0_8 = arith.constant 0 : index
    %c0_9 = arith.constant 0 : index
    %c0_10 = arith.constant 0 : index
    %11 = vector.load %arg5[%c0_8, %c0_9, %c0_10] : memref<2x1x32xf32, #tpu.memory_space<vmem>>, vector<1x1x32xf32>
    %12 = vector.shape_cast %11 : vector<1x1x32xf32> to vector<1x32xf32>
    %c0_11 = arith.constant 0 : index
    %c0_12 = arith.constant 0 : index
    %c0_13 = arith.constant 0 : index
    %13 = vector.load %arg6[%c0_11, %c0_12, %c0_13] : memref<2x1x32xf32, #tpu.memory_space<vmem>>, vector<1x1x32xf32>
    %14 = vector.shape_cast %13 : vector<1x1x32xf32> to vector<1x32xf32>
    %cst = arith.constant dense<0.000000e+00> : vector<8xf32>
    %15 = vector.multi_reduction <add>, %10, %cst [1] : vector<8x32xf32> to vector<8xf32>
    %16 = vector.shape_cast %15 : vector<8xf32> to vector<8x1xf32>
    %cst_14 = arith.constant 3.200000e+01 : f32
    %17 = vector.broadcast %cst_14 : f32 to vector<8x1xf32>
    %18 = arith.divf %16, %17 : vector<8x1xf32>
    %19 = vector.broadcast %18 : vector<8x1xf32> to vector<8x32xf32>
    %20 = arith.subf %10, %19 : vector<8x32xf32>
    %21 = arith.mulf %20, %20 : vector<8x32xf32>
    %cst_15 = arith.constant dense<0.000000e+00> : vector<8xf32>
    %22 = vector.multi_reduction <add>, %21, %cst_15 [1] : vector<8x32xf32> to vector<8xf32>
    %23 = vector.shape_cast %22 : vector<8xf32> to vector<8x1xf32>
    %cst_16 = arith.constant 3.200000e+01 : f32
    %24 = vector.broadcast %cst_16 : f32 to vector<8x1xf32>
    %25 = arith.divf %23, %24 : vector<8x1xf32>
    %cst_17 = arith.constant 9.99999974E-6 : f32
    %26 = vector.broadcast %cst_17 : f32 to vector<8x1xf32>
    %27 = arith.addf %25, %26 : vector<8x1xf32>
    %28 = math.rsqrt %27 : vector<8x1xf32>
    %29 = vector.broadcast %28 : vector<8x1xf32> to vector<8x32xf32>
    %30 = arith.mulf %20, %29 : vector<8x32xf32>
    %31 = vector.broadcast %12 : vector<1x32xf32> to vector<8x32xf32>
    %32 = arith.mulf %30, %31 : vector<8x32xf32>
    %33 = vector.broadcast %14 : vector<1x32xf32> to vector<8x32xf32>
    %34 = arith.addf %32, %33 : vector<8x32xf32>
    %c0_18 = arith.constant 0 : index
    %c0_19 = arith.constant 0 : index
    %c0_20 = arith.constant 0 : index
    %35 = vector.load %arg7[%c0_18, %c0_19, %c0_20] : memref<2x32x96xf32, #tpu.memory_space<vmem>>, vector<1x32x96xf32>
    %36 = vector.shape_cast %35 : vector<1x32x96xf32> to vector<32x96xf32>
    %cst_21 = arith.constant dense<0.000000e+00> : vector<8x96xf32>
    %37 = tpu.matmul %34, %36, %cst_21 {dimension_numbers = #tpu.dot_dimension_numbers<[1], [0], [0], [1], [0, 0, 1, 1], [], []>} : vector<8x32xf32>, vector<32x96xf32>, vector<8x96xf32> -> vector<8x96xf32>
    %c0_22 = arith.constant 0 : index
    %c0_23 = arith.constant 0 : index
    %c0_24 = arith.constant 0 : index
    %38 = vector.load %arg8[%c0_22, %c0_23, %c0_24] : memref<2x1x96xf32, #tpu.memory_space<vmem>>, vector<1x1x96xf32>
    %39 = vector.shape_cast %38 : vector<1x1x96xf32> to vector<1x96xf32>
    %40 = vector.broadcast %39 : vector<1x96xf32> to vector<8x96xf32>
    %41 = arith.addf %37, %40 : vector<8x96xf32>
    %cst_25 = arith.constant 0.000000e+00 : f32
    %42 = vector.broadcast %cst_25 : f32 to vector<8x32xf32>
    %43 = vector.extract_strided_slice %41 {offsets = [0, 0], sizes = [8, 8], strides = [1, 1]} : vector<8x96xf32> to vector<8x8xf32>
    %44 = vector.extract_strided_slice %41 {offsets = [0, 32], sizes = [8, 8], strides = [1, 1]} : vector<8x96xf32> to vector<8x8xf32>
    %45 = vector.extract_strided_slice %41 {offsets = [0, 64], sizes = [8, 8], strides = [1, 1]} : vector<8x96xf32> to vector<8x8xf32>
    %cst_26 = arith.constant dense<0.000000e+00> : vector<8x8xf32>
    %46 = tpu.matmul %43, %44, %cst_26 {dimension_numbers = #tpu.dot_dimension_numbers<[1], [1], [0], [0], [0, 0, 1, 0], [], []>} : vector<8x8xf32>, vector<8x8xf32>, vector<8x8xf32> -> vector<8x8xf32>
    %cst_27 = arith.constant 0.353553385 : f32
    %47 = vector.broadcast %cst_27 : f32 to vector<8x8xf32>
    %48 = arith.mulf %46, %47 : vector<8x8xf32>
    %cst_28 = arith.constant dense<0xFF800000> : vector<8xf32>
    %49 = vector.multi_reduction <maximumf>, %48, %cst_28 [1] : vector<8x8xf32> to vector<8xf32>
    %50 = vector.shape_cast %49 : vector<8xf32> to vector<8x1xf32>
    %51 = vector.broadcast %50 : vector<8x1xf32> to vector<8x8xf32>
    %52 = arith.subf %48, %51 : vector<8x8xf32>
    %53 = math.exp %52 : vector<8x8xf32>
    %cst_29 = arith.constant dense<0.000000e+00> : vector<8xf32>
    %54 = vector.multi_reduction <add>, %53, %cst_29 [1] : vector<8x8xf32> to vector<8xf32>
    %55 = vector.shape_cast %54 : vector<8xf32> to vector<8x1xf32>
    %56 = vector.broadcast %55 : vector<8x1xf32> to vector<8x8xf32>
    %57 = arith.divf %53, %56 : vector<8x8xf32>
    %cst_30 = arith.constant dense<0.000000e+00> : vector<8x8xf32>
    %58 = tpu.matmul %57, %45, %cst_30 {dimension_numbers = #tpu.dot_dimension_numbers<[1], [0], [0], [1], [0, 0, 1, 1], [], []>} : vector<8x8xf32>, vector<8x8xf32>, vector<8x8xf32> -> vector<8x8xf32>
    %c0_31 = arith.constant 0 : index
    %c0_32 = arith.constant 0 : index
    %c0_33 = arith.constant 0 : index
    %c0_34 = arith.constant 0 : index
    %59 = vector.load %arg9[%c0_31, %c0_32, %c0_33, %c0_34] : memref<2x4x8x32xf32, #tpu.memory_space<vmem>>, vector<1x1x8x32xf32>
    %60 = vector.shape_cast %59 : vector<1x1x8x32xf32> to vector<8x32xf32>
    %cst_35 = arith.constant dense<0.000000e+00> : vector<8x32xf32>
    %61 = tpu.matmul %58, %60, %cst_35 {dimension_numbers = #tpu.dot_dimension_numbers<[1], [0], [0], [1], [0, 0, 1, 1], [], []>} : vector<8x8xf32>, vector<8x32xf32>, vector<8x32xf32> -> vector<8x32xf32>
    %62 = arith.addf %42, %61 : vector<8x32xf32>
    %63 = vector.extract_strided_slice %41 {offsets = [0, 8], sizes = [8, 8], strides = [1, 1]} : vector<8x96xf32> to vector<8x8xf32>
    %64 = vector.extract_strided_slice %41 {offsets = [0, 40], sizes = [8, 8], strides = [1, 1]} : vector<8x96xf32> to vector<8x8xf32>
    %65 = vector.extract_strided_slice %41 {offsets = [0, 72], sizes = [8, 8], strides = [1, 1]} : vector<8x96xf32> to vector<8x8xf32>
    %cst_36 = arith.constant dense<0.000000e+00> : vector<8x8xf32>
    %66 = tpu.matmul %63, %64, %cst_36 {dimension_numbers = #tpu.dot_dimension_numbers<[1], [1], [0], [0], [0, 0, 1, 0], [], []>} : vector<8x8xf32>, vector<8x8xf32>, vector<8x8xf32> -> vector<8x8xf32>
    %cst_37 = arith.constant 0.353553385 : f32
    %67 = vector.broadcast %cst_37 : f32 to vector<8x8xf32>
    %68 = arith.mulf %66, %67 : vector<8x8xf32>
    %cst_38 = arith.constant dense<0xFF800000> : vector<8xf32>
    %69 = vector.multi_reduction <maximumf>, %68, %cst_38 [1] : vector<8x8xf32> to vector<8xf32>
    %70 = vector.shape_cast %69 : vector<8xf32> to vector<8x1xf32>
    %71 = vector.broadcast %70 : vector<8x1xf32> to vector<8x8xf32>
    %72 = arith.subf %68, %71 : vector<8x8xf32>
    %73 = math.exp %72 : vector<8x8xf32>
    %cst_39 = arith.constant dense<0.000000e+00> : vector<8xf32>
    %74 = vector.multi_reduction <add>, %73, %cst_39 [1] : vector<8x8xf32> to vector<8xf32>
    %75 = vector.shape_cast %74 : vector<8xf32> to vector<8x1xf32>
    %76 = vector.broadcast %75 : vector<8x1xf32> to vector<8x8xf32>
    %77 = arith.divf %73, %76 : vector<8x8xf32>
    %cst_40 = arith.constant dense<0.000000e+00> : vector<8x8xf32>
    %78 = tpu.matmul %77, %65, %cst_40 {dimension_numbers = #tpu.dot_dimension_numbers<[1], [0], [0], [1], [0, 0, 1, 1], [], []>} : vector<8x8xf32>, vector<8x8xf32>, vector<8x8xf32> -> vector<8x8xf32>
    %c0_41 = arith.constant 0 : index
    %c1 = arith.constant 1 : index
    %c0_42 = arith.constant 0 : index
    %c0_43 = arith.constant 0 : index
    %79 = vector.load %arg9[%c0_41, %c1, %c0_42, %c0_43] : memref<2x4x8x32xf32, #tpu.memory_space<vmem>>, vector<1x1x8x32xf32>
    %80 = vector.shape_cast %79 : vector<1x1x8x32xf32> to vector<8x32xf32>
    %cst_44 = arith.constant dense<0.000000e+00> : vector<8x32xf32>
    %81 = tpu.matmul %78, %80, %cst_44 {dimension_numbers = #tpu.dot_dimension_numbers<[1], [0], [0], [1], [0, 0, 1, 1], [], []>} : vector<8x8xf32>, vector<8x32xf32>, vector<8x32xf32> -> vector<8x32xf32>
    %82 = arith.addf %62, %81 : vector<8x32xf32>
    %83 = vector.extract_strided_slice %41 {offsets = [0, 16], sizes = [8, 8], strides = [1, 1]} : vector<8x96xf32> to vector<8x8xf32>
    %84 = vector.extract_strided_slice %41 {offsets = [0, 48], sizes = [8, 8], strides = [1, 1]} : vector<8x96xf32> to vector<8x8xf32>
    %85 = vector.extract_strided_slice %41 {offsets = [0, 80], sizes = [8, 8], strides = [1, 1]} : vector<8x96xf32> to vector<8x8xf32>
    %cst_45 = arith.constant dense<0.000000e+00> : vector<8x8xf32>
    %86 = tpu.matmul %83, %84, %cst_45 {dimension_numbers = #tpu.dot_dimension_numbers<[1], [1], [0], [0], [0, 0, 1, 0], [], []>} : vector<8x8xf32>, vector<8x8xf32>, vector<8x8xf32> -> vector<8x8xf32>
    %cst_46 = arith.constant 0.353553385 : f32
    %87 = vector.broadcast %cst_46 : f32 to vector<8x8xf32>
    %88 = arith.mulf %86, %87 : vector<8x8xf32>
    %cst_47 = arith.constant dense<0xFF800000> : vector<8xf32>
    %89 = vector.multi_reduction <maximumf>, %88, %cst_47 [1] : vector<8x8xf32> to vector<8xf32>
    %90 = vector.shape_cast %89 : vector<8xf32> to vector<8x1xf32>
    %91 = vector.broadcast %90 : vector<8x1xf32> to vector<8x8xf32>
    %92 = arith.subf %88, %91 : vector<8x8xf32>
    %93 = math.exp %92 : vector<8x8xf32>
    %cst_48 = arith.constant dense<0.000000e+00> : vector<8xf32>
    %94 = vector.multi_reduction <add>, %93, %cst_48 [1] : vector<8x8xf32> to vector<8xf32>
    %95 = vector.shape_cast %94 : vector<8xf32> to vector<8x1xf32>
    %96 = vector.broadcast %95 : vector<8x1xf32> to vector<8x8xf32>
    %97 = arith.divf %93, %96 : vector<8x8xf32>
    %cst_49 = arith.constant dense<0.000000e+00> : vector<8x8xf32>
    %98 = tpu.matmul %97, %85, %cst_49 {dimension_numbers = #tpu.dot_dimension_numbers<[1], [0], [0], [1], [0, 0, 1, 1], [], []>} : vector<8x8xf32>, vector<8x8xf32>, vector<8x8xf32> -> vector<8x8xf32>
    %c0_50 = arith.constant 0 : index
    %c2 = arith.constant 2 : index
    %c0_51 = arith.constant 0 : index
    %c0_52 = arith.constant 0 : index
    %99 = vector.load %arg9[%c0_50, %c2, %c0_51, %c0_52] : memref<2x4x8x32xf32, #tpu.memory_space<vmem>>, vector<1x1x8x32xf32>
    %100 = vector.shape_cast %99 : vector<1x1x8x32xf32> to vector<8x32xf32>
    %cst_53 = arith.constant dense<0.000000e+00> : vector<8x32xf32>
    %101 = tpu.matmul %98, %100, %cst_53 {dimension_numbers = #tpu.dot_dimension_numbers<[1], [0], [0], [1], [0, 0, 1, 1], [], []>} : vector<8x8xf32>, vector<8x32xf32>, vector<8x32xf32> -> vector<8x32xf32>
    %102 = arith.addf %82, %101 : vector<8x32xf32>
    %103 = vector.extract_strided_slice %41 {offsets = [0, 24], sizes = [8, 8], strides = [1, 1]} : vector<8x96xf32> to vector<8x8xf32>
    %104 = vector.extract_strided_slice %41 {offsets = [0, 56], sizes = [8, 8], strides = [1, 1]} : vector<8x96xf32> to vector<8x8xf32>
    %105 = vector.extract_strided_slice %41 {offsets = [0, 88], sizes = [8, 8], strides = [1, 1]} : vector<8x96xf32> to vector<8x8xf32>
    %cst_54 = arith.constant dense<0.000000e+00> : vector<8x8xf32>
    %106 = tpu.matmul %103, %104, %cst_54 {dimension_numbers = #tpu.dot_dimension_numbers<[1], [1], [0], [0], [0, 0, 1, 0], [], []>} : vector<8x8xf32>, vector<8x8xf32>, vector<8x8xf32> -> vector<8x8xf32>
    %cst_55 = arith.constant 0.353553385 : f32
    %107 = vector.broadcast %cst_55 : f32 to vector<8x8xf32>
    %108 = arith.mulf %106, %107 : vector<8x8xf32>
    %cst_56 = arith.constant dense<0xFF800000> : vector<8xf32>
    %109 = vector.multi_reduction <maximumf>, %108, %cst_56 [1] : vector<8x8xf32> to vector<8xf32>
    %110 = vector.shape_cast %109 : vector<8xf32> to vector<8x1xf32>
    %111 = vector.broadcast %110 : vector<8x1xf32> to vector<8x8xf32>
    %112 = arith.subf %108, %111 : vector<8x8xf32>
    %113 = math.exp %112 : vector<8x8xf32>
    %cst_57 = arith.constant dense<0.000000e+00> : vector<8xf32>
    %114 = vector.multi_reduction <add>, %113, %cst_57 [1] : vector<8x8xf32> to vector<8xf32>
    %115 = vector.shape_cast %114 : vector<8xf32> to vector<8x1xf32>
    %116 = vector.broadcast %115 : vector<8x1xf32> to vector<8x8xf32>
    %117 = arith.divf %113, %116 : vector<8x8xf32>
    %cst_58 = arith.constant dense<0.000000e+00> : vector<8x8xf32>
    %118 = tpu.matmul %117, %105, %cst_58 {dimension_numbers = #tpu.dot_dimension_numbers<[1], [0], [0], [1], [0, 0, 1, 1], [], []>} : vector<8x8xf32>, vector<8x8xf32>, vector<8x8xf32> -> vector<8x8xf32>
    %c0_59 = arith.constant 0 : index
    %c3 = arith.constant 3 : index
    %c0_60 = arith.constant 0 : index
    %c0_61 = arith.constant 0 : index
    %119 = vector.load %arg9[%c0_59, %c3, %c0_60, %c0_61] : memref<2x4x8x32xf32, #tpu.memory_space<vmem>>, vector<1x1x8x32xf32>
    %120 = vector.shape_cast %119 : vector<1x1x8x32xf32> to vector<8x32xf32>
    %cst_62 = arith.constant dense<0.000000e+00> : vector<8x32xf32>
    %121 = tpu.matmul %118, %120, %cst_62 {dimension_numbers = #tpu.dot_dimension_numbers<[1], [0], [0], [1], [0, 0, 1, 1], [], []>} : vector<8x8xf32>, vector<8x32xf32>, vector<8x32xf32> -> vector<8x32xf32>
    %122 = arith.addf %102, %121 : vector<8x32xf32>
    %123 = arith.addf %10, %122 : vector<8x32xf32>
    %c0_63 = arith.constant 0 : index
    %c0_64 = arith.constant 0 : index
    %c0_65 = arith.constant 0 : index
    %124 = vector.load %arg10[%c0_63, %c0_64, %c0_65] : memref<2x1x32xf32, #tpu.memory_space<vmem>>, vector<1x1x32xf32>
    %125 = vector.shape_cast %124 : vector<1x1x32xf32> to vector<1x32xf32>
    %126 = vector.broadcast %125 : vector<1x32xf32> to vector<8x32xf32>
    %127 = arith.addf %123, %126 : vector<8x32xf32>
    %c0_66 = arith.constant 0 : index
    %c0_67 = arith.constant 0 : index
    %c0_68 = arith.constant 0 : index
    %128 = vector.load %arg11[%c0_66, %c0_67, %c0_68] : memref<2x1x32xf32, #tpu.memory_space<vmem>>, vector<1x1x32xf32>
    %129 = vector.shape_cast %128 : vector<1x1x32xf32> to vector<1x32xf32>
    %c0_69 = arith.constant 0 : index
    %c0_70 = arith.constant 0 : index
    %c0_71 = arith.constant 0 : index
    %130 = vector.load %arg12[%c0_69, %c0_70, %c0_71] : memref<2x1x32xf32, #tpu.memory_space<vmem>>, vector<1x1x32xf32>
    %131 = vector.shape_cast %130 : vector<1x1x32xf32> to vector<1x32xf32>
    %cst_72 = arith.constant dense<0.000000e+00> : vector<8xf32>
    %132 = vector.multi_reduction <add>, %127, %cst_72 [1] : vector<8x32xf32> to vector<8xf32>
    %133 = vector.shape_cast %132 : vector<8xf32> to vector<8x1xf32>
    %cst_73 = arith.constant 3.200000e+01 : f32
    %134 = vector.broadcast %cst_73 : f32 to vector<8x1xf32>
    %135 = arith.divf %133, %134 : vector<8x1xf32>
    %136 = vector.broadcast %135 : vector<8x1xf32> to vector<8x32xf32>
    %137 = arith.subf %127, %136 : vector<8x32xf32>
    %138 = arith.mulf %137, %137 : vector<8x32xf32>
    %cst_74 = arith.constant dense<0.000000e+00> : vector<8xf32>
    %139 = vector.multi_reduction <add>, %138, %cst_74 [1] : vector<8x32xf32> to vector<8xf32>
    %140 = vector.shape_cast %139 : vector<8xf32> to vector<8x1xf32>
    %cst_75 = arith.constant 3.200000e+01 : f32
    %141 = vector.broadcast %cst_75 : f32 to vector<8x1xf32>
    %142 = arith.divf %140, %141 : vector<8x1xf32>
    %cst_76 = arith.constant 9.99999974E-6 : f32
    %143 = vector.broadcast %cst_76 : f32 to vector<8x1xf32>
    %144 = arith.addf %142, %143 : vector<8x1xf32>
    %145 = math.rsqrt %144 : vector<8x1xf32>
    %146 = vector.broadcast %145 : vector<8x1xf32> to vector<8x32xf32>
    %147 = arith.mulf %137, %146 : vector<8x32xf32>
    %148 = vector.broadcast %129 : vector<1x32xf32> to vector<8x32xf32>
    %149 = arith.mulf %147, %148 : vector<8x32xf32>
    %150 = vector.broadcast %131 : vector<1x32xf32> to vector<8x32xf32>
    %151 = arith.addf %149, %150 : vector<8x32xf32>
    %c0_77 = arith.constant 0 : index
    %c0_78 = arith.constant 0 : index
    %c0_79 = arith.constant 0 : index
    %152 = vector.load %arg13[%c0_77, %c0_78, %c0_79] : memref<2x32x64xf32, #tpu.memory_space<vmem>>, vector<1x32x64xf32>
    %153 = vector.shape_cast %152 : vector<1x32x64xf32> to vector<32x64xf32>
    %cst_80 = arith.constant dense<0.000000e+00> : vector<8x64xf32>
    %154 = tpu.matmul %151, %153, %cst_80 {dimension_numbers = #tpu.dot_dimension_numbers<[1], [0], [0], [1], [0, 0, 1, 1], [], []>} : vector<8x32xf32>, vector<32x64xf32>, vector<8x64xf32> -> vector<8x64xf32>
    %c0_81 = arith.constant 0 : index
    %c0_82 = arith.constant 0 : index
    %c0_83 = arith.constant 0 : index
    %155 = vector.load %arg14[%c0_81, %c0_82, %c0_83] : memref<2x1x64xf32, #tpu.memory_space<vmem>>, vector<1x1x64xf32>
    %156 = vector.shape_cast %155 : vector<1x1x64xf32> to vector<1x64xf32>
    %157 = vector.broadcast %156 : vector<1x64xf32> to vector<8x64xf32>
    %158 = arith.addf %154, %157 : vector<8x64xf32>
    %cst_84 = arith.constant 5.000000e-01 : f32
    %159 = vector.broadcast %cst_84 : f32 to vector<8x64xf32>
    %160 = arith.mulf %159, %158 : vector<8x64xf32>
    %cst_85 = arith.constant 4.471500e-02 : f32
    %161 = vector.broadcast %cst_85 : f32 to vector<8x64xf32>
    %162 = arith.mulf %161, %158 : vector<8x64xf32>
    %163 = arith.mulf %162, %158 : vector<8x64xf32>
    %164 = arith.mulf %163, %158 : vector<8x64xf32>
    %165 = arith.addf %158, %164 : vector<8x64xf32>
    %cst_86 = arith.constant 0.797884583 : f32
    %166 = vector.broadcast %cst_86 : f32 to vector<8x64xf32>
    %167 = arith.mulf %166, %165 : vector<8x64xf32>
    %168 = math.tanh %167 : vector<8x64xf32>
    %cst_87 = arith.constant 1.000000e+00 : f32
    %169 = vector.broadcast %cst_87 : f32 to vector<8x64xf32>
    %170 = arith.addf %169, %168 : vector<8x64xf32>
    %171 = arith.mulf %160, %170 : vector<8x64xf32>
    %c0_88 = arith.constant 0 : index
    %c0_89 = arith.constant 0 : index
    %c0_90 = arith.constant 0 : index
    %172 = vector.load %arg15[%c0_88, %c0_89, %c0_90] : memref<2x64x32xf32, #tpu.memory_space<vmem>>, vector<1x64x32xf32>
    %173 = vector.shape_cast %172 : vector<1x64x32xf32> to vector<64x32xf32>
    %cst_91 = arith.constant dense<0.000000e+00> : vector<8x32xf32>
    %174 = tpu.matmul %171, %173, %cst_91 {dimension_numbers = #tpu.dot_dimension_numbers<[1], [0], [0], [1], [0, 0, 1, 1], [], []>} : vector<8x64xf32>, vector<64x32xf32>, vector<8x32xf32> -> vector<8x32xf32>
    %c0_92 = arith.constant 0 : index
    %c0_93 = arith.constant 0 : index
    %c0_94 = arith.constant 0 : index
    %175 = vector.load %arg16[%c0_92, %c0_93, %c0_94] : memref<2x1x32xf32, #tpu.memory_space<vmem>>, vector<1x1x32xf32>
    %176 = vector.shape_cast %175 : vector<1x1x32xf32> to vector<1x32xf32>
    %177 = vector.broadcast %176 : vector<1x32xf32> to vector<8x32xf32>
    %178 = arith.addf %174, %177 : vector<8x32xf32>
    %179 = arith.addf %127, %178 : vector<8x32xf32>
    %c1_95 = arith.constant 1 : index
    %c0_96 = arith.constant 0 : index
    %c0_97 = arith.constant 0 : index
    %180 = vector.load %arg5[%c1_95, %c0_96, %c0_97] : memref<2x1x32xf32, #tpu.memory_space<vmem>>, vector<1x1x32xf32>
    %181 = vector.shape_cast %180 : vector<1x1x32xf32> to vector<1x32xf32>
    %c1_98 = arith.constant 1 : index
    %c0_99 = arith.constant 0 : index
    %c0_100 = arith.constant 0 : index
    %182 = vector.load %arg6[%c1_98, %c0_99, %c0_100] : memref<2x1x32xf32, #tpu.memory_space<vmem>>, vector<1x1x32xf32>
    %183 = vector.shape_cast %182 : vector<1x1x32xf32> to vector<1x32xf32>
    %cst_101 = arith.constant dense<0.000000e+00> : vector<8xf32>
    %184 = vector.multi_reduction <add>, %179, %cst_101 [1] : vector<8x32xf32> to vector<8xf32>
    %185 = vector.shape_cast %184 : vector<8xf32> to vector<8x1xf32>
    %cst_102 = arith.constant 3.200000e+01 : f32
    %186 = vector.broadcast %cst_102 : f32 to vector<8x1xf32>
    %187 = arith.divf %185, %186 : vector<8x1xf32>
    %188 = vector.broadcast %187 : vector<8x1xf32> to vector<8x32xf32>
    %189 = arith.subf %179, %188 : vector<8x32xf32>
    %190 = arith.mulf %189, %189 : vector<8x32xf32>
    %cst_103 = arith.constant dense<0.000000e+00> : vector<8xf32>
    %191 = vector.multi_reduction <add>, %190, %cst_103 [1] : vector<8x32xf32> to vector<8xf32>
    %192 = vector.shape_cast %191 : vector<8xf32> to vector<8x1xf32>
    %cst_104 = arith.constant 3.200000e+01 : f32
    %193 = vector.broadcast %cst_104 : f32 to vector<8x1xf32>
    %194 = arith.divf %192, %193 : vector<8x1xf32>
    %cst_105 = arith.constant 9.99999974E-6 : f32
    %195 = vector.broadcast %cst_105 : f32 to vector<8x1xf32>
    %196 = arith.addf %194, %195 : vector<8x1xf32>
    %197 = math.rsqrt %196 : vector<8x1xf32>
    %198 = vector.broadcast %197 : vector<8x1xf32> to vector<8x32xf32>
    %199 = arith.mulf %189, %198 : vector<8x32xf32>
    %200 = vector.broadcast %181 : vector<1x32xf32> to vector<8x32xf32>
    %201 = arith.mulf %199, %200 : vector<8x32xf32>
    %202 = vector.broadcast %183 : vector<1x32xf32> to vector<8x32xf32>
    %203 = arith.addf %201, %202 : vector<8x32xf32>
    %c1_106 = arith.constant 1 : index
    %c0_107 = arith.constant 0 : index
    %c0_108 = arith.constant 0 : index
    %204 = vector.load %arg7[%c1_106, %c0_107, %c0_108] : memref<2x32x96xf32, #tpu.memory_space<vmem>>, vector<1x32x96xf32>
    %205 = vector.shape_cast %204 : vector<1x32x96xf32> to vector<32x96xf32>
    %cst_109 = arith.constant dense<0.000000e+00> : vector<8x96xf32>
    %206 = tpu.matmul %203, %205, %cst_109 {dimension_numbers = #tpu.dot_dimension_numbers<[1], [0], [0], [1], [0, 0, 1, 1], [], []>} : vector<8x32xf32>, vector<32x96xf32>, vector<8x96xf32> -> vector<8x96xf32>
    %c1_110 = arith.constant 1 : index
    %c0_111 = arith.constant 0 : index
    %c0_112 = arith.constant 0 : index
    %207 = vector.load %arg8[%c1_110, %c0_111, %c0_112] : memref<2x1x96xf32, #tpu.memory_space<vmem>>, vector<1x1x96xf32>
    %208 = vector.shape_cast %207 : vector<1x1x96xf32> to vector<1x96xf32>
    %209 = vector.broadcast %208 : vector<1x96xf32> to vector<8x96xf32>
    %210 = arith.addf %206, %209 : vector<8x96xf32>
    %cst_113 = arith.constant 0.000000e+00 : f32
    %211 = vector.broadcast %cst_113 : f32 to vector<8x32xf32>
    %212 = vector.extract_strided_slice %210 {offsets = [0, 0], sizes = [8, 8], strides = [1, 1]} : vector<8x96xf32> to vector<8x8xf32>
    %213 = vector.extract_strided_slice %210 {offsets = [0, 32], sizes = [8, 8], strides = [1, 1]} : vector<8x96xf32> to vector<8x8xf32>
    %214 = vector.extract_strided_slice %210 {offsets = [0, 64], sizes = [8, 8], strides = [1, 1]} : vector<8x96xf32> to vector<8x8xf32>
    %cst_114 = arith.constant dense<0.000000e+00> : vector<8x8xf32>
    %215 = tpu.matmul %212, %213, %cst_114 {dimension_numbers = #tpu.dot_dimension_numbers<[1], [1], [0], [0], [0, 0, 1, 0], [], []>} : vector<8x8xf32>, vector<8x8xf32>, vector<8x8xf32> -> vector<8x8xf32>
    %cst_115 = arith.constant 0.353553385 : f32
    %216 = vector.broadcast %cst_115 : f32 to vector<8x8xf32>
    %217 = arith.mulf %215, %216 : vector<8x8xf32>
    %cst_116 = arith.constant dense<0xFF800000> : vector<8xf32>
    %218 = vector.multi_reduction <maximumf>, %217, %cst_116 [1] : vector<8x8xf32> to vector<8xf32>
    %219 = vector.shape_cast %218 : vector<8xf32> to vector<8x1xf32>
    %220 = vector.broadcast %219 : vector<8x1xf32> to vector<8x8xf32>
    %221 = arith.subf %217, %220 : vector<8x8xf32>
    %222 = math.exp %221 : vector<8x8xf32>
    %cst_117 = arith.constant dense<0.000000e+00> : vector<8xf32>
    %223 = vector.multi_reduction <add>, %222, %cst_117 [1] : vector<8x8xf32> to vector<8xf32>
    %224 = vector.shape_cast %223 : vector<8xf32> to vector<8x1xf32>
    %225 = vector.broadcast %224 : vector<8x1xf32> to vector<8x8xf32>
    %226 = arith.divf %222, %225 : vector<8x8xf32>
    %cst_118 = arith.constant dense<0.000000e+00> : vector<8x8xf32>
    %227 = tpu.matmul %226, %214, %cst_118 {dimension_numbers = #tpu.dot_dimension_numbers<[1], [0], [0], [1], [0, 0, 1, 1], [], []>} : vector<8x8xf32>, vector<8x8xf32>, vector<8x8xf32> -> vector<8x8xf32>
    %c1_119 = arith.constant 1 : index
    %c0_120 = arith.constant 0 : index
    %c0_121 = arith.constant 0 : index
    %c0_122 = arith.constant 0 : index
    %228 = vector.load %arg9[%c1_119, %c0_120, %c0_121, %c0_122] : memref<2x4x8x32xf32, #tpu.memory_space<vmem>>, vector<1x1x8x32xf32>
    %229 = vector.shape_cast %228 : vector<1x1x8x32xf32> to vector<8x32xf32>
    %cst_123 = arith.constant dense<0.000000e+00> : vector<8x32xf32>
    %230 = tpu.matmul %227, %229, %cst_123 {dimension_numbers = #tpu.dot_dimension_numbers<[1], [0], [0], [1], [0, 0, 1, 1], [], []>} : vector<8x8xf32>, vector<8x32xf32>, vector<8x32xf32> -> vector<8x32xf32>
    %231 = arith.addf %211, %230 : vector<8x32xf32>
    %232 = vector.extract_strided_slice %210 {offsets = [0, 8], sizes = [8, 8], strides = [1, 1]} : vector<8x96xf32> to vector<8x8xf32>
    %233 = vector.extract_strided_slice %210 {offsets = [0, 40], sizes = [8, 8], strides = [1, 1]} : vector<8x96xf32> to vector<8x8xf32>
    %234 = vector.extract_strided_slice %210 {offsets = [0, 72], sizes = [8, 8], strides = [1, 1]} : vector<8x96xf32> to vector<8x8xf32>
    %cst_124 = arith.constant dense<0.000000e+00> : vector<8x8xf32>
    %235 = tpu.matmul %232, %233, %cst_124 {dimension_numbers = #tpu.dot_dimension_numbers<[1], [1], [0], [0], [0, 0, 1, 0], [], []>} : vector<8x8xf32>, vector<8x8xf32>, vector<8x8xf32> -> vector<8x8xf32>
    %cst_125 = arith.constant 0.353553385 : f32
    %236 = vector.broadcast %cst_125 : f32 to vector<8x8xf32>
    %237 = arith.mulf %235, %236 : vector<8x8xf32>
    %cst_126 = arith.constant dense<0xFF800000> : vector<8xf32>
    %238 = vector.multi_reduction <maximumf>, %237, %cst_126 [1] : vector<8x8xf32> to vector<8xf32>
    %239 = vector.shape_cast %238 : vector<8xf32> to vector<8x1xf32>
    %240 = vector.broadcast %239 : vector<8x1xf32> to vector<8x8xf32>
    %241 = arith.subf %237, %240 : vector<8x8xf32>
    %242 = math.exp %241 : vector<8x8xf32>
    %cst_127 = arith.constant dense<0.000000e+00> : vector<8xf32>
    %243 = vector.multi_reduction <add>, %242, %cst_127 [1] : vector<8x8xf32> to vector<8xf32>
    %244 = vector.shape_cast %243 : vector<8xf32> to vector<8x1xf32>
    %245 = vector.broadcast %244 : vector<8x1xf32> to vector<8x8xf32>
    %246 = arith.divf %242, %245 : vector<8x8xf32>
    %cst_128 = arith.constant dense<0.000000e+00> : vector<8x8xf32>
    %247 = tpu.matmul %246, %234, %cst_128 {dimension_numbers = #tpu.dot_dimension_numbers<[1], [0], [0], [1], [0, 0, 1, 1], [], []>} : vector<8x8xf32>, vector<8x8xf32>, vector<8x8xf32> -> vector<8x8xf32>
    %c1_129 = arith.constant 1 : index
    %c1_130 = arith.constant 1 : index
    %c0_131 = arith.constant 0 : index
    %c0_132 = arith.constant 0 : index
    %248 = vector.load %arg9[%c1_129, %c1_130, %c0_131, %c0_132] : memref<2x4x8x32xf32, #tpu.memory_space<vmem>>, vector<1x1x8x32xf32>
    %249 = vector.shape_cast %248 : vector<1x1x8x32xf32> to vector<8x32xf32>
    %cst_133 = arith.constant dense<0.000000e+00> : vector<8x32xf32>
    %250 = tpu.matmul %247, %249, %cst_133 {dimension_numbers = #tpu.dot_dimension_numbers<[1], [0], [0], [1], [0, 0, 1, 1], [], []>} : vector<8x8xf32>, vector<8x32xf32>, vector<8x32xf32> -> vector<8x32xf32>
    %251 = arith.addf %231, %250 : vector<8x32xf32>
    %252 = vector.extract_strided_slice %210 {offsets = [0, 16], sizes = [8, 8], strides = [1, 1]} : vector<8x96xf32> to vector<8x8xf32>
    %253 = vector.extract_strided_slice %210 {offsets = [0, 48], sizes = [8, 8], strides = [1, 1]} : vector<8x96xf32> to vector<8x8xf32>
    %254 = vector.extract_strided_slice %210 {offsets = [0, 80], sizes = [8, 8], strides = [1, 1]} : vector<8x96xf32> to vector<8x8xf32>
    %cst_134 = arith.constant dense<0.000000e+00> : vector<8x8xf32>
    %255 = tpu.matmul %252, %253, %cst_134 {dimension_numbers = #tpu.dot_dimension_numbers<[1], [1], [0], [0], [0, 0, 1, 0], [], []>} : vector<8x8xf32>, vector<8x8xf32>, vector<8x8xf32> -> vector<8x8xf32>
    %cst_135 = arith.constant 0.353553385 : f32
    %256 = vector.broadcast %cst_135 : f32 to vector<8x8xf32>
    %257 = arith.mulf %255, %256 : vector<8x8xf32>
    %cst_136 = arith.constant dense<0xFF800000> : vector<8xf32>
    %258 = vector.multi_reduction <maximumf>, %257, %cst_136 [1] : vector<8x8xf32> to vector<8xf32>
    %259 = vector.shape_cast %258 : vector<8xf32> to vector<8x1xf32>
    %260 = vector.broadcast %259 : vector<8x1xf32> to vector<8x8xf32>
    %261 = arith.subf %257, %260 : vector<8x8xf32>
    %262 = math.exp %261 : vector<8x8xf32>
    %cst_137 = arith.constant dense<0.000000e+00> : vector<8xf32>
    %263 = vector.multi_reduction <add>, %262, %cst_137 [1] : vector<8x8xf32> to vector<8xf32>
    %264 = vector.shape_cast %263 : vector<8xf32> to vector<8x1xf32>
    %265 = vector.broadcast %264 : vector<8x1xf32> to vector<8x8xf32>
    %266 = arith.divf %262, %265 : vector<8x8xf32>
    %cst_138 = arith.constant dense<0.000000e+00> : vector<8x8xf32>
    %267 = tpu.matmul %266, %254, %cst_138 {dimension_numbers = #tpu.dot_dimension_numbers<[1], [0], [0], [1], [0, 0, 1, 1], [], []>} : vector<8x8xf32>, vector<8x8xf32>, vector<8x8xf32> -> vector<8x8xf32>
    %c1_139 = arith.constant 1 : index
    %c2_140 = arith.constant 2 : index
    %c0_141 = arith.constant 0 : index
    %c0_142 = arith.constant 0 : index
    %268 = vector.load %arg9[%c1_139, %c2_140, %c0_141, %c0_142] : memref<2x4x8x32xf32, #tpu.memory_space<vmem>>, vector<1x1x8x32xf32>
    %269 = vector.shape_cast %268 : vector<1x1x8x32xf32> to vector<8x32xf32>
    %cst_143 = arith.constant dense<0.000000e+00> : vector<8x32xf32>
    %270 = tpu.matmul %267, %269, %cst_143 {dimension_numbers = #tpu.dot_dimension_numbers<[1], [0], [0], [1], [0, 0, 1, 1], [], []>} : vector<8x8xf32>, vector<8x32xf32>, vector<8x32xf32> -> vector<8x32xf32>
    %271 = arith.addf %251, %270 : vector<8x32xf32>
    %272 = vector.extract_strided_slice %210 {offsets = [0, 24], sizes = [8, 8], strides = [1, 1]} : vector<8x96xf32> to vector<8x8xf32>
    %273 = vector.extract_strided_slice %210 {offsets = [0, 56], sizes = [8, 8], strides = [1, 1]} : vector<8x96xf32> to vector<8x8xf32>
    %274 = vector.extract_strided_slice %210 {offsets = [0, 88], sizes = [8, 8], strides = [1, 1]} : vector<8x96xf32> to vector<8x8xf32>
    %cst_144 = arith.constant dense<0.000000e+00> : vector<8x8xf32>
    %275 = tpu.matmul %272, %273, %cst_144 {dimension_numbers = #tpu.dot_dimension_numbers<[1], [1], [0], [0], [0, 0, 1, 0], [], []>} : vector<8x8xf32>, vector<8x8xf32>, vector<8x8xf32> -> vector<8x8xf32>
    %cst_145 = arith.constant 0.353553385 : f32
    %276 = vector.broadcast %cst_145 : f32 to vector<8x8xf32>
    %277 = arith.mulf %275, %276 : vector<8x8xf32>
    %cst_146 = arith.constant dense<0xFF800000> : vector<8xf32>
    %278 = vector.multi_reduction <maximumf>, %277, %cst_146 [1] : vector<8x8xf32> to vector<8xf32>
    %279 = vector.shape_cast %278 : vector<8xf32> to vector<8x1xf32>
    %280 = vector.broadcast %279 : vector<8x1xf32> to vector<8x8xf32>
    %281 = arith.subf %277, %280 : vector<8x8xf32>
    %282 = math.exp %281 : vector<8x8xf32>
    %cst_147 = arith.constant dense<0.000000e+00> : vector<8xf32>
    %283 = vector.multi_reduction <add>, %282, %cst_147 [1] : vector<8x8xf32> to vector<8xf32>
    %284 = vector.shape_cast %283 : vector<8xf32> to vector<8x1xf32>
    %285 = vector.broadcast %284 : vector<8x1xf32> to vector<8x8xf32>
    %286 = arith.divf %282, %285 : vector<8x8xf32>
    %cst_148 = arith.constant dense<0.000000e+00> : vector<8x8xf32>
    %287 = tpu.matmul %286, %274, %cst_148 {dimension_numbers = #tpu.dot_dimension_numbers<[1], [0], [0], [1], [0, 0, 1, 1], [], []>} : vector<8x8xf32>, vector<8x8xf32>, vector<8x8xf32> -> vector<8x8xf32>
    %c1_149 = arith.constant 1 : index
    %c3_150 = arith.constant 3 : index
    %c0_151 = arith.constant 0 : index
    %c0_152 = arith.constant 0 : index
    %288 = vector.load %arg9[%c1_149, %c3_150, %c0_151, %c0_152] : memref<2x4x8x32xf32, #tpu.memory_space<vmem>>, vector<1x1x8x32xf32>
    %289 = vector.shape_cast %288 : vector<1x1x8x32xf32> to vector<8x32xf32>
    %cst_153 = arith.constant dense<0.000000e+00> : vector<8x32xf32>
    %290 = tpu.matmul %287, %289, %cst_153 {dimension_numbers = #tpu.dot_dimension_numbers<[1], [0], [0], [1], [0, 0, 1, 1], [], []>} : vector<8x8xf32>, vector<8x32xf32>, vector<8x32xf32> -> vector<8x32xf32>
    %291 = arith.addf %271, %290 : vector<8x32xf32>
    %292 = arith.addf %179, %291 : vector<8x32xf32>
    %c1_154 = arith.constant 1 : index
    %c0_155 = arith.constant 0 : index
    %c0_156 = arith.constant 0 : index
    %293 = vector.load %arg10[%c1_154, %c0_155, %c0_156] : memref<2x1x32xf32, #tpu.memory_space<vmem>>, vector<1x1x32xf32>
    %294 = vector.shape_cast %293 : vector<1x1x32xf32> to vector<1x32xf32>
    %295 = vector.broadcast %294 : vector<1x32xf32> to vector<8x32xf32>
    %296 = arith.addf %292, %295 : vector<8x32xf32>
    %c1_157 = arith.constant 1 : index
    %c0_158 = arith.constant 0 : index
    %c0_159 = arith.constant 0 : index
    %297 = vector.load %arg11[%c1_157, %c0_158, %c0_159] : memref<2x1x32xf32, #tpu.memory_space<vmem>>, vector<1x1x32xf32>
    %298 = vector.shape_cast %297 : vector<1x1x32xf32> to vector<1x32xf32>
    %c1_160 = arith.constant 1 : index
    %c0_161 = arith.constant 0 : index
    %c0_162 = arith.constant 0 : index
    %299 = vector.load %arg12[%c1_160, %c0_161, %c0_162] : memref<2x1x32xf32, #tpu.memory_space<vmem>>, vector<1x1x32xf32>
    %300 = vector.shape_cast %299 : vector<1x1x32xf32> to vector<1x32xf32>
    %cst_163 = arith.constant dense<0.000000e+00> : vector<8xf32>
    %301 = vector.multi_reduction <add>, %296, %cst_163 [1] : vector<8x32xf32> to vector<8xf32>
    %302 = vector.shape_cast %301 : vector<8xf32> to vector<8x1xf32>
    %cst_164 = arith.constant 3.200000e+01 : f32
    %303 = vector.broadcast %cst_164 : f32 to vector<8x1xf32>
    %304 = arith.divf %302, %303 : vector<8x1xf32>
    %305 = vector.broadcast %304 : vector<8x1xf32> to vector<8x32xf32>
    %306 = arith.subf %296, %305 : vector<8x32xf32>
    %307 = arith.mulf %306, %306 : vector<8x32xf32>
    %cst_165 = arith.constant dense<0.000000e+00> : vector<8xf32>
    %308 = vector.multi_reduction <add>, %307, %cst_165 [1] : vector<8x32xf32> to vector<8xf32>
    %309 = vector.shape_cast %308 : vector<8xf32> to vector<8x1xf32>
    %cst_166 = arith.constant 3.200000e+01 : f32
    %310 = vector.broadcast %cst_166 : f32 to vector<8x1xf32>
    %311 = arith.divf %309, %310 : vector<8x1xf32>
    %cst_167 = arith.constant 9.99999974E-6 : f32
    %312 = vector.broadcast %cst_167 : f32 to vector<8x1xf32>
    %313 = arith.addf %311, %312 : vector<8x1xf32>
    %314 = math.rsqrt %313 : vector<8x1xf32>
    %315 = vector.broadcast %314 : vector<8x1xf32> to vector<8x32xf32>
    %316 = arith.mulf %306, %315 : vector<8x32xf32>
    %317 = vector.broadcast %298 : vector<1x32xf32> to vector<8x32xf32>
    %318 = arith.mulf %316, %317 : vector<8x32xf32>
    %319 = vector.broadcast %300 : vector<1x32xf32> to vector<8x32xf32>
    %320 = arith.addf %318, %319 : vector<8x32xf32>
    %c1_168 = arith.constant 1 : index
    %c0_169 = arith.constant 0 : index
    %c0_170 = arith.constant 0 : index
    %321 = vector.load %arg13[%c1_168, %c0_169, %c0_170] : memref<2x32x64xf32, #tpu.memory_space<vmem>>, vector<1x32x64xf32>
    %322 = vector.shape_cast %321 : vector<1x32x64xf32> to vector<32x64xf32>
    %cst_171 = arith.constant dense<0.000000e+00> : vector<8x64xf32>
    %323 = tpu.matmul %320, %322, %cst_171 {dimension_numbers = #tpu.dot_dimension_numbers<[1], [0], [0], [1], [0, 0, 1, 1], [], []>} : vector<8x32xf32>, vector<32x64xf32>, vector<8x64xf32> -> vector<8x64xf32>
    %c1_172 = arith.constant 1 : index
    %c0_173 = arith.constant 0 : index
    %c0_174 = arith.constant 0 : index
    %324 = vector.load %arg14[%c1_172, %c0_173, %c0_174] : memref<2x1x64xf32, #tpu.memory_space<vmem>>, vector<1x1x64xf32>
    %325 = vector.shape_cast %324 : vector<1x1x64xf32> to vector<1x64xf32>
    %326 = vector.broadcast %325 : vector<1x64xf32> to vector<8x64xf32>
    %327 = arith.addf %323, %326 : vector<8x64xf32>
    %cst_175 = arith.constant 5.000000e-01 : f32
    %328 = vector.broadcast %cst_175 : f32 to vector<8x64xf32>
    %329 = arith.mulf %328, %327 : vector<8x64xf32>
    %cst_176 = arith.constant 4.471500e-02 : f32
    %330 = vector.broadcast %cst_176 : f32 to vector<8x64xf32>
    %331 = arith.mulf %330, %327 : vector<8x64xf32>
    %332 = arith.mulf %331, %327 : vector<8x64xf32>
    %333 = arith.mulf %332, %327 : vector<8x64xf32>
    %334 = arith.addf %327, %333 : vector<8x64xf32>
    %cst_177 = arith.constant 0.797884583 : f32
    %335 = vector.broadcast %cst_177 : f32 to vector<8x64xf32>
    %336 = arith.mulf %335, %334 : vector<8x64xf32>
    %337 = math.tanh %336 : vector<8x64xf32>
    %cst_178 = arith.constant 1.000000e+00 : f32
    %338 = vector.broadcast %cst_178 : f32 to vector<8x64xf32>
    %339 = arith.addf %338, %337 : vector<8x64xf32>
    %340 = arith.mulf %329, %339 : vector<8x64xf32>
    %c1_179 = arith.constant 1 : index
    %c0_180 = arith.constant 0 : index
    %c0_181 = arith.constant 0 : index
    %341 = vector.load %arg15[%c1_179, %c0_180, %c0_181] : memref<2x64x32xf32, #tpu.memory_space<vmem>>, vector<1x64x32xf32>
    %342 = vector.shape_cast %341 : vector<1x64x32xf32> to vector<64x32xf32>
    %cst_182 = arith.constant dense<0.000000e+00> : vector<8x32xf32>
    %343 = tpu.matmul %340, %342, %cst_182 {dimension_numbers = #tpu.dot_dimension_numbers<[1], [0], [0], [1], [0, 0, 1, 1], [], []>} : vector<8x64xf32>, vector<64x32xf32>, vector<8x32xf32> -> vector<8x32xf32>
    %c1_183 = arith.constant 1 : index
    %c0_184 = arith.constant 0 : index
    %c0_185 = arith.constant 0 : index
    %344 = vector.load %arg16[%c1_183, %c0_184, %c0_185] : memref<2x1x32xf32, #tpu.memory_space<vmem>>, vector<1x1x32xf32>
    %345 = vector.shape_cast %344 : vector<1x1x32xf32> to vector<1x32xf32>
    %346 = vector.broadcast %345 : vector<1x32xf32> to vector<8x32xf32>
    %347 = arith.addf %343, %346 : vector<8x32xf32>
    %348 = arith.addf %296, %347 : vector<8x32xf32>
    %c0_186 = arith.constant 0 : index
    %c0_187 = arith.constant 0 : index
    %349 = vector.load %arg17[%c0_186, %c0_187] : memref<4x8xf32, #tpu.memory_space<vmem>>, vector<4x8xf32>
    %cst_188 = arith.constant dense<0.000000e+00> : vector<4x32xf32>
    %350 = tpu.matmul %349, %348, %cst_188 {dimension_numbers = #tpu.dot_dimension_numbers<[1], [0], [0], [1], [0, 0, 1, 1], [], []>} : vector<4x8xf32>, vector<8x32xf32>, vector<4x32xf32> -> vector<4x32xf32>
    %c0_189 = arith.constant 0 : index
    %c0_190 = arith.constant 0 : index
    %351 = vector.load %arg18[%c0_189, %c0_190] : memref<4x32xf32, #tpu.memory_space<vmem>>, vector<4x32xf32>
    %352 = arith.mulf %350, %351 : vector<4x32xf32>
    %cst_191 = arith.constant dense<0.000000e+00> : vector<4xf32>
    %353 = vector.multi_reduction <add>, %352, %cst_191 [1] : vector<4x32xf32> to vector<4xf32>
    %354 = vector.shape_cast %353 : vector<4xf32> to vector<4x1xf32>
    %c0_192 = arith.constant 0 : index
    %c0_193 = arith.constant 0 : index
    %355 = vector.load %arg19[%c0_192, %c0_193] : memref<4x1xf32, #tpu.memory_space<vmem>>, vector<4x1xf32>
    %356 = arith.addf %354, %355 : vector<4x1xf32>
    %c0_194 = arith.constant 0 : index
    %c0_195 = arith.constant 0 : index
    %c0_196 = arith.constant 0 : index
    %357 = vector.load %arg20[%c0_194, %c0_195, %c0_196] : memref<1x4x1xf32, #tpu.memory_space<vmem>>, vector<1x4x1xf32>
    %358 = vector.shape_cast %357 : vector<1x4x1xf32> to vector<4x1xf32>
    %359 = vector.shape_cast %356 : vector<4x1xf32> to vector<1x4x1xf32>
    tpu.vector_store %arg20[%c0_194, %c0_195, %c0_196], %359 {strides = array<i32>} : memref<1x4x1xf32, #tpu.memory_space<vmem>>, vector<1x4x1xf32>,
    return
  }
  func.func @transform_0(%arg0: i32) -> (i32, i32, i32) {
    %c0_i32 = arith.constant 0 : i32
    %c0_i32_0 = arith.constant 0 : i32
    %c0_i32_1 = arith.constant 0 : i32
    return %arg0, %c0_i32, %c0_i32_0 : i32, i32, i32
  }
  func.func @transform_1(%arg0: i32) -> (i32, i32) {
    %c0_i32 = arith.constant 0 : i32
    %c0_i32_0 = arith.constant 0 : i32
    %c0_i32_1 = arith.constant 0 : i32
    return %c0_i32, %c0_i32_0 : i32, i32
  }
  func.func @transform_2(%arg0: i32) -> (i32, i32) {
    %c0_i32 = arith.constant 0 : i32
    %c0_i32_0 = arith.constant 0 : i32
    %c0_i32_1 = arith.constant 0 : i32
    return %c0_i32, %c0_i32_0 : i32, i32
  }
  func.func @transform_3(%arg0: i32) -> (i32, i32) {
    %c0_i32 = arith.constant 0 : i32
    %c0_i32_0 = arith.constant 0 : i32
    %c0_i32_1 = arith.constant 0 : i32
    return %c0_i32, %c0_i32_0 : i32, i32
  }
  func.func @transform_4(%arg0: i32) -> (i32, i32, i32) {
    %c0_i32 = arith.constant 0 : i32
    %c0_i32_0 = arith.constant 0 : i32
    %c0_i32_1 = arith.constant 0 : i32
    %c0_i32_2 = arith.constant 0 : i32
    return %c0_i32, %c0_i32_0, %c0_i32_1 : i32, i32, i32
  }
  func.func @transform_5(%arg0: i32) -> (i32, i32, i32) {
    %c0_i32 = arith.constant 0 : i32
    %c0_i32_0 = arith.constant 0 : i32
    %c0_i32_1 = arith.constant 0 : i32
    %c0_i32_2 = arith.constant 0 : i32
    return %c0_i32, %c0_i32_0, %c0_i32_1 : i32, i32, i32
  }
  func.func @transform_6(%arg0: i32) -> (i32, i32, i32) {
    %c0_i32 = arith.constant 0 : i32
    %c0_i32_0 = arith.constant 0 : i32
    %c0_i32_1 = arith.constant 0 : i32
    %c0_i32_2 = arith.constant 0 : i32
    return %c0_i32, %c0_i32_0, %c0_i32_1 : i32, i32, i32
  }
  func.func @transform_7(%arg0: i32) -> (i32, i32, i32) {
    %c0_i32 = arith.constant 0 : i32
    %c0_i32_0 = arith.constant 0 : i32
    %c0_i32_1 = arith.constant 0 : i32
    %c0_i32_2 = arith.constant 0 : i32
    return %c0_i32, %c0_i32_0, %c0_i32_1 : i32, i32, i32
  }
  func.func @transform_8(%arg0: i32) -> (i32, i32, i32, i32) {
    %c0_i32 = arith.constant 0 : i32
    %c0_i32_0 = arith.constant 0 : i32
    %c0_i32_1 = arith.constant 0 : i32
    %c0_i32_2 = arith.constant 0 : i32
    %c0_i32_3 = arith.constant 0 : i32
    return %c0_i32, %c0_i32_0, %c0_i32_1, %c0_i32_2 : i32, i32, i32, i32
  }
  func.func @transform_9(%arg0: i32) -> (i32, i32, i32) {
    %c0_i32 = arith.constant 0 : i32
    %c0_i32_0 = arith.constant 0 : i32
    %c0_i32_1 = arith.constant 0 : i32
    %c0_i32_2 = arith.constant 0 : i32
    return %c0_i32, %c0_i32_0, %c0_i32_1 : i32, i32, i32
  }
  func.func @transform_10(%arg0: i32) -> (i32, i32, i32) {
    %c0_i32 = arith.constant 0 : i32
    %c0_i32_0 = arith.constant 0 : i32
    %c0_i32_1 = arith.constant 0 : i32
    %c0_i32_2 = arith.constant 0 : i32
    return %c0_i32, %c0_i32_0, %c0_i32_1 : i32, i32, i32
  }
  func.func @transform_11(%arg0: i32) -> (i32, i32, i32) {
    %c0_i32 = arith.constant 0 : i32
    %c0_i32_0 = arith.constant 0 : i32
    %c0_i32_1 = arith.constant 0 : i32
    %c0_i32_2 = arith.constant 0 : i32
    return %c0_i32, %c0_i32_0, %c0_i32_1 : i32, i32, i32
  }
  func.func @transform_12(%arg0: i32) -> (i32, i32, i32) {
    %c0_i32 = arith.constant 0 : i32
    %c0_i32_0 = arith.constant 0 : i32
    %c0_i32_1 = arith.constant 0 : i32
    %c0_i32_2 = arith.constant 0 : i32
    return %c0_i32, %c0_i32_0, %c0_i32_1 : i32, i32, i32
  }
  func.func @transform_13(%arg0: i32) -> (i32, i32, i32) {
    %c0_i32 = arith.constant 0 : i32
    %c0_i32_0 = arith.constant 0 : i32
    %c0_i32_1 = arith.constant 0 : i32
    %c0_i32_2 = arith.constant 0 : i32
    return %c0_i32, %c0_i32_0, %c0_i32_1 : i32, i32, i32
  }
  func.func @transform_14(%arg0: i32) -> (i32, i32, i32) {
    %c0_i32 = arith.constant 0 : i32
    %c0_i32_0 = arith.constant 0 : i32
    %c0_i32_1 = arith.constant 0 : i32
    %c0_i32_2 = arith.constant 0 : i32
    return %c0_i32, %c0_i32_0, %c0_i32_1 : i32, i32, i32
  }
  func.func @transform_15(%arg0: i32) -> (i32, i32, i32) {
    %c0_i32 = arith.constant 0 : i32
    %c0_i32_0 = arith.constant 0 : i32
    %c0_i32_1 = arith.constant 0 : i32
    %c0_i32_2 = arith.constant 0 : i32
    return %c0_i32, %c0_i32_0, %c0_i32_1 : i32, i32, i32
  }
  func.func @transform_16(%arg0: i32) -> (i32, i32) {
    %c0_i32 = arith.constant 0 : i32
    %c0_i32_0 = arith.constant 0 : i32
    %c0_i32_1 = arith.constant 0 : i32
    return %c0_i32, %c0_i32_0 : i32, i32
  }
  func.func @transform_17(%arg0: i32) -> (i32, i32) {
    %c0_i32 = arith.constant 0 : i32
    %c0_i32_0 = arith.constant 0 : i32
    %c0_i32_1 = arith.constant 0 : i32
    return %c0_i32, %c0_i32_0 : i32, i32
  }
  func.func @transform_18(%arg0: i32) -> (i32, i32) {
    %c0_i32 = arith.constant 0 : i32
    %c0_i32_0 = arith.constant 0 : i32
    %c0_i32_1 = arith.constant 0 : i32
    return %c0_i32, %c0_i32_0 : i32, i32
  }
  func.func @transform_19(%arg0: i32) -> (i32, i32, i32) {
    %c0_i32 = arith.constant 0 : i32
    %c0_i32_0 = arith.constant 0 : i32
    %c0_i32_1 = arith.constant 0 : i32
    return %arg0, %c0_i32, %c0_i32_0 : i32, i32, i32
  }
}

</mosaic_0001>

<llo_original>
// kernel: tpu_custom_call.1
$region0: #{tpu_custom_call.1}
  #allocation0 [shape = 'u32[]', space=smem, size = 0x4, offset = 0x4, fixed_abs, tag = 'smem constant byte address 0x4 - core index']
  #allocation1 [shape = 'u32[144,128]{1,0:T(1,128)}', space=vmem, size = 0x12000, scoped, tag = 'internal scratch']
  %s0 = inlined_call_operand.vmem [shape: f32[2,8,1], index: 0, kind: input, shape index: {}]
  %s1 = inlined_call_operand.hbm [shape: f32[1,32], index: 1, kind: input, shape index: {}]
  %s2 = inlined_call_operand.hbm [shape: f32[1,32], index: 2, kind: input, shape index: {}]
  %s3 = inlined_call_operand.vmem [shape: f32[8,32], index: 3, kind: input, shape index: {}]
  %s4 = inlined_call_operand.hbm [shape: f32[2,1,32], index: 4, kind: input, shape index: {}]
  %s5 = inlined_call_operand.hbm [shape: f32[2,1,32], index: 5, kind: input, shape index: {}]
  %s6 = inlined_call_operand.vmem [shape: f32[2,32,96], index: 6, kind: input, shape index: {}]
  %s7 = inlined_call_operand.hbm [shape: f32[2,1,96], index: 7, kind: input, shape index: {}]
  %s8 = inlined_call_operand.vmem [shape: f32[2,4,8,32], index: 8, kind: input, shape index: {}]
  %s9 = inlined_call_operand.hbm [shape: f32[2,1,32], index: 9, kind: input, shape index: {}]
  %s10 = inlined_call_operand.hbm [shape: f32[2,1,32], index: 10, kind: input, shape index: {}]
  %s11 = inlined_call_operand.hbm [shape: f32[2,1,32], index: 11, kind: input, shape index: {}]
  %s12 = inlined_call_operand.vmem [shape: f32[2,32,64], index: 12, kind: input, shape index: {}]
  %s13 = inlined_call_operand.hbm [shape: f32[2,1,64], index: 13, kind: input, shape index: {}]
  %s14 = inlined_call_operand.vmem [shape: f32[2,64,32], index: 14, kind: input, shape index: {}]
  %s15 = inlined_call_operand.vmem [shape: f32[2,1,32], index: 15, kind: input, shape index: {}]
  %s16 = inlined_call_operand.vmem [shape: f32[4,8], index: 16, kind: input, shape index: {}]
  %s17 = inlined_call_operand.vmem [shape: f32[4,32], index: 17, kind: input, shape index: {}]
  %s18 = inlined_call_operand.vmem [shape: f32[4,1], index: 18, kind: input, shape index: {}]
  %s19 = inlined_call_operand.vmem [shape: f32[2,4,1], index: 19, kind: output, shape index: {}]
  %s20 = sld [smem:[#allocation0]]
  $region145: #{tpu_custom_call.1} parent=0
    _
  %s22 = ssub.s32 1, %s20
  %s23 = scalar_select 0, %s22, %s20
  $region1: #{tpu_custom_call.1} parent=0
    #allocation2 [shape = 'u8[512]{0}', space=vmem, size = 0x400, scoped, tag = 'input window, operand 1, single buffered']
    #allocation3 [shape = 's32[2]{0}', space=sflag, size = 0x8, scoped, tag = 'scoped memory for tpu_custom_call.1']
    #allocation4 [shape = 'u8[512]{0}', space=vmem, size = 0x400, scoped, tag = 'input window, operand 2, single buffered']
    #allocation5 [shape = 's32[1]{0}', space=sflag, size = 0x4, scoped, tag = 'scoped memory for tpu_custom_call.1']
    #allocation6 [shape = 'u8[1024]{0}', space=vmem, size = 0x400, scoped, tag = 'input window, operand 4, single buffered']
    #allocation7 [shape = 'u8[1024]{0}', space=vmem, size = 0x400, scoped, tag = 'input window, operand 5, single buffered']
    #allocation8 [shape = 's32[1]{0}', space=sflag, size = 0x4, scoped, tag = 'scoped memory for tpu_custom_call.1']
    #allocation9 [shape = 'u8[1024]{0}', space=vmem, size = 0x400, scoped, tag = 'input window, operand 7, single buffered']
    #allocation10 [shape = 'u8[1024]{0}', space=vmem, size = 0x400, scoped, tag = 'input window, operand 9, single buffered']
    #allocation11 [shape = 's32[1]{0}', space=sflag, size = 0x4, scoped, tag = 'scoped memory for tpu_custom_call.1']
    #allocation12 [shape = 'u8[1024]{0}', space=vmem, size = 0x400, scoped, tag = 'input window, operand 10, single buffered']
    #allocation13 [shape = 'u8[1024]{0}', space=vmem, size = 0x400, scoped, tag = 'input window, operand 11, single buffered']
    #allocation14 [shape = 's32[1]{0}', space=sflag, size = 0x4, scoped, tag = 'scoped memory for tpu_custom_call.1']
    #allocation15 [shape = 'u8[1024]{0}', space=vmem, size = 0x400, scoped, tag = 'input window, operand 13, single buffered']
    %24 = vsyncpa [#allocation3], 0
    %25 = vsyncpa [#allocation5], 0
    %26 = vsyncpa [#allocation8], 0
    %27 = vsyncpa [#allocation11], 0
    %28 = vsyncpa [#allocation14], 0
    loop: start=0, step=1, limit=4
    $region2: #{tpu_custom_call.1} parent=1 // loop_pre_header
      _
    $region3: #{tpu_custom_call.1} parent=1 // loop_header
      %s30 = sphi 0, %s34
      %p31 = scmp.ge.s32.totalorder %s30, 4
      %s40 = sphi 0, %s42
      %s43 = sphi 0, %s40
      %s44 = sphi 0, %s43
      %s60 = sphi 0, %s44
      %s64 = sphi 0, %s64
      %s66 = sphi 0, %s64
      %s67 = sphi 0, %s66
      %s81 = sphi 0, %s67
      %s85 = sphi 0, %s85
      %s87 = sphi 0, %s85
      %s88 = sphi 0, %s87
      %s102 = sphi 0, %s88
      %s106 = sphi 0, %s106
      %s108 = sphi 0, %s106
      %s109 = sphi 0, %s108
      %s123 = sphi 0, %s109
      %s127 = sphi 0, %s127
      %s129 = sphi 0, %s127
      %s130 = sphi 0, %s129
      %s144 = sphi 0, %s130
      %s148 = sphi 0, %s148
      %s150 = sphi 0, %s148
      %s151 = sphi 0, %s150
      %s165 = sphi 0, %s151
      %s169 = sphi 0, %s169
      %s171 = sphi 0, %s169
      %s172 = sphi 0, %s171
      %s186 = sphi 0, %s172
      %s190 = sphi 0, %s190
      %s192 = sphi 0, %s190
      %s193 = sphi 0, %s192
      %s207 = sphi 0, %s193
      %s211 = sphi 0, %s211
      %s213 = sphi 0, %s211
      %s214 = sphi 0, %s213
      %s228 = sphi 0, %s214
      %s232 = sphi 0, %s232
      %s234 = sphi 0, %s232
      %s235 = sphi 0, %s234
      %s249 = sphi 0, %s235
      %s253 = sphi 0, %s253
      %s255 = sphi 0, %s253
      %s256 = sphi 0, %s255
      %s270 = sphi 0, %s256
      %s274 = sphi 0, %s274
      %s276 = sphi 0, %s274
      %s277 = sphi 0, %s276
      %s291 = sphi 0, %s277
      %s295 = sphi 0, %s295
      %s297 = sphi 0, %s295
      %s298 = sphi 0, %s297
      %s312 = sphi 0, %s298
      %s316 = sphi 0, %s316
      %s318 = sphi 0, %s316
      %s319 = sphi 0, %s318
      %s333 = sphi 0, %s319
      %s337 = sphi 0, %s337
      %s339 = sphi 0, %s337
      %s340 = sphi 0, %s339
      %s354 = sphi 0, %s340
      %s358 = sphi 0, %s358
      %s360 = sphi 0, %s358
      %s361 = sphi 0, %s360
      %s375 = sphi 0, %s361
      %s379 = sphi 0, %s379
      %s381 = sphi 0, %s379
      %s382 = sphi 0, %s381
      %s396 = sphi 0, %s382
      %s400 = sphi 0, %s400
      %s402 = sphi 0, %s400
      %s403 = sphi 0, %s402
      %s417 = sphi 0, %s403
      %s421 = sphi 0, %s421
      %s423 = sphi 0, %s421
      %s424 = sphi 0, %s423
      %s438 = sphi 0, %s424
      %s444 = sphi 0, %s446
      %s447 = sphi 0, %s444
      %s448 = sphi 0, %s447
      %s464 = sphi 0, %s448
    $region4: #{tpu_custom_call.1} parent=1 // loop_header_branch
      %33 = sbr.rel (%p31) target = $region8
    $region5: #{tpu_custom_call.1} parent=1 // loop_body
      %s35 = ssub.s32 %s30, 1
      %s36 = ssub.s32 %s30, 2
      %s37 = sadd.s32 %s30, 1
      %s38 = ssub.s32 %s30, %s37
      %p39 = scmp.eq.s32.totalorder %s38, 0
      %s41 = sadd.s32 %s40, 1
      %s42 = scalar_select %p39, %s40, %s41
      %p45 = pneg %p39
      %p46 = scmp.eq.s32.totalorder %s30, 1
      %p47 = por %p45, %p46
      %p48 = scmp.ne.s32.totalorder %s40, %s43
      %p49 = scmp.eq.s32.totalorder %s30, 0
      %p50 = por %p48, %p49
      %p51 = scmp.ne.s32.totalorder %s40, %s43
      %p52 = scmp.eq.s32.totalorder %s35, 1
      %p53 = por %p51, %p52
      %p54 = scmp.ne.s32.totalorder %s43, %s44
      %p55 = scmp.eq.s32.totalorder %s35, 0
      %p56 = por %p54, %p55
      %p57 = scmp.ne.s32.totalorder %s43, %s44
      %p58 = scmp.eq.s32.totalorder %s36, 1
      %p59 = por %p57, %p58
      %p61 = scmp.ne.s32.totalorder %s44, %s60
      %p62 = scmp.eq.s32.totalorder %s36, 0
      %p63 = por %p61, %p62
      %s65 = sadd.s32 %s64, 1
      %p68 = scmp.eq.s32.totalorder %s30, 1
      %p69 = scmp.ne.s32.totalorder %s64, %s66
      %p70 = scmp.eq.s32.totalorder %s30, 0
      %p71 = por %p69, %p70
      %p72 = scmp.ne.s32.totalorder %s64, %s66
      %p73 = scmp.eq.s32.totalorder %s35, 1
      %p74 = por %p72, %p73
      %p75 = scmp.ne.s32.totalorder %s66, %s67
      %p76 = scmp.eq.s32.totalorder %s35, 0
      %p77 = por %p75, %p76
      %p78 = scmp.ne.s32.totalorder %s66, %s67
      %p79 = scmp.eq.s32.totalorder %s36, 1
      %p80 = por %p78, %p79
      %p82 = scmp.ne.s32.totalorder %s67, %s81
      %p83 = scmp.eq.s32.totalorder %s36, 0
      %p84 = por %p82, %p83
      %s86 = sadd.s32 %s85, 1
      %p89 = scmp.eq.s32.totalorder %s30, 1
      %p90 = scmp.ne.s32.totalorder %s85, %s87
      %p91 = scmp.eq.s32.totalorder %s30, 0
      %p92 = por %p90, %p91
      %p93 = scmp.ne.s32.totalorder %s85, %s87
      %p94 = scmp.eq.s32.totalorder %s35, 1
      %p95 = por %p93, %p94
      %p96 = scmp.ne.s32.totalorder %s87, %s88
      %p97 = scmp.eq.s32.totalorder %s35, 0
      %p98 = por %p96, %p97
      %p99 = scmp.ne.s32.totalorder %s87, %s88
      %p100 = scmp.eq.s32.totalorder %s36, 1
      %p101 = por %p99, %p100
      %p103 = scmp.ne.s32.totalorder %s88, %s102
      %p104 = scmp.eq.s32.totalorder %s36, 0
      %p105 = por %p103, %p104
      %s107 = sadd.s32 %s106, 1
      %p110 = scmp.eq.s32.totalorder %s30, 1
      %p111 = scmp.ne.s32.totalorder %s106, %s108
      %p112 = scmp.eq.s32.totalorder %s30, 0
      %p113 = por %p111, %p112
      %p114 = scmp.ne.s32.totalorder %s106, %s108
      %p115 = scmp.eq.s32.totalorder %s35, 1
      %p116 = por %p114, %p115
      %p117 = scmp.ne.s32.totalorder %s108, %s109
      %p118 = scmp.eq.s32.totalorder %s35, 0
      %p119 = por %p117, %p118
      %p120 = scmp.ne.s32.totalorder %s108, %s109
      %p121 = scmp.eq.s32.totalorder %s36, 1
      %p122 = por %p120, %p121
      %p124 = scmp.ne.s32.totalorder %s109, %s123
      %p125 = scmp.eq.s32.totalorder %s36, 0
      %p126 = por %p124, %p125
      %s128 = sadd.s32 %s127, 1
      %p131 = scmp.eq.s32.totalorder %s30, 1
      %p132 = scmp.ne.s32.totalorder %s127, %s129
      %p133 = scmp.eq.s32.totalorder %s30, 0
      %p134 = por %p132, %p133
      %p135 = scmp.ne.s32.totalorder %s127, %s129
      %p136 = scmp.eq.s32.totalorder %s35, 1
      %p137 = por %p135, %p136
      %p138 = scmp.ne.s32.totalorder %s129, %s130
      %p139 = scmp.eq.s32.totalorder %s35, 0
      %p140 = por %p138, %p139
      %p141 = scmp.ne.s32.totalorder %s129, %s130
      %p142 = scmp.eq.s32.totalorder %s36, 1
      %p143 = por %p141, %p142
      %p145 = scmp.ne.s32.totalorder %s130, %s144
      %p146 = scmp.eq.s32.totalorder %s36, 0
      %p147 = por %p145, %p146
      %s149 = sadd.s32 %s148, 1
      %p152 = scmp.eq.s32.totalorder %s30, 1
      %p153 = scmp.ne.s32.totalorder %s148, %s150
      %p154 = scmp.eq.s32.totalorder %s30, 0
      %p155 = por %p153, %p154
      %p156 = scmp.ne.s32.totalorder %s148, %s150
      %p157 = scmp.eq.s32.totalorder %s35, 1
      %p158 = por %p156, %p157
      %p159 = scmp.ne.s32.totalorder %s150, %s151
      %p160 = scmp.eq.s32.totalorder %s35, 0
      %p161 = por %p159, %p160
      %p162 = scmp.ne.s32.totalorder %s150, %s151
      %p163 = scmp.eq.s32.totalorder %s36, 1
      %p164 = por %p162, %p163
      %p166 = scmp.ne.s32.totalorder %s151, %s165
      %p167 = scmp.eq.s32.totalorder %s36, 0
      %p168 = por %p166, %p167
      %s170 = sadd.s32 %s169, 1
      %p173 = scmp.eq.s32.totalorder %s30, 1
      %p174 = scmp.ne.s32.totalorder %s169, %s171
      %p175 = scmp.eq.s32.totalorder %s30, 0
      %p176 = por %p174, %p175
      %p177 = scmp.ne.s32.totalorder %s169, %s171
      %p178 = scmp.eq.s32.totalorder %s35, 1
      %p179 = por %p177, %p178
      %p180 = scmp.ne.s32.totalorder %s171, %s172
      %p181 = scmp.eq.s32.totalorder %s35, 0
      %p182 = por %p180, %p181
      %p183 = scmp.ne.s32.totalorder %s171, %s172
      %p184 = scmp.eq.s32.totalorder %s36, 1
      %p185 = por %p183, %p184
      %p187 = scmp.ne.s32.totalorder %s172, %s186
      %p188 = scmp.eq.s32.totalorder %s36, 0
      %p189 = por %p187, %p188
      %s191 = sadd.s32 %s190, 1
      %p194 = scmp.eq.s32.totalorder %s30, 1
      %p195 = scmp.ne.s32.totalorder %s190, %s192
      %p196 = scmp.eq.s32.totalorder %s30, 0
      %p197 = por %p195, %p196
      %p198 = scmp.ne.s32.totalorder %s190, %s192
      %p199 = scmp.eq.s32.totalorder %s35, 1
      %p200 = por %p198, %p199
      %p201 = scmp.ne.s32.totalorder %s192, %s193
      %p202 = scmp.eq.s32.totalorder %s35, 0
      %p203 = por %p201, %p202
      %p204 = scmp.ne.s32.totalorder %s192, %s193
      %p205 = scmp.eq.s32.totalorder %s36, 1
      %p206 = por %p204, %p205
      %p208 = scmp.ne.s32.totalorder %s193, %s207
      %p209 = scmp.eq.s32.totalorder %s36, 0
      %p210 = por %p208, %p209
      %s212 = sadd.s32 %s211, 1
      %p215 = scmp.eq.s32.totalorder %s30, 1
      %p216 = scmp.ne.s32.totalorder %s211, %s213
      %p217 = scmp.eq.s32.totalorder %s30, 0
      %p218 = por %p216, %p217
      %p219 = scmp.ne.s32.totalorder %s211, %s213
      %p220 = scmp.eq.s32.totalorder %s35, 1
      %p221 = por %p219, %p220
      %p222 = scmp.ne.s32.totalorder %s213, %s214
      %p223 = scmp.eq.s32.totalorder %s35, 0
      %p224 = por %p222, %p223
      %p225 = scmp.ne.s32.totalorder %s213, %s214
      %p226 = scmp.eq.s32.totalorder %s36, 1
      %p227 = por %p225, %p226
      %p229 = scmp.ne.s32.totalorder %s214, %s228
      %p230 = scmp.eq.s32.totalorder %s36, 0
      %p231 = por %p229, %p230
      %s233 = sadd.s32 %s232, 1
      %p236 = scmp.eq.s32.totalorder %s30, 1
      %p237 = scmp.ne.s32.totalorder %s232, %s234
      %p238 = scmp.eq.s32.totalorder %s30, 0
      %p239 = por %p237, %p238
      %p240 = scmp.ne.s32.totalorder %s232, %s234
      %p241 = scmp.eq.s32.totalorder %s35, 1
      %p242 = por %p240, %p241
      %p243 = scmp.ne.s32.totalorder %s234, %s235
      %p244 = scmp.eq.s32.totalorder %s35, 0
      %p245 = por %p243, %p244
      %p246 = scmp.ne.s32.totalorder %s234, %s235
      %p247 = scmp.eq.s32.totalorder %s36, 1
      %p248 = por %p246, %p247
      %p250 = scmp.ne.s32.totalorder %s235, %s249
      %p251 = scmp.eq.s32.totalorder %s36, 0
      %p252 = por %p250, %p251
      %s254 = sadd.s32 %s253, 1
      %p257 = scmp.eq.s32.totalorder %s30, 1
      %p258 = scmp.ne.s32.totalorder %s253, %s255
      %p259 = scmp.eq.s32.totalorder %s30, 0
      %p260 = por %p258, %p259
      %p261 = scmp.ne.s32.totalorder %s253, %s255
      %p262 = scmp.eq.s32.totalorder %s35, 1
      %p263 = por %p261, %p262
      %p264 = scmp.ne.s32.totalorder %s255, %s256
      %p265 = scmp.eq.s32.totalorder %s35, 0
      %p266 = por %p264, %p265
      %p267 = scmp.ne.s32.totalorder %s255, %s256
      %p268 = scmp.eq.s32.totalorder %s36, 1
      %p269 = por %p267, %p268
      %p271 = scmp.ne.s32.totalorder %s256, %s270
      %p272 = scmp.eq.s32.totalorder %s36, 0
      %p273 = por %p271, %p272
      %s275 = sadd.s32 %s274, 1
      %p278 = scmp.eq.s32.totalorder %s30, 1
      %p279 = scmp.ne.s32.totalorder %s274, %s276
      %p280 = scmp.eq.s32.totalorder %s30, 0
      %p281 = por %p279, %p280
      %p282 = scmp.ne.s32.totalorder %s274, %s276
      %p283 = scmp.eq.s32.totalorder %s35, 1
      %p284 = por %p282, %p283
      %p285 = scmp.ne.s32.totalorder %s276, %s277
      %p286 = scmp.eq.s32.totalorder %s35, 0
      %p287 = por %p285, %p286
      %p288 = scmp.ne.s32.totalorder %s276, %s277
      %p289 = scmp.eq.s32.totalorder %s36, 1
      %p290 = por %p288, %p289
      %p292 = scmp.ne.s32.totalorder %s277, %s291
      %p293 = scmp.eq.s32.totalorder %s36, 0
      %p294 = por %p292, %p293
      %s296 = sadd.s32 %s295, 1
      %p299 = scmp.eq.s32.totalorder %s30, 1
      %p300 = scmp.ne.s32.totalorder %s295, %s297
      %p301 = scmp.eq.s32.totalorder %s30, 0
      %p302 = por %p300, %p301
      %p303 = scmp.ne.s32.totalorder %s295, %s297
      %p304 = scmp.eq.s32.totalorder %s35, 1
      %p305 = por %p303, %p304
      %p306 = scmp.ne.s32.totalorder %s297, %s298
      %p307 = scmp.eq.s32.totalorder %s35, 0
      %p308 = por %p306, %p307
      %p309 = scmp.ne.s32.totalorder %s297, %s298
      %p310 = scmp.eq.s32.totalorder %s36, 1
      %p311 = por %p309, %p310
      %p313 = scmp.ne.s32.totalorder %s298, %s312
      %p314 = scmp.eq.s32.totalorder %s36, 0
      %p315 = por %p313, %p314
      %s317 = sadd.s32 %s316, 1
      %p320 = scmp.eq.s32.totalorder %s30, 1
      %p321 = scmp.ne.s32.totalorder %s316, %s318
      %p322 = scmp.eq.s32.totalorder %s30, 0
      %p323 = por %p321, %p322
      %p324 = scmp.ne.s32.totalorder %s316, %s318
      %p325 = scmp.eq.s32.totalorder %s35, 1
      %p326 = por %p324, %p325
      %p327 = scmp.ne.s32.totalorder %s318, %s319
      %p328 = scmp.eq.s32.totalorder %s35, 0
      %p329 = por %p327, %p328
      %p330 = scmp.ne.s32.totalorder %s318, %s319
      %p331 = scmp.eq.s32.totalorder %s36, 1
      %p332 = por %p330, %p331
      %p334 = scmp.ne.s32.totalorder %s319, %s333
      %p335 = scmp.eq.s32.totalorder %s36, 0
      %p336 = por %p334, %p335
      %s338 = sadd.s32 %s337, 1
      %p341 = scmp.eq.s32.totalorder %s30, 1
      %p342 = scmp.ne.s32.totalorder %s337, %s339
      %p343 = scmp.eq.s32.totalorder %s30, 0
      %p344 = por %p342, %p343
      %p345 = scmp.ne.s32.totalorder %s337, %s339
      %p346 = scmp.eq.s32.totalorder %s35, 1
      %p347 = por %p345, %p346
      %p348 = scmp.ne.s32.totalorder %s339, %s340
      %p349 = scmp.eq.s32.totalorder %s35, 0
      %p350 = por %p348, %p349
      %p351 = scmp.ne.s32.totalorder %s339, %s340
      %p352 = scmp.eq.s32.totalorder %s36, 1
      %p353 = por %p351, %p352
      %p355 = scmp.ne.s32.totalorder %s340, %s354
      %p356 = scmp.eq.s32.totalorder %s36, 0
      %p357 = por %p355, %p356
      %s359 = sadd.s32 %s358, 1
      %p362 = scmp.eq.s32.totalorder %s30, 1
      %p363 = scmp.ne.s32.totalorder %s358, %s360
      %p364 = scmp.eq.s32.totalorder %s30, 0
      %p365 = por %p363, %p364
      %p366 = scmp.ne.s32.totalorder %s358, %s360
      %p367 = scmp.eq.s32.totalorder %s35, 1
      %p368 = por %p366, %p367
      %p369 = scmp.ne.s32.totalorder %s360, %s361
      %p370 = scmp.eq.s32.totalorder %s35, 0
      %p371 = por %p369, %p370
      %p372 = scmp.ne.s32.totalorder %s360, %s361
      %p373 = scmp.eq.s32.totalorder %s36, 1
      %p374 = por %p372, %p373
      %p376 = scmp.ne.s32.totalorder %s361, %s375
      %p377 = scmp.eq.s32.totalorder %s36, 0
      %p378 = por %p376, %p377
      %s380 = sadd.s32 %s379, 1
      %p383 = scmp.eq.s32.totalorder %s30, 1
      %p384 = scmp.ne.s32.totalorder %s379, %s381
      %p385 = scmp.eq.s32.totalorder %s30, 0
      %p386 = por %p384, %p385
      %p387 = scmp.ne.s32.totalorder %s379, %s381
      %p388 = scmp.eq.s32.totalorder %s35, 1
      %p389 = por %p387, %p388
      %p390 = scmp.ne.s32.totalorder %s381, %s382
      %p391 = scmp.eq.s32.totalorder %s35, 0
      %p392 = por %p390, %p391
      %p393 = scmp.ne.s32.totalorder %s381, %s382
      %p394 = scmp.eq.s32.totalorder %s36, 1
      %p395 = por %p393, %p394
      %p397 = scmp.ne.s32.totalorder %s382, %s396
      %p398 = scmp.eq.s32.totalorder %s36, 0
      %p399 = por %p397, %p398
      %s401 = sadd.s32 %s400, 1
      %p404 = scmp.eq.s32.totalorder %s30, 1
      %p405 = scmp.ne.s32.totalorder %s400, %s402
      %p406 = scmp.eq.s32.totalorder %s30, 0
      %p407 = por %p405, %p406
      %p408 = scmp.ne.s32.totalorder %s400, %s402
      %p409 = scmp.eq.s32.totalorder %s35, 1
      %p410 = por %p408, %p409
      %p411 = scmp.ne.s32.totalorder %s402, %s403
      %p412 = scmp.eq.s32.totalorder %s35, 0
      %p413 = por %p411, %p412
      %p414 = scmp.ne.s32.totalorder %s402, %s403
      %p415 = scmp.eq.s32.totalorder %s36, 1
      %p416 = por %p414, %p415
      %p418 = scmp.ne.s32.totalorder %s403, %s417
      %p419 = scmp.eq.s32.totalorder %s36, 0
      %p420 = por %p418, %p419
      %s422 = sadd.s32 %s421, 1
      %p425 = scmp.eq.s32.totalorder %s30, 1
      %p426 = scmp.ne.s32.totalorder %s421, %s423
      %p427 = scmp.eq.s32.totalorder %s30, 0
      %p428 = por %p426, %p427
      %p429 = scmp.ne.s32.totalorder %s421, %s423
      %p430 = scmp.eq.s32.totalorder %s35, 1
      %p431 = por %p429, %p430
      %p432 = scmp.ne.s32.totalorder %s423, %s424
      %p433 = scmp.eq.s32.totalorder %s35, 0
      %p434 = por %p432, %p433
      %p435 = scmp.ne.s32.totalorder %s423, %s424
      %p436 = scmp.eq.s32.totalorder %s36, 1
      %p437 = por %p435, %p436
      %p439 = scmp.ne.s32.totalorder %s424, %s438
      %p440 = scmp.eq.s32.totalorder %s36, 0
      %p441 = por %p439, %p440
      %s442 = ssub.s32 %s30, %s37
      %p443 = scmp.eq.s32.totalorder %s442, 0
      %s445 = sadd.s32 %s444, 1
      %s446 = scalar_select %p443, %s444, %s445
      %p449 = pneg %p443
      %p450 = scmp.eq.s32.totalorder %s30, 1
      %p451 = por %p449, %p450
      %p452 = scmp.ne.s32.totalorder %s444, %s447
      %p453 = scmp.eq.s32.totalorder %s30, 0
      %p454 = por %p452, %p453
      %p455 = scmp.ne.s32.totalorder %s444, %s447
      %p456 = scmp.eq.s32.totalorder %s35, 1
      %p457 = por %p455, %p456
      %p458 = scmp.ne.s32.totalorder %s447, %s448
      %p459 = scmp.eq.s32.totalorder %s35, 0
      %p460 = por %p458, %p459
      %p461 = scmp.ne.s32.totalorder %s447, %s448
      %p462 = scmp.eq.s32.totalorder %s36, 1
      %p463 = por %p461, %p462
      %p465 = scmp.ne.s32.totalorder %s448, %s464
      %p466 = scmp.eq.s32.totalorder %s36, 0
      %p467 = por %p465, %p466
      %p468 = scmp.le.s32.totalorder 1, %s30
      %p469 = scmp.lt.s32.totalorder %s30, 3
      %p470 = pnand %p468, %p469
      %p471 = pneg %p470
      // Predicated region
      $region9: #{tpu_custom_call.1} parent=5 // pred_check
        _
      $region10: #{tpu_custom_call.1} parent=5 // pred_check_branch
        %473 = sbr.rel (%p470) target = $region12
      $region11: #{tpu_custom_call.1} parent=5 // pred_region
        %s474 = ssub.s32 %s30, 1
        // Predicated region
        $region13: #{tpu_custom_call.1} parent=11 // pred_check
          %p475 = pneg %p77
        $region14: #{tpu_custom_call.1} parent=11 // pred_check_branch
          %477 = sbr.rel (%p475) target = $region16
        $region15: #{tpu_custom_call.1} parent=11 // pred_region
          %s479 = ssub.s32 16, 16
          %480 = vsyncadd [#allocation3], %s479
          %s482 = sshll.u32 [#allocation2], 4
          %s483 = int_to_ptr.vmem [resolvable:$true] %s482
          %485 = dma.hbm_to_vmem [thread:$0]  %s1, 16, %s483, [#allocation3]
        $region16: #{tpu_custom_call.1} parent=11 // pred_fallthru
          _
        // Predicated region
        $region17: #{tpu_custom_call.1} parent=11 // pred_check
          %p486 = pneg %p98
        $region18: #{tpu_custom_call.1} parent=11 // pred_check_branch
          %488 = sbr.rel (%p486) target = $region20
        $region19: #{tpu_custom_call.1} parent=11 // pred_region
          %s490 = ssub.s32 16, 16
          %491 = vsyncadd [#allocation5], %s490
          %s493 = sshll.u32 [#allocation4], 4
          %s494 = int_to_ptr.vmem [resolvable:$true] %s493
          %496 = dma.hbm_to_vmem [thread:$0]  %s2, 16, %s494, [#allocation5]
        $region20: #{tpu_custom_call.1} parent=11 // pred_fallthru
          _
        // Predicated region
        $region21: #{tpu_custom_call.1} parent=11 // pred_check
          %p497 = pneg %p119
        $region22: #{tpu_custom_call.1} parent=11 // pred_check_branch
          %499 = sbr.rel (%p497) target = $region24
        $region23: #{tpu_custom_call.1} parent=11 // pred_region
          _
        $region24: #{tpu_custom_call.1} parent=11 // pred_fallthru
          _
        // Predicated region
        $region25: #{tpu_custom_call.1} parent=11 // pred_check
          %p500 = pneg %p140
        $region26: #{tpu_custom_call.1} parent=11 // pred_check_branch
          %502 = sbr.rel (%p500) target = $region28
        $region27: #{tpu_custom_call.1} parent=11 // pred_region
          %s504 = ssub.s32 32, 32
          %505 = vsyncadd [#allocation5], %s504
          %s506 = sshll.u32 [#allocation6], 4
          %s507 = int_to_ptr.vmem [resolvable:$true] %s506
          %512 = dma.hbm_to_vmem [thread:$0]  %s4, 32, %s507, [#allocation5], 16, 16, 1
        $region28: #{tpu_custom_call.1} parent=11 // pred_fallthru
          _
        // Predicated region
        $region29: #{tpu_custom_call.1} parent=11 // pred_check
          %p513 = pneg %p161
        $region30: #{tpu_custom_call.1} parent=11 // pred_check_branch
          %515 = sbr.rel (%p513) target = $region32
        $region31: #{tpu_custom_call.1} parent=11 // pred_region
          %s517 = ssub.s32 32, 32
          %518 = vsyncadd [#allocation8], %s517
          %s519 = sshll.u32 [#allocation7], 4
          %s520 = int_to_ptr.vmem [resolvable:$true] %s519
          %525 = dma.hbm_to_vmem [thread:$0]  %s5, 32, %s520, [#allocation8], 16, 16, 1
        $region32: #{tpu_custom_call.1} parent=11 // pred_fallthru
          _
        // Predicated region
        $region33: #{tpu_custom_call.1} parent=11 // pred_check
          %p526 = pneg %p182
        $region34: #{tpu_custom_call.1} parent=11 // pred_check_branch
          %528 = sbr.rel (%p526) target = $region36
        $region35: #{tpu_custom_call.1} parent=11 // pred_region
          _
        $region36: #{tpu_custom_call.1} parent=11 // pred_fallthru
          _
        // Predicated region
        $region37: #{tpu_custom_call.1} parent=11 // pred_check
          %p529 = pneg %p203
        $region38: #{tpu_custom_call.1} parent=11 // pred_check_branch
          %531 = sbr.rel (%p529) target = $region40
        $region39: #{tpu_custom_call.1} parent=11 // pred_region
          %s533 = ssub.s32 32, 32
          %534 = vsyncadd [#allocation8], %s533
          %s535 = sshll.u32 [#allocation9], 4
          %s536 = int_to_ptr.vmem [resolvable:$true] %s535
          %541 = dma.hbm_to_vmem [thread:$0]  %s7, 32, %s536, [#allocation8], 16, 16, 1
        $region40: #{tpu_custom_call.1} parent=11 // pred_fallthru
          _
        // Predicated region
        $region41: #{tpu_custom_call.1} parent=11 // pred_check
          %p542 = pneg %p224
        $region42: #{tpu_custom_call.1} parent=11 // pred_check_branch
          %544 = sbr.rel (%p542) target = $region44
        $region43: #{tpu_custom_call.1} parent=11 // pred_region
          _
        $region44: #{tpu_custom_call.1} parent=11 // pred_fallthru
          _
        // Predicated region
        $region45: #{tpu_custom_call.1} parent=11 // pred_check
          %p545 = pneg %p245
        $region46: #{tpu_custom_call.1} parent=11 // pred_check_branch
          %547 = sbr.rel (%p545) target = $region48
        $region47: #{tpu_custom_call.1} parent=11 // pred_region
          %s549 = ssub.s32 32, 32
          %550 = vsyncadd [#allocation11], %s549
          %s551 = sshll.u32 [#allocation10], 4
          %s552 = int_to_ptr.vmem [resolvable:$true] %s551
          %557 = dma.hbm_to_vmem [thread:$0]  %s9, 32, %s552, [#allocation11], 16, 16, 1
        $region48: #{tpu_custom_call.1} parent=11 // pred_fallthru
          _
        // Predicated region
        $region49: #{tpu_custom_call.1} parent=11 // pred_check
          %p558 = pneg %p266
        $region50: #{tpu_custom_call.1} parent=11 // pred_check_branch
          %560 = sbr.rel (%p558) target = $region52
        $region51: #{tpu_custom_call.1} parent=11 // pred_region
          %s562 = ssub.s32 32, 32
          %563 = vsyncadd [#allocation11], %s562
          %s564 = sshll.u32 [#allocation12], 4
          %s565 = int_to_ptr.vmem [resolvable:$true] %s564
          %570 = dma.hbm_to_vmem [thread:$0]  %s10, 32, %s565, [#allocation11], 16, 16, 1
        $region52: #{tpu_custom_call.1} parent=11 // pred_fallthru
          _
        // Predicated region
        $region53: #{tpu_custom_call.1} parent=11 // pred_check
          %p571 = pneg %p287
        $region54: #{tpu_custom_call.1} parent=11 // pred_check_branch
          %573 = sbr.rel (%p571) target = $region56
        $region55: #{tpu_custom_call.1} parent=11 // pred_region
          %s575 = ssub.s32 32, 32
          %576 = vsyncadd [#allocation14], %s575
          %s577 = sshll.u32 [#allocation13], 4
          %s578 = int_to_ptr.vmem [resolvable:$true] %s577
          %583 = dma.hbm_to_vmem [thread:$0]  %s11, 32, %s578, [#allocation14], 16, 16, 1
        $region56: #{tpu_custom_call.1} parent=11 // pred_fallthru
          _
        // Predicated region
        $region57: #{tpu_custom_call.1} parent=11 // pred_check
          %p584 = pneg %p308
        $region58: #{tpu_custom_call.1} parent=11 // pred_check_branch
          %586 = sbr.rel (%p584) target = $region60
        $region59: #{tpu_custom_call.1} parent=11 // pred_region
          _
        $region60: #{tpu_custom_call.1} parent=11 // pred_fallthru
          _
        // Predicated region
        $region61: #{tpu_custom_call.1} parent=11 // pred_check
          %p587 = pneg %p329
        $region62: #{tpu_custom_call.1} parent=11 // pred_check_branch
          %589 = sbr.rel (%p587) target = $region64
        $region63: #{tpu_custom_call.1} parent=11 // pred_region
          %s591 = ssub.s32 32, 32
          %592 = vsyncadd [#allocation14], %s591
          %s593 = sshll.u32 [#allocation15], 4
          %s594 = int_to_ptr.vmem [resolvable:$true] %s593
          %599 = dma.hbm_to_vmem [thread:$0]  %s13, 32, %s594, [#allocation14], 16, 16, 1
        $region64: #{tpu_custom_call.1} parent=11 // pred_fallthru
          _
        // Predicated region
        $region65: #{tpu_custom_call.1} parent=11 // pred_check
          %p600 = pneg %p350
        $region66: #{tpu_custom_call.1} parent=11 // pred_check_branch
          %602 = sbr.rel (%p600) target = $region68
        $region67: #{tpu_custom_call.1} parent=11 // pred_region
          _
        $region68: #{tpu_custom_call.1} parent=11 // pred_fallthru
          _
        // Predicated region
        $region69: #{tpu_custom_call.1} parent=11 // pred_check
          %p603 = pneg %p371
        $region70: #{tpu_custom_call.1} parent=11 // pred_check_branch
          %605 = sbr.rel (%p603) target = $region72
        $region71: #{tpu_custom_call.1} parent=11 // pred_region
          _
        $region72: #{tpu_custom_call.1} parent=11 // pred_fallthru
          _
        // Predicated region
        $region73: #{tpu_custom_call.1} parent=11 // pred_check
          %p606 = pneg %p392
        $region74: #{tpu_custom_call.1} parent=11 // pred_check_branch
          %608 = sbr.rel (%p606) target = $region76
        $region75: #{tpu_custom_call.1} parent=11 // pred_region
          _
        $region76: #{tpu_custom_call.1} parent=11 // pred_fallthru
          _
        // Predicated region
        $region77: #{tpu_custom_call.1} parent=11 // pred_check
          %p609 = pneg %p413
        $region78: #{tpu_custom_call.1} parent=11 // pred_check_branch
          %611 = sbr.rel (%p609) target = $region80
        $region79: #{tpu_custom_call.1} parent=11 // pred_region
          _
        $region80: #{tpu_custom_call.1} parent=11 // pred_fallthru
          _
        // Predicated region
        $region81: #{tpu_custom_call.1} parent=11 // pred_check
          %p612 = pneg %p434
        $region82: #{tpu_custom_call.1} parent=11 // pred_check_branch
          %614 = sbr.rel (%p612) target = $region84
        $region83: #{tpu_custom_call.1} parent=11 // pred_region
          _
        $region84: #{tpu_custom_call.1} parent=11 // pred_fallthru
          _
      $region12: #{tpu_custom_call.1} parent=5 // pred_fallthru
        _
      %p615 = scmp.lt.s32.totalorder %s30, 2
      // Predicated region
      $region85: #{tpu_custom_call.1} parent=5 // pred_check
        %p616 = pneg %p615
      $region86: #{tpu_custom_call.1} parent=5 // pred_check_branch
        %618 = sbr.rel (%p616) target = $region88
      $region87: #{tpu_custom_call.1} parent=5 // pred_region
        // Predicated region
        $region89: #{tpu_custom_call.1} parent=87 // pred_check
          %p619 = pneg %p50
        $region90: #{tpu_custom_call.1} parent=87 // pred_check_branch
          %621 = sbr.rel (%p619) target = $region92
        $region91: #{tpu_custom_call.1} parent=87 // pred_region
          %p622 = scmp.lt.s32.totalorder %s30, 1
          %s623 = scalar_select %p622, %s30, 1
          %s624 = smul.addr %s623, 8
          %s625 = scalar_lea.vmem %s0, %s624
        $region92: #{tpu_custom_call.1} parent=87 // pred_fallthru
          _
      $region88: #{tpu_custom_call.1} parent=5 // pred_fallthru
        _
      %p626 = scmp.le.s32.totalorder 1, %s30
      %p627 = scmp.lt.s32.totalorder %s30, 3
      %p628 = pnand %p626, %p627
      %p629 = pneg %p628
      // Predicated region
      $region93: #{tpu_custom_call.1} parent=5 // pred_check
        _
      $region94: #{tpu_custom_call.1} parent=5 // pred_check_branch
        %631 = sbr.rel (%p628) target = $region96
      $region95: #{tpu_custom_call.1} parent=5 // pred_region
        %s632 = ssub.s32 %s30, 1
        // Predicated region
        $region97: #{tpu_custom_call.1} parent=95 // pred_check
          %p633 = pneg %p77
        $region98: #{tpu_custom_call.1} parent=95 // pred_check_branch
          %635 = sbr.rel (%p633) target = $region100
        $region99: #{tpu_custom_call.1} parent=95 // pred_region
          %636 = dma.done [#allocation3], 16
        $region100: #{tpu_custom_call.1} parent=95 // pred_fallthru
          _
        // Predicated region
        $region101: #{tpu_custom_call.1} parent=95 // pred_check
          %p637 = pneg %p98
        $region102: #{tpu_custom_call.1} parent=95 // pred_check_branch
          %639 = sbr.rel (%p637) target = $region104
        $region103: #{tpu_custom_call.1} parent=95 // pred_region
          %640 = dma.done [#allocation5], 16
        $region104: #{tpu_custom_call.1} parent=95 // pred_fallthru
          _
        // Predicated region
        $region105: #{tpu_custom_call.1} parent=95 // pred_check
          %p641 = pneg %p140
        $region106: #{tpu_custom_call.1} parent=95 // pred_check_branch
          %643 = sbr.rel (%p641) target = $region108
        $region107: #{tpu_custom_call.1} parent=95 // pred_region
          %644 = dma.done [#allocation5], 32
        $region108: #{tpu_custom_call.1} parent=95 // pred_fallthru
          _
        // Predicated region
        $region109: #{tpu_custom_call.1} parent=95 // pred_check
          %p645 = pneg %p161
        $region110: #{tpu_custom_call.1} parent=95 // pred_check_branch
          %647 = sbr.rel (%p645) target = $region112
        $region111: #{tpu_custom_call.1} parent=95 // pred_region
          %648 = dma.done [#allocation8], 32
        $region112: #{tpu_custom_call.1} parent=95 // pred_fallthru
          _
        // Predicated region
        $region113: #{tpu_custom_call.1} parent=95 // pred_check
          %p649 = pneg %p203
        $region114: #{tpu_custom_call.1} parent=95 // pred_check_branch
          %651 = sbr.rel (%p649) target = $region116
        $region115: #{tpu_custom_call.1} parent=95 // pred_region
          %652 = dma.done [#allocation8], 32
        $region116: #{tpu_custom_call.1} parent=95 // pred_fallthru
          _
        // Predicated region
        $region117: #{tpu_custom_call.1} parent=95 // pred_check
          %p653 = pneg %p245
        $region118: #{tpu_custom_call.1} parent=95 // pred_check_branch
          %655 = sbr.rel (%p653) target = $region120
        $region119: #{tpu_custom_call.1} parent=95 // pred_region
          %656 = dma.done [#allocation11], 32
        $region120: #{tpu_custom_call.1} parent=95 // pred_fallthru
          _
        // Predicated region
        $region121: #{tpu_custom_call.1} parent=95 // pred_check
          %p657 = pneg %p266
        $region122: #{tpu_custom_call.1} parent=95 // pred_check_branch
          %659 = sbr.rel (%p657) target = $region124
        $region123: #{tpu_custom_call.1} parent=95 // pred_region
          %660 = dma.done [#allocation11], 32
        $region124: #{tpu_custom_call.1} parent=95 // pred_fallthru
          _
        // Predicated region
        $region125: #{tpu_custom_call.1} parent=95 // pred_check
          %p661 = pneg %p287
        $region126: #{tpu_custom_call.1} parent=95 // pred_check_branch
          %663 = sbr.rel (%p661) target = $region128
        $region127: #{tpu_custom_call.1} parent=95 // pred_region
          %664 = dma.done [#allocation14], 32
        $region128: #{tpu_custom_call.1} parent=95 // pred_fallthru
          _
        // Predicated region
        $region129: #{tpu_custom_call.1} parent=95 // pred_check
          %p665 = pneg %p329
        $region130: #{tpu_custom_call.1} parent=95 // pred_check_branch
          %667 = sbr.rel (%p665) target = $region132
        $region131: #{tpu_custom_call.1} parent=95 // pred_region
          %668 = dma.done [#allocation14], 32
        $region132: #{tpu_custom_call.1} parent=95 // pred_fallthru
          _
        %p669 = scmp.lt.s32.totalorder %s35, 1
        %s670 = scalar_select %p669, %s35, 1
        %s671 = smul.addr %s670, 8
        %s672 = scalar_lea.vmem %s0, %s671
        %p673 = pneg %p56
        %p674 = pneg %p53
        %p675 = pneg %p77
        %p676 = pneg %p74
        %p677 = pneg %p98
        %p678 = pneg %p95
        %p679 = pneg %p119
        %p680 = pneg %p116
        %p681 = pneg %p140
        %p682 = pneg %p137
        %p683 = pneg %p161
        %p684 = pneg %p158
        %p685 = pneg %p182
        %p686 = pneg %p179
        %p687 = pneg %p203
        %p688 = pneg %p200
        %p689 = pneg %p224
        %p690 = pneg %p221
        %p691 = pneg %p245
        %p692 = pneg %p242
        %p693 = pneg %p266
        %p694 = pneg %p263
        %p695 = pneg %p287
        %p696 = pneg %p284
        %p697 = pneg %p308
        %p698 = pneg %p305
        %p699 = pneg %p329
        %p700 = pneg %p326
        %p701 = pneg %p350
        %p702 = pneg %p347
        %p703 = pneg %p371
        %p704 = pneg %p368
        %p705 = pneg %p392
        %p706 = pneg %p389
        %p707 = pneg %p413
        %p708 = pneg %p410
        %p709 = pneg %p434
        %p710 = pneg %p431
        %p711 = pneg %p460
        %p712 = pneg %p457
        %p713 = scmp.lt.s32.totalorder %s35, 1
        %s714 = scalar_select %p713, %s35, 1
        %s715 = smul.addr %s714, 4
        %s716 = scalar_lea.vmem %s19, %s715
        %p717 = scmp.lt.s32.totalorder %s35, 1
        %s718 = scalar_select %p717, %s35, 1
        %s719 = smul.addr %s718, 8
        %s720 = scalar_lea.vmem %s0, %s719
        %p721 = scmp.lt.s32.totalorder %s35, 1
        %s722 = scalar_select %p721, %s35, 1
        %s723 = smul.addr %s722, 4
        %s724 = scalar_lea.vmem %s19, %s723
        %v725 = vld [vmem:[%s720] sm:$0xff]
        %v726 = vld [vmem:[#allocation2] sm:$0x1]
        %728 = vset.pattern.permute.xlu0 0
        %729 = vperm.xlu0 %728, %v725
        %v730 = vpop.permute.xlu0 %729
        %v733 = vlaneseq
        %v734 = vshrl.u32 %v733, 7
        %v735 = vsub.s32 0, %v734
        %v736 = vrot.slane %v726, %v735
        %v738 = vmul.f32 %v730, %v736
        %v739 = vld [vmem:[#allocation4] sm:$0x1]
        %v741 = vlaneseq
        %v742 = vshrl.u32 %v741, 7
        %v743 = vsub.s32 0, %v742
        %v744 = vrot.slane %v739, %v743
        %v746 = vadd.f32 %v738, %v744
        %v747 = vld [vmem:[%s3] sm:$0xff]
        %v748 = vadd.f32 %v746, %v747
        %v749 = vld [vmem:[#allocation6] sm:$0x1]
        %v750 = vld [vmem:[#allocation7] sm:$0x1]
        %vm751 = vcmask 261120
        %v752 = vsel %vm751, %v748, 0.0
        %753 = vadd.xlane.f32.xlu0 %v752
        %v754 = vpop.xlane.xlu0 %753
        %v755 = vrcp.pop 32.0
        %v756 = vmul.f32 %v754, %v755
        %v757 = vsub.f32 %v748, %v756
        %v758 = vmul.f32 %v757, %v757
        %v759 = vsel %vm751, %v758, 0.0
        %760 = vadd.xlane.f32.xlu0 %v759
        %v761 = vpop.xlane.xlu0 %760
        %v762 = vmul.f32 %v761, %v755
        %v763 = vadd.f32 %v762, 1e-05
        %v764 = vrsqrt.pop %v763
        %v765 = vmul.f32 %v757, %v764
        %v767 = vlaneseq
        %v768 = vshrl.u32 %v767, 7
        %v769 = vsub.s32 0, %v768
        %v770 = vrot.slane %v749, %v769
        %v772 = vmul.f32 %v765, %v770
        %v774 = vlaneseq
        %v775 = vshrl.u32 %v774, 7
        %v776 = vsub.s32 0, %v775
        %v777 = vrot.slane %v750, %v776
        %v779 = vadd.f32 %v772, %v777
        %v780 = vld [vmem:[%s6] sm:$0xff]
        %v781 = vld [vmem:[%s6 + $0x8] sm:$0xff]
        %v782 = vld [vmem:[%s6 + $0x10] sm:$0xff]
        %v783 = vld [vmem:[%s6 + $0x18] sm:$0xff]
        %v784 = vld [vmem:[#allocation9] sm:$0x1]
        %v786 = vlaneseq
        %v787 = vshrl.u32 %v786, 7
        %v788 = vsub.s32 0, %v787
        %v789 = vrot.slane %v784, %v788
        %v792 = vsel %vm751, %v779, 0
        %794 = vmatprep.subr.mxu0 0.0
        %795 = vmatpush1.msra.mxu0 %v780
        %796 = vmatprep.subr.mxu0 0.0
        %797 = vmatpush1.msra.mxu0 %v781
        %798 = vmatprep.subr.mxu0 0.0
        %799 = vmatpush1.msra.mxu0 %v782
        %800 = vmatprep.subr.mxu0 0.0
        %801 = vmatpush1.msra.mxu0 %v783
        %802 = vmatprep.subr.mxu0 0.0
        %803 = vmatpush1.msra.mxu0 0.0
        %804 = vmatprep.subr.mxu0 0.0
        %805 = vmatpush1.msra.mxu0 0.0
        %806 = vmatprep.subr.mxu0 0.0
        %807 = vmatpush1.msra.mxu0 0.0
        %808 = vmatprep.subr.mxu0 0.0
        %809 = vmatpush1.msra.mxu0 0.0
        %810 = vmatprep.subr.mxu0 0.0
        %811 = vmatpush1.msra.mxu0 0.0
        %812 = vmatprep.subr.mxu0 0.0
        %813 = vmatpush1.msra.mxu0 0.0
        %814 = vmatprep.subr.mxu0 0.0
        %815 = vmatpush1.msra.mxu0 0.0
        %816 = vmatprep.subr.mxu0 0.0
        %817 = vmatpush1.msra.mxu0 0.0
        %818 = vmatprep.subr.mxu0 0.0
        %819 = vmatpush1.msra.mxu0 0.0
        %820 = vmatprep.subr.mxu0 0.0
        %821 = vmatpush1.msra.mxu0 0.0
        %822 = vmatprep.subr.mxu0 0.0
        %823 = vmatpush1.msra.mxu0 0.0
        %824 = vmatprep.subr.mxu0 0.0
        %825 = vmatpush1.msra.mxu0 0.0
        %826 = vmatprep.subr.mxu0 0.0
        %827 = vmatpush1.msra.mxu0 0.0
        %828 = vmatprep.subr.mxu0 0.0
        %829 = vmatpush1.msra.mxu0 0.0
        %830 = vmatprep.subr.mxu0 0.0
        %831 = vmatpush1.msra.mxu0 0.0
        %832 = vmatprep.subr.mxu0 0.0
        %833 = vmatpush1.msra.mxu0 0.0
        %834 = vmatprep.subr.mxu0 0.0
        %835 = vmatpush1.msra.mxu0 0.0
        %836 = vmatprep.subr.mxu0 0.0
        %837 = vmatpush1.msra.mxu0 0.0
        %838 = vmatprep.subr.mxu0 0.0
        %839 = vmatpush1.msra.mxu0 0.0
        %840 = vmatprep.subr.mxu0 0.0
        %841 = vmatpush1.msra.mxu0 0.0
        %842 = vmatprep.subr.mxu0 0.0
        %843 = vmatpush1.msra.mxu0 0.0
        %844 = vmatprep.subr.mxu0 0.0
        %845 = vmatpush1.msra.mxu0 0.0
        %846 = vmatprep.subr.mxu0 0.0
        %847 = vmatpush1.msra.mxu0 0.0
        %848 = vmatprep.subr.mxu0 0.0
        %849 = vmatpush1.msra.mxu0 0.0
        %850 = vmatprep.subr.mxu0 0.0
        %851 = vmatpush1.msra.mxu0 0.0
        %852 = vmatprep.subr.mxu0 0.0
        %853 = vmatpush1.msra.mxu0 0.0
        %854 = vmatprep.subr.mxu0 0.0
        %855 = vmatpush1.msra.mxu0 0.0
        %856 = vmatprep.subr.mxu0 0.0
        %857 = vmatpush1.msra.mxu0 0.0
        %858 = vmatprep.mubr.f32.mxu0 0.0
        %859 = vmatmul.mubr.f32.gmra.mrb[0].mxu0 %v792
        %v860 = vpop.f32.mrb[0].mxu0
        %v861 = vadd.f32 %v789, %v860
        %v862 = vpop.f32.mrb[0].mxu0
        %863 = vdwg.mxu0
        %865 = vrot.lane.b32.xlu0 %v861, 96
        %v866 = vpop.permute.xlu0 %865
        %vm867 = vcmask 64512
        %v868 = vsel %vm867, %v861, 0
        %v870 = vsel %vm867, %v866, 0
        %872 = vmatprep.subr.mxu0 0.0
        %873 = vmatpush1.xpose.msra.mxu0 %v870
        %874 = vmatprep.subr.mxu0 0.0
        %875 = vmatpush1.xpose.msra.mxu0 0.0
        %876 = vmatprep.subr.mxu0 0.0
        %877 = vmatpush1.xpose.msra.mxu0 0.0
        %878 = vmatprep.subr.mxu0 0.0
        %879 = vmatpush1.xpose.msra.mxu0 0.0
        %880 = vmatprep.subr.mxu0 0.0
        %881 = vmatpush1.xpose.msra.mxu0 0.0
        %882 = vmatprep.subr.mxu0 0.0
        %883 = vmatpush1.xpose.msra.mxu0 0.0
        %884 = vmatprep.subr.mxu0 0.0
        %885 = vmatpush1.xpose.msra.mxu0 0.0
        %886 = vmatprep.subr.mxu0 0.0
        %887 = vmatpush1.xpose.msra.mxu0 0.0
        %888 = vmatprep.subr.mxu0 0.0
        %889 = vmatpush1.xpose.msra.mxu0 0.0
        %890 = vmatprep.subr.mxu0 0.0
        %891 = vmatpush1.xpose.msra.mxu0 0.0
        %892 = vmatprep.subr.mxu0 0.0
        %893 = vmatpush1.xpose.msra.mxu0 0.0
        %894 = vmatprep.subr.mxu0 0.0
        %895 = vmatpush1.xpose.msra.mxu0 0.0
        %896 = vmatprep.subr.mxu0 0.0
        %897 = vmatpush1.xpose.msra.mxu0 0.0
        %898 = vmatprep.subr.mxu0 0.0
        %899 = vmatpush1.xpose.msra.mxu0 0.0
        %900 = vmatprep.subr.mxu0 0.0
        %901 = vmatpush1.xpose.msra.mxu0 0.0
        %902 = vmatprep.subr.mxu0 0.0
        %903 = vmatpush1.xpose.msra.mxu0 0.0
        %904 = vmatprep.subr.mxu0 0.0
        %905 = vmatpush1.xpose.msra.mxu0 0.0
        %906 = vmatprep.subr.mxu0 0.0
        %907 = vmatpush1.xpose.msra.mxu0 0.0
        %908 = vmatprep.subr.mxu0 0.0
        %909 = vmatpush1.xpose.msra.mxu0 0.0
        %910 = vmatprep.subr.mxu0 0.0
        %911 = vmatpush1.xpose.msra.mxu0 0.0
        %912 = vmatprep.subr.mxu0 0.0
        %913 = vmatpush1.xpose.msra.mxu0 0.0
        %914 = vmatprep.subr.mxu0 0.0
        %915 = vmatpush1.xpose.msra.mxu0 0.0
        %916 = vmatprep.subr.mxu0 0.0
        %917 = vmatpush1.xpose.msra.mxu0 0.0
        %918 = vmatprep.subr.mxu0 0.0
        %919 = vmatpush1.xpose.msra.mxu0 0.0
        %920 = vmatprep.subr.mxu0 0.0
        %921 = vmatpush1.xpose.msra.mxu0 0.0
        %922 = vmatprep.subr.mxu0 0.0
        %923 = vmatpush1.xpose.msra.mxu0 0.0
        %924 = vmatprep.subr.mxu0 0.0
        %925 = vmatpush1.xpose.msra.mxu0 0.0
        %926 = vmatprep.subr.mxu0 0.0
        %927 = vmatpush1.xpose.msra.mxu0 0.0
        %928 = vmatprep.subr.mxu0 0.0
        %929 = vmatpush1.xpose.msra.mxu0 0.0
        %930 = vmatprep.subr.mxu0 0.0
        %931 = vmatpush1.xpose.msra.mxu0 0.0
        %932 = vmatprep.subr.mxu0 0.0
        %933 = vmatpush1.xpose.msra.mxu0 0.0
        %934 = vmatprep.subr.mxu0 0.0
        %935 = vmatpush1.xpose.msra.mxu0 0.0
        %936 = vmatprep.mubr.f32.mxu0 0.0
        %937 = vmatmul.mubr.f32.gmra.mrb[0].mxu0 %v868
        %v938 = vpop.f32.mrb[0].mxu0
        %v939 = vadd.f32 0.0, %v938
        %v940 = vpop.f32.mrb[0].mxu0
        %941 = vdwg.mxu0
        %v942 = vmul.f32 %v939, 0.35355338
        %v943 = vsel %vm867, %v942, -inf
        %944 = vmax.xlane.f32.xlu0 %v943
        %v945 = vpop.xlane.xlu0 %944
        %v946 = vsub.f32 %v942, %v945
        %v947 = vmul.f32 %v946, 1.442695
        %v948 = vpow.pop %v947
        %v949 = vsel %vm867, %v948, 0.0
        %950 = vadd.xlane.f32.xlu0 %v949
        %v951 = vpop.xlane.xlu0 %950
        %v952 = vrcp.pop %v951
        %v953 = vmul.f32 %v948, %v952
        %954 = vrot.lane.b32.xlu0 %v861, 64
        %v955 = vpop.permute.xlu0 %954
        %v958 = vsel %vm867, %v953, 0
        %960 = vmatprep.subr.mxu0 0.0
        %961 = vmatpush1.msra.mxu0 %v955
        %962 = vmatprep.subr.mxu0 0.0
        %963 = vmatpush1.msra.mxu0 0.0
        %964 = vmatprep.subr.mxu0 0.0
        %965 = vmatpush1.msra.mxu0 0.0
        %966 = vmatprep.subr.mxu0 0.0
        %967 = vmatpush1.msra.mxu0 0.0
        %968 = vmatprep.subr.mxu0 0.0
        %969 = vmatpush1.msra.mxu0 0.0
        %970 = vmatprep.subr.mxu0 0.0
        %971 = vmatpush1.msra.mxu0 0.0
        %972 = vmatprep.subr.mxu0 0.0
        %973 = vmatpush1.msra.mxu0 0.0
        %974 = vmatprep.subr.mxu0 0.0
        %975 = vmatpush1.msra.mxu0 0.0
        %976 = vmatprep.subr.mxu0 0.0
        %977 = vmatpush1.msra.mxu0 0.0
        %978 = vmatprep.subr.mxu0 0.0
        %979 = vmatpush1.msra.mxu0 0.0
        %980 = vmatprep.subr.mxu0 0.0
        %981 = vmatpush1.msra.mxu0 0.0
        %982 = vmatprep.subr.mxu0 0.0
        %983 = vmatpush1.msra.mxu0 0.0
        %984 = vmatprep.subr.mxu0 0.0
        %985 = vmatpush1.msra.mxu0 0.0
        %986 = vmatprep.subr.mxu0 0.0
        %987 = vmatpush1.msra.mxu0 0.0
        %988 = vmatprep.subr.mxu0 0.0
        %989 = vmatpush1.msra.mxu0 0.0
        %990 = vmatprep.subr.mxu0 0.0
        %991 = vmatpush1.msra.mxu0 0.0
        %992 = vmatprep.subr.mxu0 0.0
        %993 = vmatpush1.msra.mxu0 0.0
        %994 = vmatprep.subr.mxu0 0.0
        %995 = vmatpush1.msra.mxu0 0.0
        %996 = vmatprep.subr.mxu0 0.0
        %997 = vmatpush1.msra.mxu0 0.0
        %998 = vmatprep.subr.mxu0 0.0
        %999 = vmatpush1.msra.mxu0 0.0
        %1000 = vmatprep.subr.mxu0 0.0
        %1001 = vmatpush1.msra.mxu0 0.0
        %1002 = vmatprep.subr.mxu0 0.0
        %1003 = vmatpush1.msra.mxu0 0.0
        %1004 = vmatprep.subr.mxu0 0.0
        %1005 = vmatpush1.msra.mxu0 0.0
        %1006 = vmatprep.subr.mxu0 0.0
        %1007 = vmatpush1.msra.mxu0 0.0
        %1008 = vmatprep.subr.mxu0 0.0
        %1009 = vmatpush1.msra.mxu0 0.0
        %1010 = vmatprep.subr.mxu0 0.0
        %1011 = vmatpush1.msra.mxu0 0.0
        %1012 = vmatprep.subr.mxu0 0.0
        %1013 = vmatpush1.msra.mxu0 0.0
        %1014 = vmatprep.subr.mxu0 0.0
        %1015 = vmatpush1.msra.mxu0 0.0
        %1016 = vmatprep.subr.mxu0 0.0
        %1017 = vmatpush1.msra.mxu0 0.0
        %1018 = vmatprep.subr.mxu0 0.0
        %1019 = vmatpush1.msra.mxu0 0.0
        %1020 = vmatprep.subr.mxu0 0.0
        %1021 = vmatpush1.msra.mxu0 0.0
        %1022 = vmatprep.subr.mxu0 0.0
        %1023 = vmatpush1.msra.mxu0 0.0
        %1024 = vmatprep.mubr.f32.mxu0 0.0
        %1025 = vmatmul.mubr.f32.gmra.mrb[0].mxu0 %v958
        %v1026 = vpop.f32.mrb[0].mxu0
        %v1027 = vadd.f32 0.0, %v1026
        %v1028 = vpop.f32.mrb[0].mxu0
        %1029 = vdwg.mxu0
        %v1030 = vld [vmem:[%s8] sm:$0xff]
        %1031 = vrot.lane.b32.xlu0 %v861, 120
        %v1032 = vpop.permute.xlu0 %1031
        %1033 = vrot.lane.b32.xlu0 %v861, 88
        %v1034 = vpop.permute.xlu0 %1033
        %v1035 = vsel %vm867, %v1032, 0
        %v1037 = vsel %vm867, %v1034, 0
        %1039 = vmatprep.subr.mxu0 0.0
        %1040 = vmatpush1.xpose.msra.mxu0 %v1037
        %1041 = vmatprep.subr.mxu0 0.0
        %1042 = vmatpush1.xpose.msra.mxu0 0.0
        %1043 = vmatprep.subr.mxu0 0.0
        %1044 = vmatpush1.xpose.msra.mxu0 0.0
        %1045 = vmatprep.subr.mxu0 0.0
        %1046 = vmatpush1.xpose.msra.mxu0 0.0
        %1047 = vmatprep.subr.mxu0 0.0
        %1048 = vmatpush1.xpose.msra.mxu0 0.0
        %1049 = vmatprep.subr.mxu0 0.0
        %1050 = vmatpush1.xpose.msra.mxu0 0.0
        %1051 = vmatprep.subr.mxu0 0.0
        %1052 = vmatpush1.xpose.msra.mxu0 0.0
        %1053 = vmatprep.subr.mxu0 0.0
        %1054 = vmatpush1.xpose.msra.mxu0 0.0
        %1055 = vmatprep.subr.mxu0 0.0
        %1056 = vmatpush1.xpose.msra.mxu0 0.0
        %1057 = vmatprep.subr.mxu0 0.0
        %1058 = vmatpush1.xpose.msra.mxu0 0.0
        %1059 = vmatprep.subr.mxu0 0.0
        %1060 = vmatpush1.xpose.msra.mxu0 0.0
        %1061 = vmatprep.subr.mxu0 0.0
        %1062 = vmatpush1.xpose.msra.mxu0 0.0
        %1063 = vmatprep.subr.mxu0 0.0
        %1064 = vmatpush1.xpose.msra.mxu0 0.0
        %1065 = vmatprep.subr.mxu0 0.0
        %1066 = vmatpush1.xpose.msra.mxu0 0.0
        %1067 = vmatprep.subr.mxu0 0.0
        %1068 = vmatpush1.xpose.msra.mxu0 0.0
        %1069 = vmatprep.subr.mxu0 0.0
        %1070 = vmatpush1.xpose.msra.mxu0 0.0
        %1071 = vmatprep.subr.mxu0 0.0
        %1072 = vmatpush1.xpose.msra.mxu0 0.0
        %1073 = vmatprep.subr.mxu0 0.0
        %1074 = vmatpush1.xpose.msra.mxu0 0.0
        %1075 = vmatprep.subr.mxu0 0.0
        %1076 = vmatpush1.xpose.msra.mxu0 0.0
        %1077 = vmatprep.subr.mxu0 0.0
        %1078 = vmatpush1.xpose.msra.mxu0 0.0
        %1079 = vmatprep.subr.mxu0 0.0
        %1080 = vmatpush1.xpose.msra.mxu0 0.0
        %1081 = vmatprep.subr.mxu0 0.0
        %1082 = vmatpush1.xpose.msra.mxu0 0.0
        %1083 = vmatprep.subr.mxu0 0.0
        %1084 = vmatpush1.xpose.msra.mxu0 0.0
        %1085 = vmatprep.subr.mxu0 0.0
        %1086 = vmatpush1.xpose.msra.mxu0 0.0
        %1087 = vmatprep.subr.mxu0 0.0
        %1088 = vmatpush1.xpose.msra.mxu0 0.0
        %1089 = vmatprep.subr.mxu0 0.0
        %1090 = vmatpush1.xpose.msra.mxu0 0.0
        %1091 = vmatprep.subr.mxu0 0.0
        %1092 = vmatpush1.xpose.msra.mxu0 0.0
        %1093 = vmatprep.subr.mxu0 0.0
        %1094 = vmatpush1.xpose.msra.mxu0 0.0
        %1095 = vmatprep.subr.mxu0 0.0
        %1096 = vmatpush1.xpose.msra.mxu0 0.0
        %1097 = vmatprep.subr.mxu0 0.0
        %1098 = vmatpush1.xpose.msra.mxu0 0.0
        %1099 = vmatprep.subr.mxu0 0.0
        %1100 = vmatpush1.xpose.msra.mxu0 0.0
        %1101 = vmatprep.subr.mxu0 0.0
        %1102 = vmatpush1.xpose.msra.mxu0 0.0
        %1103 = vmatprep.mubr.f32.mxu0 0.0
        %1104 = vmatmul.mubr.f32.gmra.mrb[0].mxu0 %v1035
        %v1105 = vpop.f32.mrb[0].mxu0
        %v1106 = vadd.f32 0.0, %v1105
        %v1107 = vpop.f32.mrb[0].mxu0
        %1108 = vdwg.mxu0
        %v1109 = vmul.f32 %v1106, 0.35355338
        %v1110 = vsel %vm867, %v1109, -inf
        %1111 = vmax.xlane.f32.xlu0 %v1110
        %v1112 = vpop.xlane.xlu0 %1111
        %v1113 = vsub.f32 %v1109, %v1112
        %v1114 = vmul.f32 %v1113, 1.442695
        %v1115 = vpow.pop %v1114
        %v1116 = vsel %vm867, %v1115, 0.0
        %1117 = vadd.xlane.f32.xlu0 %v1116
        %v1118 = vpop.xlane.xlu0 %1117
        %v1119 = vrcp.pop %v1118
        %v1120 = vmul.f32 %v1115, %v1119
        %1121 = vrot.lane.b32.xlu0 %v861, 56
        %v1122 = vpop.permute.xlu0 %1121
        %v1125 = vsel %vm867, %v1120, 0
        %1127 = vmatprep.subr.mxu0 0.0
        %1128 = vmatpush1.msra.mxu0 %v1122
        %1129 = vmatprep.subr.mxu0 0.0
        %1130 = vmatpush1.msra.mxu0 0.0
        %1131 = vmatprep.subr.mxu0 0.0
        %1132 = vmatpush1.msra.mxu0 0.0
        %1133 = vmatprep.subr.mxu0 0.0
        %1134 = vmatpush1.msra.mxu0 0.0
        %1135 = vmatprep.subr.mxu0 0.0
        %1136 = vmatpush1.msra.mxu0 0.0
        %1137 = vmatprep.subr.mxu0 0.0
        %1138 = vmatpush1.msra.mxu0 0.0
        %1139 = vmatprep.subr.mxu0 0.0
        %1140 = vmatpush1.msra.mxu0 0.0
        %1141 = vmatprep.subr.mxu0 0.0
        %1142 = vmatpush1.msra.mxu0 0.0
        %1143 = vmatprep.subr.mxu0 0.0
        %1144 = vmatpush1.msra.mxu0 0.0
        %1145 = vmatprep.subr.mxu0 0.0
        %1146 = vmatpush1.msra.mxu0 0.0
        %1147 = vmatprep.subr.mxu0 0.0
        %1148 = vmatpush1.msra.mxu0 0.0
        %1149 = vmatprep.subr.mxu0 0.0
        %1150 = vmatpush1.msra.mxu0 0.0
        %1151 = vmatprep.subr.mxu0 0.0
        %1152 = vmatpush1.msra.mxu0 0.0
        %1153 = vmatprep.subr.mxu0 0.0
        %1154 = vmatpush1.msra.mxu0 0.0
        %1155 = vmatprep.subr.mxu0 0.0
        %1156 = vmatpush1.msra.mxu0 0.0
        %1157 = vmatprep.subr.mxu0 0.0
        %1158 = vmatpush1.msra.mxu0 0.0
        %1159 = vmatprep.subr.mxu0 0.0
        %1160 = vmatpush1.msra.mxu0 0.0
        %1161 = vmatprep.subr.mxu0 0.0
        %1162 = vmatpush1.msra.mxu0 0.0
        %1163 = vmatprep.subr.mxu0 0.0
        %1164 = vmatpush1.msra.mxu0 0.0
        %1165 = vmatprep.subr.mxu0 0.0
        %1166 = vmatpush1.msra.mxu0 0.0
        %1167 = vmatprep.subr.mxu0 0.0
        %1168 = vmatpush1.msra.mxu0 0.0
        %1169 = vmatprep.subr.mxu0 0.0
        %1170 = vmatpush1.msra.mxu0 0.0
        %1171 = vmatprep.subr.mxu0 0.0
        %1172 = vmatpush1.msra.mxu0 0.0
        %1173 = vmatprep.subr.mxu0 0.0
        %1174 = vmatpush1.msra.mxu0 0.0
        %1175 = vmatprep.subr.mxu0 0.0
        %1176 = vmatpush1.msra.mxu0 0.0
        %1177 = vmatprep.subr.mxu0 0.0
        %1178 = vmatpush1.msra.mxu0 0.0
        %1179 = vmatprep.subr.mxu0 0.0
        %1180 = vmatpush1.msra.mxu0 0.0
        %1181 = vmatprep.subr.mxu0 0.0
        %1182 = vmatpush1.msra.mxu0 0.0
        %1183 = vmatprep.subr.mxu0 0.0
        %1184 = vmatpush1.msra.mxu0 0.0
        %1185 = vmatprep.subr.mxu0 0.0
        %1186 = vmatpush1.msra.mxu0 0.0
        %1187 = vmatprep.subr.mxu0 0.0
        %1188 = vmatpush1.msra.mxu0 0.0
        %1189 = vmatprep.subr.mxu0 0.0
        %1190 = vmatpush1.msra.mxu0 0.0
        %1191 = vmatprep.mubr.f32.mxu0 0.0
        %1192 = vmatmul.mubr.f32.gmra.mrb[0].mxu0 %v1125
        %v1193 = vpop.f32.mrb[0].mxu0
        %v1194 = vadd.f32 0.0, %v1193
        %v1195 = vpop.f32.mrb[0].mxu0
        %1196 = vdwg.mxu0
        %s1197 = scalar_lea.vmem %s8, 8
        %v1198 = vld [vmem:[%s1197] sm:$0xff]
        %v1200 = vsel %vm867, %v1194, 0
        %1202 = vmatprep.subr.mxu0 0.0
        %1203 = vmatpush1.msra.mxu0 %v1198
        %1204 = vmatprep.subr.mxu0 0.0
        %1205 = vmatpush1.msra.mxu0 0.0
        %1206 = vmatprep.subr.mxu0 0.0
        %1207 = vmatpush1.msra.mxu0 0.0
        %1208 = vmatprep.subr.mxu0 0.0
        %1209 = vmatpush1.msra.mxu0 0.0
        %1210 = vmatprep.subr.mxu0 0.0
        %1211 = vmatpush1.msra.mxu0 0.0
        %1212 = vmatprep.subr.mxu0 0.0
        %1213 = vmatpush1.msra.mxu0 0.0
        %1214 = vmatprep.subr.mxu0 0.0
        %1215 = vmatpush1.msra.mxu0 0.0
        %1216 = vmatprep.subr.mxu0 0.0
        %1217 = vmatpush1.msra.mxu0 0.0
        %1218 = vmatprep.subr.mxu0 0.0
        %1219 = vmatpush1.msra.mxu0 0.0
        %1220 = vmatprep.subr.mxu0 0.0
        %1221 = vmatpush1.msra.mxu0 0.0
        %1222 = vmatprep.subr.mxu0 0.0
        %1223 = vmatpush1.msra.mxu0 0.0
        %1224 = vmatprep.subr.mxu0 0.0
        %1225 = vmatpush1.msra.mxu0 0.0
        %1226 = vmatprep.subr.mxu0 0.0
        %1227 = vmatpush1.msra.mxu0 0.0
        %1228 = vmatprep.subr.mxu0 0.0
        %1229 = vmatpush1.msra.mxu0 0.0
        %1230 = vmatprep.subr.mxu0 0.0
        %1231 = vmatpush1.msra.mxu0 0.0
        %1232 = vmatprep.subr.mxu0 0.0
        %1233 = vmatpush1.msra.mxu0 0.0
        %1234 = vmatprep.subr.mxu0 0.0
        %1235 = vmatpush1.msra.mxu0 0.0
        %1236 = vmatprep.subr.mxu0 0.0
        %1237 = vmatpush1.msra.mxu0 0.0
        %1238 = vmatprep.subr.mxu0 0.0
        %1239 = vmatpush1.msra.mxu0 0.0
        %1240 = vmatprep.subr.mxu0 0.0
        %1241 = vmatpush1.msra.mxu0 0.0
        %1242 = vmatprep.subr.mxu0 0.0
        %1243 = vmatpush1.msra.mxu0 0.0
        %1244 = vmatprep.subr.mxu0 0.0
        %1245 = vmatpush1.msra.mxu0 0.0
        %1246 = vmatprep.subr.mxu0 0.0
        %1247 = vmatpush1.msra.mxu0 0.0
        %1248 = vmatprep.subr.mxu0 0.0
        %1249 = vmatpush1.msra.mxu0 0.0
        %1250 = vmatprep.subr.mxu0 0.0
        %1251 = vmatpush1.msra.mxu0 0.0
        %1252 = vmatprep.subr.mxu0 0.0
        %1253 = vmatpush1.msra.mxu0 0.0
        %1254 = vmatprep.subr.mxu0 0.0
        %1255 = vmatpush1.msra.mxu0 0.0
        %1256 = vmatprep.subr.mxu0 0.0
        %1257 = vmatpush1.msra.mxu0 0.0
        %1258 = vmatprep.subr.mxu0 0.0
        %1259 = vmatpush1.msra.mxu0 0.0
        %1260 = vmatprep.subr.mxu0 0.0
        %1261 = vmatpush1.msra.mxu0 0.0
        %1262 = vmatprep.subr.mxu0 0.0
        %1263 = vmatpush1.msra.mxu0 0.0
        %1264 = vmatprep.subr.mxu0 0.0
        %1265 = vmatpush1.msra.mxu0 0.0
        %1266 = vmatprep.mubr.f32.mxu0 0.0
        %1267 = vmatmul.mubr.f32.gmra.mrb[0].mxu0 %v1200
        %v1268 = vpop.f32.mrb[0].mxu0
        %v1269 = vadd.f32 0.0, %v1268
        %v1270 = vpop.f32.mrb[0].mxu0
        %1271 = vdwg.mxu0
        %v1273 = vsel %vm867, %v1027, 0
        %1275 = vmatprep.subr.mxu0 0.0
        %1276 = vmatpush1.msra.mxu0 %v1030
        %1277 = vmatprep.subr.mxu0 0.0
        %1278 = vmatpush1.msra.mxu0 0.0
        %1279 = vmatprep.subr.mxu0 0.0
        %1280 = vmatpush1.msra.mxu0 0.0
        %1281 = vmatprep.subr.mxu0 0.0
        %1282 = vmatpush1.msra.mxu0 0.0
        %1283 = vmatprep.subr.mxu0 0.0
        %1284 = vmatpush1.msra.mxu0 0.0
        %1285 = vmatprep.subr.mxu0 0.0
        %1286 = vmatpush1.msra.mxu0 0.0
        %1287 = vmatprep.subr.mxu0 0.0
        %1288 = vmatpush1.msra.mxu0 0.0
        %1289 = vmatprep.subr.mxu0 0.0
        %1290 = vmatpush1.msra.mxu0 0.0
        %1291 = vmatprep.subr.mxu0 0.0
        %1292 = vmatpush1.msra.mxu0 0.0
        %1293 = vmatprep.subr.mxu0 0.0
        %1294 = vmatpush1.msra.mxu0 0.0
        %1295 = vmatprep.subr.mxu0 0.0
        %1296 = vmatpush1.msra.mxu0 0.0
        %1297 = vmatprep.subr.mxu0 0.0
        %1298 = vmatpush1.msra.mxu0 0.0
        %1299 = vmatprep.subr.mxu0 0.0
        %1300 = vmatpush1.msra.mxu0 0.0
        %1301 = vmatprep.subr.mxu0 0.0
        %1302 = vmatpush1.msra.mxu0 0.0
        %1303 = vmatprep.subr.mxu0 0.0
        %1304 = vmatpush1.msra.mxu0 0.0
        %1305 = vmatprep.subr.mxu0 0.0
        %1306 = vmatpush1.msra.mxu0 0.0
        %1307 = vmatprep.subr.mxu0 0.0
        %1308 = vmatpush1.msra.mxu0 0.0
        %1309 = vmatprep.subr.mxu0 0.0
        %1310 = vmatpush1.msra.mxu0 0.0
        %1311 = vmatprep.subr.mxu0 0.0
        %1312 = vmatpush1.msra.mxu0 0.0
        %1313 = vmatprep.subr.mxu0 0.0
        %1314 = vmatpush1.msra.mxu0 0.0
        %1315 = vmatprep.subr.mxu0 0.0
        %1316 = vmatpush1.msra.mxu0 0.0
        %1317 = vmatprep.subr.mxu0 0.0
        %1318 = vmatpush1.msra.mxu0 0.0
        %1319 = vmatprep.subr.mxu0 0.0
        %1320 = vmatpush1.msra.mxu0 0.0
        %1321 = vmatprep.subr.mxu0 0.0
        %1322 = vmatpush1.msra.mxu0 0.0
        %1323 = vmatprep.subr.mxu0 0.0
        %1324 = vmatpush1.msra.mxu0 0.0
        %1325 = vmatprep.subr.mxu0 0.0
        %1326 = vmatpush1.msra.mxu0 0.0
        %1327 = vmatprep.subr.mxu0 0.0
        %1328 = vmatpush1.msra.mxu0 0.0
        %1329 = vmatprep.subr.mxu0 0.0
        %1330 = vmatpush1.msra.mxu0 0.0
        %1331 = vmatprep.subr.mxu0 0.0
        %1332 = vmatpush1.msra.mxu0 0.0
        %1333 = vmatprep.subr.mxu0 0.0
        %1334 = vmatpush1.msra.mxu0 0.0
        %1335 = vmatprep.subr.mxu0 0.0
        %1336 = vmatpush1.msra.mxu0 0.0
        %1337 = vmatprep.subr.mxu0 0.0
        %1338 = vmatpush1.msra.mxu0 0.0
        %1339 = vmatprep.mubr.f32.mxu0 0.0
        %1340 = vmatmul.mubr.f32.gmra.mrb[0].mxu0 %v1273
        %v1341 = vpop.f32.mrb[0].mxu0
        %v1342 = vadd.f32 %v1269, %v1341
        %v1343 = vpop.f32.mrb[0].mxu0
        %1344 = vdwg.mxu0
        %1345 = vrot.lane.b32.xlu0 %v861, 112
        %v1346 = vpop.permute.xlu0 %1345
        %1347 = vrot.lane.b32.xlu0 %v861, 80
        %v1348 = vpop.permute.xlu0 %1347
        %v1349 = vsel %vm867, %v1346, 0
        %v1351 = vsel %vm867, %v1348, 0
        %1353 = vmatprep.subr.mxu0 0.0
        %1354 = vmatpush1.xpose.msra.mxu0 %v1351
        %1355 = vmatprep.subr.mxu0 0.0
        %1356 = vmatpush1.xpose.msra.mxu0 0.0
        %1357 = vmatprep.subr.mxu0 0.0
        %1358 = vmatpush1.xpose.msra.mxu0 0.0
        %1359 = vmatprep.subr.mxu0 0.0
        %1360 = vmatpush1.xpose.msra.mxu0 0.0
        %1361 = vmatprep.subr.mxu0 0.0
        %1362 = vmatpush1.xpose.msra.mxu0 0.0
        %1363 = vmatprep.subr.mxu0 0.0
        %1364 = vmatpush1.xpose.msra.mxu0 0.0
        %1365 = vmatprep.subr.mxu0 0.0
        %1366 = vmatpush1.xpose.msra.mxu0 0.0
        %1367 = vmatprep.subr.mxu0 0.0
        %1368 = vmatpush1.xpose.msra.mxu0 0.0
        %1369 = vmatprep.subr.mxu0 0.0
        %1370 = vmatpush1.xpose.msra.mxu0 0.0
        %1371 = vmatprep.subr.mxu0 0.0
        %1372 = vmatpush1.xpose.msra.mxu0 0.0
        %1373 = vmatprep.subr.mxu0 0.0
        %1374 = vmatpush1.xpose.msra.mxu0 0.0
        %1375 = vmatprep.subr.mxu0 0.0
        %1376 = vmatpush1.xpose.msra.mxu0 0.0
        %1377 = vmatprep.subr.mxu0 0.0
        %1378 = vmatpush1.xpose.msra.mxu0 0.0
        %1379 = vmatprep.subr.mxu0 0.0
        %1380 = vmatpush1.xpose.msra.mxu0 0.0
        %1381 = vmatprep.subr.mxu0 0.0
        %1382 = vmatpush1.xpose.msra.mxu0 0.0
        %1383 = vmatprep.subr.mxu0 0.0
        %1384 = vmatpush1.xpose.msra.mxu0 0.0
        %1385 = vmatprep.subr.mxu0 0.0
        %1386 = vmatpush1.xpose.msra.mxu0 0.0
        %1387 = vmatprep.subr.mxu0 0.0
        %1388 = vmatpush1.xpose.msra.mxu0 0.0
        %1389 = vmatprep.subr.mxu0 0.0
        %1390 = vmatpush1.xpose.msra.mxu0 0.0
        %1391 = vmatprep.subr.mxu0 0.0
        %1392 = vmatpush1.xpose.msra.mxu0 0.0
        %1393 = vmatprep.subr.mxu0 0.0
        %1394 = vmatpush1.xpose.msra.mxu0 0.0
        %1395 = vmatprep.subr.mxu0 0.0
        %1396 = vmatpush1.xpose.msra.mxu0 0.0
        %1397 = vmatprep.subr.mxu0 0.0
        %1398 = vmatpush1.xpose.msra.mxu0 0.0
        %1399 = vmatprep.subr.mxu0 0.0
        %1400 = vmatpush1.xpose.msra.mxu0 0.0
        %1401 = vmatprep.subr.mxu0 0.0
        %1402 = vmatpush1.xpose.msra.mxu0 0.0
        %1403 = vmatprep.subr.mxu0 0.0
        %1404 = vmatpush1.xpose.msra.mxu0 0.0
        %1405 = vmatprep.subr.mxu0 0.0
        %1406 = vmatpush1.xpose.msra.mxu0 0.0
        %1407 = vmatprep.subr.mxu0 0.0
        %1408 = vmatpush1.xpose.msra.mxu0 0.0
        %1409 = vmatprep.subr.mxu0 0.0
        %1410 = vmatpush1.xpose.msra.mxu0 0.0
        %1411 = vmatprep.subr.mxu0 0.0
        %1412 = vmatpush1.xpose.msra.mxu0 0.0
        %1413 = vmatprep.subr.mxu0 0.0
        %1414 = vmatpush1.xpose.msra.mxu0 0.0
        %1415 = vmatprep.subr.mxu0 0.0
        %1416 = vmatpush1.xpose.msra.mxu0 0.0
        %1417 = vmatprep.mubr.f32.mxu0 0.0
        %1418 = vmatmul.mubr.f32.gmra.mrb[0].mxu0 %v1349
        %v1419 = vpop.f32.mrb[0].mxu0
        %v1420 = vadd.f32 0.0, %v1419
        %v1421 = vpop.f32.mrb[0].mxu0
        %1422 = vdwg.mxu0
        %v1423 = vmul.f32 %v1420, 0.35355338
        %v1424 = vsel %vm867, %v1423, -inf
        %1425 = vmax.xlane.f32.xlu0 %v1424
        %v1426 = vpop.xlane.xlu0 %1425
        %v1427 = vsub.f32 %v1423, %v1426
        %v1428 = vmul.f32 %v1427, 1.442695
        %v1429 = vpow.pop %v1428
        %v1430 = vsel %vm867, %v1429, 0.0
        %1431 = vadd.xlane.f32.xlu0 %v1430
        %v1432 = vpop.xlane.xlu0 %1431
        %v1433 = vrcp.pop %v1432
        %v1434 = vmul.f32 %v1429, %v1433
        %1435 = vrot.lane.b32.xlu0 %v861, 48
        %v1436 = vpop.permute.xlu0 %1435
        %v1439 = vsel %vm867, %v1434, 0
        %1441 = vmatprep.subr.mxu0 0.0
        %1442 = vmatpush1.msra.mxu0 %v1436
        %1443 = vmatprep.subr.mxu0 0.0
        %1444 = vmatpush1.msra.mxu0 0.0
        %1445 = vmatprep.subr.mxu0 0.0
        %1446 = vmatpush1.msra.mxu0 0.0
        %1447 = vmatprep.subr.mxu0 0.0
        %1448 = vmatpush1.msra.mxu0 0.0
        %1449 = vmatprep.subr.mxu0 0.0
        %1450 = vmatpush1.msra.mxu0 0.0
        %1451 = vmatprep.subr.mxu0 0.0
        %1452 = vmatpush1.msra.mxu0 0.0
        %1453 = vmatprep.subr.mxu0 0.0
        %1454 = vmatpush1.msra.mxu0 0.0
        %1455 = vmatprep.subr.mxu0 0.0
        %1456 = vmatpush1.msra.mxu0 0.0
        %1457 = vmatprep.subr.mxu0 0.0
        %1458 = vmatpush1.msra.mxu0 0.0
        %1459 = vmatprep.subr.mxu0 0.0
        %1460 = vmatpush1.msra.mxu0 0.0
        %1461 = vmatprep.subr.mxu0 0.0
        %1462 = vmatpush1.msra.mxu0 0.0
        %1463 = vmatprep.subr.mxu0 0.0
        %1464 = vmatpush1.msra.mxu0 0.0
        %1465 = vmatprep.subr.mxu0 0.0
        %1466 = vmatpush1.msra.mxu0 0.0
        %1467 = vmatprep.subr.mxu0 0.0
        %1468 = vmatpush1.msra.mxu0 0.0
        %1469 = vmatprep.subr.mxu0 0.0
        %1470 = vmatpush1.msra.mxu0 0.0
        %1471 = vmatprep.subr.mxu0 0.0
        %1472 = vmatpush1.msra.mxu0 0.0
        %1473 = vmatprep.subr.mxu0 0.0
        %1474 = vmatpush1.msra.mxu0 0.0
        %1475 = vmatprep.subr.mxu0 0.0
        %1476 = vmatpush1.msra.mxu0 0.0
        %1477 = vmatprep.subr.mxu0 0.0
        %1478 = vmatpush1.msra.mxu0 0.0
        %1479 = vmatprep.subr.mxu0 0.0
        %1480 = vmatpush1.msra.mxu0 0.0
        %1481 = vmatprep.subr.mxu0 0.0
        %1482 = vmatpush1.msra.mxu0 0.0
        %1483 = vmatprep.subr.mxu0 0.0
        %1484 = vmatpush1.msra.mxu0 0.0
        %1485 = vmatprep.subr.mxu0 0.0
        %1486 = vmatpush1.msra.mxu0 0.0
        %1487 = vmatprep.subr.mxu0 0.0
        %1488 = vmatpush1.msra.mxu0 0.0
        %1489 = vmatprep.subr.mxu0 0.0
        %1490 = vmatpush1.msra.mxu0 0.0
        %1491 = vmatprep.subr.mxu0 0.0
        %1492 = vmatpush1.msra.mxu0 0.0
        %1493 = vmatprep.subr.mxu0 0.0
        %1494 = vmatpush1.msra.mxu0 0.0
        %1495 = vmatprep.subr.mxu0 0.0
        %1496 = vmatpush1.msra.mxu0 0.0
        %1497 = vmatprep.subr.mxu0 0.0
        %1498 = vmatpush1.msra.mxu0 0.0
        %1499 = vmatprep.subr.mxu0 0.0
        %1500 = vmatpush1.msra.mxu0 0.0
        %1501 = vmatprep.subr.mxu0 0.0
        %1502 = vmatpush1.msra.mxu0 0.0
        %1503 = vmatprep.subr.mxu0 0.0
        %1504 = vmatpush1.msra.mxu0 0.0
        %1505 = vmatprep.mubr.f32.mxu0 0.0
        %1506 = vmatmul.mubr.f32.gmra.mrb[0].mxu0 %v1439
        %v1507 = vpop.f32.mrb[0].mxu0
        %v1508 = vadd.f32 0.0, %v1507
        %v1509 = vpop.f32.mrb[0].mxu0
        %1510 = vdwg.mxu0
        %s1511 = scalar_lea.vmem %s8, 16
        %v1512 = vld [vmem:[%s1511] sm:$0xff]
        %v1514 = vsel %vm867, %v1508, 0
        %1516 = vmatprep.subr.mxu0 0.0
        %1517 = vmatpush1.msra.mxu0 %v1512
        %1518 = vmatprep.subr.mxu0 0.0
        %1519 = vmatpush1.msra.mxu0 0.0
        %1520 = vmatprep.subr.mxu0 0.0
        %1521 = vmatpush1.msra.mxu0 0.0
        %1522 = vmatprep.subr.mxu0 0.0
        %1523 = vmatpush1.msra.mxu0 0.0
        %1524 = vmatprep.subr.mxu0 0.0
        %1525 = vmatpush1.msra.mxu0 0.0
        %1526 = vmatprep.subr.mxu0 0.0
        %1527 = vmatpush1.msra.mxu0 0.0
        %1528 = vmatprep.subr.mxu0 0.0
        %1529 = vmatpush1.msra.mxu0 0.0
        %1530 = vmatprep.subr.mxu0 0.0
        %1531 = vmatpush1.msra.mxu0 0.0
        %1532 = vmatprep.subr.mxu0 0.0
        %1533 = vmatpush1.msra.mxu0 0.0
        %1534 = vmatprep.subr.mxu0 0.0
        %1535 = vmatpush1.msra.mxu0 0.0
        %1536 = vmatprep.subr.mxu0 0.0
        %1537 = vmatpush1.msra.mxu0 0.0
        %1538 = vmatprep.subr.mxu0 0.0
        %1539 = vmatpush1.msra.mxu0 0.0
        %1540 = vmatprep.subr.mxu0 0.0
        %1541 = vmatpush1.msra.mxu0 0.0
        %1542 = vmatprep.subr.mxu0 0.0
        %1543 = vmatpush1.msra.mxu0 0.0
        %1544 = vmatprep.subr.mxu0 0.0
        %1545 = vmatpush1.msra.mxu0 0.0
        %1546 = vmatprep.subr.mxu0 0.0
        %1547 = vmatpush1.msra.mxu0 0.0
        %1548 = vmatprep.subr.mxu0 0.0
        %1549 = vmatpush1.msra.mxu0 0.0
        %1550 = vmatprep.subr.mxu0 0.0
        %1551 = vmatpush1.msra.mxu0 0.0
        %1552 = vmatprep.subr.mxu0 0.0
        %1553 = vmatpush1.msra.mxu0 0.0
        %1554 = vmatprep.subr.mxu0 0.0
        %1555 = vmatpush1.msra.mxu0 0.0
        %1556 = vmatprep.subr.mxu0 0.0
        %1557 = vmatpush1.msra.mxu0 0.0
        %1558 = vmatprep.subr.mxu0 0.0
        %1559 = vmatpush1.msra.mxu0 0.0
        %1560 = vmatprep.subr.mxu0 0.0
        %1561 = vmatpush1.msra.mxu0 0.0
        %1562 = vmatprep.subr.mxu0 0.0
        %1563 = vmatpush1.msra.mxu0 0.0
        %1564 = vmatprep.subr.mxu0 0.0
        %1565 = vmatpush1.msra.mxu0 0.0
        %1566 = vmatprep.subr.mxu0 0.0
        %1567 = vmatpush1.msra.mxu0 0.0
        %1568 = vmatprep.subr.mxu0 0.0
        %1569 = vmatpush1.msra.mxu0 0.0
        %1570 = vmatprep.subr.mxu0 0.0
        %1571 = vmatpush1.msra.mxu0 0.0
        %1572 = vmatprep.subr.mxu0 0.0
        %1573 = vmatpush1.msra.mxu0 0.0
        %1574 = vmatprep.subr.mxu0 0.0
        %1575 = vmatpush1.msra.mxu0 0.0
        %1576 = vmatprep.subr.mxu0 0.0
        %1577 = vmatpush1.msra.mxu0 0.0
        %1578 = vmatprep.subr.mxu0 0.0
        %1579 = vmatpush1.msra.mxu0 0.0
        %1580 = vmatprep.mubr.f32.mxu0 0.0
        %1581 = vmatmul.mubr.f32.gmra.mrb[0].mxu0 %v1514
        %v1582 = vpop.f32.mrb[0].mxu0
        %v1583 = vadd.f32 0.0, %v1582
        %v1584 = vpop.f32.mrb[0].mxu0
        %1585 = vdwg.mxu0
        %v1586 = vadd.f32 %v1342, %v1583
        %1587 = vrot.lane.b32.xlu0 %v861, 104
        %v1588 = vpop.permute.xlu0 %1587
        %1589 = vrot.lane.b32.xlu0 %v861, 72
        %v1590 = vpop.permute.xlu0 %1589
        %v1591 = vsel %vm867, %v1588, 0
        %v1593 = vsel %vm867, %v1590, 0
        %1595 = vmatprep.subr.mxu0 0.0
        %1596 = vmatpush1.xpose.msra.mxu0 %v1593
        %1597 = vmatprep.subr.mxu0 0.0
        %1598 = vmatpush1.xpose.msra.mxu0 0.0
        %1599 = vmatprep.subr.mxu0 0.0
        %1600 = vmatpush1.xpose.msra.mxu0 0.0
        %1601 = vmatprep.subr.mxu0 0.0
        %1602 = vmatpush1.xpose.msra.mxu0 0.0
        %1603 = vmatprep.subr.mxu0 0.0
        %1604 = vmatpush1.xpose.msra.mxu0 0.0
        %1605 = vmatprep.subr.mxu0 0.0
        %1606 = vmatpush1.xpose.msra.mxu0 0.0
        %1607 = vmatprep.subr.mxu0 0.0
        %1608 = vmatpush1.xpose.msra.mxu0 0.0
        %1609 = vmatprep.subr.mxu0 0.0
        %1610 = vmatpush1.xpose.msra.mxu0 0.0
        %1611 = vmatprep.subr.mxu0 0.0
        %1612 = vmatpush1.xpose.msra.mxu0 0.0
        %1613 = vmatprep.subr.mxu0 0.0
        %1614 = vmatpush1.xpose.msra.mxu0 0.0
        %1615 = vmatprep.subr.mxu0 0.0
        %1616 = vmatpush1.xpose.msra.mxu0 0.0
        %1617 = vmatprep.subr.mxu0 0.0
        %1618 = vmatpush1.xpose.msra.mxu0 0.0
        %1619 = vmatprep.subr.mxu0 0.0
        %1620 = vmatpush1.xpose.msra.mxu0 0.0
        %1621 = vmatprep.subr.mxu0 0.0
        %1622 = vmatpush1.xpose.msra.mxu0 0.0
        %1623 = vmatprep.subr.mxu0 0.0
        %1624 = vmatpush1.xpose.msra.mxu0 0.0
        %1625 = vmatprep.subr.mxu0 0.0
        %1626 = vmatpush1.xpose.msra.mxu0 0.0
        %1627 = vmatprep.subr.mxu0 0.0
        %1628 = vmatpush1.xpose.msra.mxu0 0.0
        %1629 = vmatprep.subr.mxu0 0.0
        %1630 = vmatpush1.xpose.msra.mxu0 0.0
        %1631 = vmatprep.subr.mxu0 0.0
        %1632 = vmatpush1.xpose.msra.mxu0 0.0
        %1633 = vmatprep.subr.mxu0 0.0
        %1634 = vmatpush1.xpose.msra.mxu0 0.0
        %1635 = vmatprep.subr.mxu0 0.0
        %1636 = vmatpush1.xpose.msra.mxu0 0.0
        %1637 = vmatprep.subr.mxu0 0.0
        %1638 = vmatpush1.xpose.msra.mxu0 0.0
        %1639 = vmatprep.subr.mxu0 0.0
        %1640 = vmatpush1.xpose.msra.mxu0 0.0
        %1641 = vmatprep.subr.mxu0 0.0
        %1642 = vmatpush1.xpose.msra.mxu0 0.0
        %1643 = vmatprep.subr.mxu0 0.0
        %1644 = vmatpush1.xpose.msra.mxu0 0.0
        %1645 = vmatprep.subr.mxu0 0.0
        %1646 = vmatpush1.xpose.msra.mxu0 0.0
        %1647 = vmatprep.subr.mxu0 0.0
        %1648 = vmatpush1.xpose.msra.mxu0 0.0
        %1649 = vmatprep.subr.mxu0 0.0
        %1650 = vmatpush1.xpose.msra.mxu0 0.0
        %1651 = vmatprep.subr.mxu0 0.0
        %1652 = vmatpush1.xpose.msra.mxu0 0.0
        %1653 = vmatprep.subr.mxu0 0.0
        %1654 = vmatpush1.xpose.msra.mxu0 0.0
        %1655 = vmatprep.subr.mxu0 0.0
        %1656 = vmatpush1.xpose.msra.mxu0 0.0
        %1657 = vmatprep.subr.mxu0 0.0
        %1658 = vmatpush1.xpose.msra.mxu0 0.0
        %1659 = vmatprep.mubr.f32.mxu0 0.0
        %1660 = vmatmul.mubr.f32.gmra.mrb[0].mxu0 %v1591
        %v1661 = vpop.f32.mrb[0].mxu0
        %v1662 = vadd.f32 0.0, %v1661
        %v1663 = vpop.f32.mrb[0].mxu0
        %1664 = vdwg.mxu0
        %v1665 = vmul.f32 %v1662, 0.35355338
        %v1666 = vsel %vm867, %v1665, -inf
        %1667 = vmax.xlane.f32.xlu0 %v1666
        %v1668 = vpop.xlane.xlu0 %1667
        %v1669 = vsub.f32 %v1665, %v1668
        %v1670 = vmul.f32 %v1669, 1.442695
        %v1671 = vpow.pop %v1670
        %v1672 = vsel %vm867, %v1671, 0.0
        %1673 = vadd.xlane.f32.xlu0 %v1672
        %v1674 = vpop.xlane.xlu0 %1673
        %v1675 = vrcp.pop %v1674
        %v1676 = vmul.f32 %v1671, %v1675
        %1677 = vrot.lane.b32.xlu0 %v861, 40
        %v1678 = vpop.permute.xlu0 %1677
        %v1681 = vsel %vm867, %v1676, 0
        %1683 = vmatprep.subr.mxu0 0.0
        %1684 = vmatpush1.msra.mxu0 %v1678
        %1685 = vmatprep.subr.mxu0 0.0
        %1686 = vmatpush1.msra.mxu0 0.0
        %1687 = vmatprep.subr.mxu0 0.0
        %1688 = vmatpush1.msra.mxu0 0.0
        %1689 = vmatprep.subr.mxu0 0.0
        %1690 = vmatpush1.msra.mxu0 0.0
        %1691 = vmatprep.subr.mxu0 0.0
        %1692 = vmatpush1.msra.mxu0 0.0
        %1693 = vmatprep.subr.mxu0 0.0
        %1694 = vmatpush1.msra.mxu0 0.0
        %1695 = vmatprep.subr.mxu0 0.0
        %1696 = vmatpush1.msra.mxu0 0.0
        %1697 = vmatprep.subr.mxu0 0.0
        %1698 = vmatpush1.msra.mxu0 0.0
        %1699 = vmatprep.subr.mxu0 0.0
        %1700 = vmatpush1.msra.mxu0 0.0
        %1701 = vmatprep.subr.mxu0 0.0
        %1702 = vmatpush1.msra.mxu0 0.0
        %1703 = vmatprep.subr.mxu0 0.0
        %1704 = vmatpush1.msra.mxu0 0.0
        %1705 = vmatprep.subr.mxu0 0.0
        %1706 = vmatpush1.msra.mxu0 0.0
        %1707 = vmatprep.subr.mxu0 0.0
        %1708 = vmatpush1.msra.mxu0 0.0
        %1709 = vmatprep.subr.mxu0 0.0
        %1710 = vmatpush1.msra.mxu0 0.0
        %1711 = vmatprep.subr.mxu0 0.0
        %1712 = vmatpush1.msra.mxu0 0.0
        %1713 = vmatprep.subr.mxu0 0.0
        %1714 = vmatpush1.msra.mxu0 0.0
        %1715 = vmatprep.subr.mxu0 0.0
        %1716 = vmatpush1.msra.mxu0 0.0
        %1717 = vmatprep.subr.mxu0 0.0
        %1718 = vmatpush1.msra.mxu0 0.0
        %1719 = vmatprep.subr.mxu0 0.0
        %1720 = vmatpush1.msra.mxu0 0.0
        %1721 = vmatprep.subr.mxu0 0.0
        %1722 = vmatpush1.msra.mxu0 0.0
        %1723 = vmatprep.subr.mxu0 0.0
        %1724 = vmatpush1.msra.mxu0 0.0
        %1725 = vmatprep.subr.mxu0 0.0
        %1726 = vmatpush1.msra.mxu0 0.0
        %1727 = vmatprep.subr.mxu0 0.0
        %1728 = vmatpush1.msra.mxu0 0.0
        %1729 = vmatprep.subr.mxu0 0.0
        %1730 = vmatpush1.msra.mxu0 0.0
        %1731 = vmatprep.subr.mxu0 0.0
        %1732 = vmatpush1.msra.mxu0 0.0
        %1733 = vmatprep.subr.mxu0 0.0
        %1734 = vmatpush1.msra.mxu0 0.0
        %1735 = vmatprep.subr.mxu0 0.0
        %1736 = vmatpush1.msra.mxu0 0.0
        %1737 = vmatprep.subr.mxu0 0.0
        %1738 = vmatpush1.msra.mxu0 0.0
        %1739 = vmatprep.subr.mxu0 0.0
        %1740 = vmatpush1.msra.mxu0 0.0
        %1741 = vmatprep.subr.mxu0 0.0
        %1742 = vmatpush1.msra.mxu0 0.0
        %1743 = vmatprep.subr.mxu0 0.0
        %1744 = vmatpush1.msra.mxu0 0.0
        %1745 = vmatprep.subr.mxu0 0.0
        %1746 = vmatpush1.msra.mxu0 0.0
        %1747 = vmatprep.mubr.f32.mxu0 0.0
        %1748 = vmatmul.mubr.f32.gmra.mrb[0].mxu0 %v1681
        %v1749 = vpop.f32.mrb[0].mxu0
        %v1750 = vadd.f32 0.0, %v1749
        %v1751 = vpop.f32.mrb[0].mxu0
        %1752 = vdwg.mxu0
        %s1753 = scalar_lea.vmem %s8, 24
        %v1754 = vld [vmem:[%s1753] sm:$0xff]
        %v1756 = vsel %vm867, %v1750, 0
        %1758 = vmatprep.subr.mxu0 0.0
        %1759 = vmatpush1.msra.mxu0 %v1754
        %1760 = vmatprep.subr.mxu0 0.0
        %1761 = vmatpush1.msra.mxu0 0.0
        %1762 = vmatprep.subr.mxu0 0.0
        %1763 = vmatpush1.msra.mxu0 0.0
        %1764 = vmatprep.subr.mxu0 0.0
        %1765 = vmatpush1.msra.mxu0 0.0
        %1766 = vmatprep.subr.mxu0 0.0
        %1767 = vmatpush1.msra.mxu0 0.0
        %1768 = vmatprep.subr.mxu0 0.0
        %1769 = vmatpush1.msra.mxu0 0.0
        %1770 = vmatprep.subr.mxu0 0.0
        %1771 = vmatpush1.msra.mxu0 0.0
        %1772 = vmatprep.subr.mxu0 0.0
        %1773 = vmatpush1.msra.mxu0 0.0
        %1774 = vmatprep.subr.mxu0 0.0
        %1775 = vmatpush1.msra.mxu0 0.0
        %1776 = vmatprep.subr.mxu0 0.0
        %1777 = vmatpush1.msra.mxu0 0.0
        %1778 = vmatprep.subr.mxu0 0.0
        %1779 = vmatpush1.msra.mxu0 0.0
        %1780 = vmatprep.subr.mxu0 0.0
        %1781 = vmatpush1.msra.mxu0 0.0
        %1782 = vmatprep.subr.mxu0 0.0
        %1783 = vmatpush1.msra.mxu0 0.0
        %1784 = vmatprep.subr.mxu0 0.0
        %1785 = vmatpush1.msra.mxu0 0.0
        %1786 = vmatprep.subr.mxu0 0.0
        %1787 = vmatpush1.msra.mxu0 0.0
        %1788 = vmatprep.subr.mxu0 0.0
        %1789 = vmatpush1.msra.mxu0 0.0
        %1790 = vmatprep.subr.mxu0 0.0
        %1791 = vmatpush1.msra.mxu0 0.0
        %1792 = vmatprep.subr.mxu0 0.0
        %1793 = vmatpush1.msra.mxu0 0.0
        %1794 = vmatprep.subr.mxu0 0.0
        %1795 = vmatpush1.msra.mxu0 0.0
        %1796 = vmatprep.subr.mxu0 0.0
        %1797 = vmatpush1.msra.mxu0 0.0
        %1798 = vmatprep.subr.mxu0 0.0
        %1799 = vmatpush1.msra.mxu0 0.0
        %1800 = vmatprep.subr.mxu0 0.0
        %1801 = vmatpush1.msra.mxu0 0.0
        %1802 = vmatprep.subr.mxu0 0.0
        %1803 = vmatpush1.msra.mxu0 0.0
        %1804 = vmatprep.subr.mxu0 0.0
        %1805 = vmatpush1.msra.mxu0 0.0
        %1806 = vmatprep.subr.mxu0 0.0
        %1807 = vmatpush1.msra.mxu0 0.0
        %1808 = vmatprep.subr.mxu0 0.0
        %1809 = vmatpush1.msra.mxu0 0.0
        %1810 = vmatprep.subr.mxu0 0.0
        %1811 = vmatpush1.msra.mxu0 0.0
        %1812 = vmatprep.subr.mxu0 0.0
        %1813 = vmatpush1.msra.mxu0 0.0
        %1814 = vmatprep.subr.mxu0 0.0
        %1815 = vmatpush1.msra.mxu0 0.0
        %1816 = vmatprep.subr.mxu0 0.0
        %1817 = vmatpush1.msra.mxu0 0.0
        %1818 = vmatprep.subr.mxu0 0.0
        %1819 = vmatpush1.msra.mxu0 0.0
        %1820 = vmatprep.subr.mxu0 0.0
        %1821 = vmatpush1.msra.mxu0 0.0
        %1822 = vmatprep.mubr.f32.mxu0 0.0
        %1823 = vmatmul.mubr.f32.gmra.mrb[0].mxu0 %v1756
        %v1824 = vpop.f32.mrb[0].mxu0
        %v1825 = vadd.f32 0.0, %v1824
        %v1826 = vpop.f32.mrb[0].mxu0
        %1827 = vdwg.mxu0
        %v1828 = vadd.f32 %v1586, %v1825
        %v1829 = vadd.f32 %v748, %v1828
        %v1830 = vld [vmem:[#allocation10] sm:$0x1]
        %v1832 = vlaneseq
        %v1833 = vshrl.u32 %v1832, 7
        %v1834 = vsub.s32 0, %v1833
        %v1835 = vrot.slane %v1830, %v1834
        %v1837 = vadd.f32 %v1829, %v1835
        %v1838 = vld [vmem:[#allocation12] sm:$0x1]
        %v1839 = vld [vmem:[#allocation13] sm:$0x1]
        %v1840 = vsel %vm751, %v1837, 0.0
        %1841 = vadd.xlane.f32.xlu0 %v1840
        %v1842 = vpop.xlane.xlu0 %1841
        %v1843 = vmul.f32 %v1842, %v755
        %v1844 = vsub.f32 %v1837, %v1843
        %v1845 = vmul.f32 %v1844, %v1844
        %v1846 = vsel %vm751, %v1845, 0.0
        %1847 = vadd.xlane.f32.xlu0 %v1846
        %v1848 = vpop.xlane.xlu0 %1847
        %v1849 = vmul.f32 %v1848, %v755
        %v1850 = vadd.f32 %v1849, 1e-05
        %v1851 = vrsqrt.pop %v1850
        %v1852 = vmul.f32 %v1844, %v1851
        %v1854 = vlaneseq
        %v1855 = vshrl.u32 %v1854, 7
        %v1856 = vsub.s32 0, %v1855
        %v1857 = vrot.slane %v1838, %v1856
        %v1859 = vmul.f32 %v1852, %v1857
        %v1861 = vlaneseq
        %v1862 = vshrl.u32 %v1861, 7
        %v1863 = vsub.s32 0, %v1862
        %v1864 = vrot.slane %v1839, %v1863
        %v1866 = vadd.f32 %v1859, %v1864
        %v1867 = vld [vmem:[%s12] sm:$0xff]
        %v1868 = vld [vmem:[%s12 + $0x8] sm:$0xff]
        %v1869 = vld [vmem:[%s12 + $0x10] sm:$0xff]
        %v1870 = vld [vmem:[%s12 + $0x18] sm:$0xff]
        %v1871 = vld [vmem:[#allocation15] sm:$0x1]
        %v1873 = vlaneseq
        %v1874 = vshrl.u32 %v1873, 7
        %v1875 = vsub.s32 0, %v1874
        %v1876 = vrot.slane %v1871, %v1875
        %v1879 = vsel %vm751, %v1866, 0
        %1881 = vmatprep.subr.mxu0 0.0
        %1882 = vmatpush1.msra.mxu0 %v1867
        %1883 = vmatprep.subr.mxu0 0.0
        %1884 = vmatpush1.msra.mxu0 %v1868
        %1885 = vmatprep.subr.mxu0 0.0
        %1886 = vmatpush1.msra.mxu0 %v1869
        %1887 = vmatprep.subr.mxu0 0.0
        %1888 = vmatpush1.msra.mxu0 %v1870
        %1889 = vmatprep.subr.mxu0 0.0
        %1890 = vmatpush1.msra.mxu0 0.0
        %1891 = vmatprep.subr.mxu0 0.0
        %1892 = vmatpush1.msra.mxu0 0.0
        %1893 = vmatprep.subr.mxu0 0.0
        %1894 = vmatpush1.msra.mxu0 0.0
        %1895 = vmatprep.subr.mxu0 0.0
        %1896 = vmatpush1.msra.mxu0 0.0
        %1897 = vmatprep.subr.mxu0 0.0
        %1898 = vmatpush1.msra.mxu0 0.0
        %1899 = vmatprep.subr.mxu0 0.0
        %1900 = vmatpush1.msra.mxu0 0.0
        %1901 = vmatprep.subr.mxu0 0.0
        %1902 = vmatpush1.msra.mxu0 0.0
        %1903 = vmatprep.subr.mxu0 0.0
        %1904 = vmatpush1.msra.mxu0 0.0
        %1905 = vmatprep.subr.mxu0 0.0
        %1906 = vmatpush1.msra.mxu0 0.0
        %1907 = vmatprep.subr.mxu0 0.0
        %1908 = vmatpush1.msra.mxu0 0.0
        %1909 = vmatprep.subr.mxu0 0.0
        %1910 = vmatpush1.msra.mxu0 0.0
        %1911 = vmatprep.subr.mxu0 0.0
        %1912 = vmatpush1.msra.mxu0 0.0
        %1913 = vmatprep.subr.mxu0 0.0
        %1914 = vmatpush1.msra.mxu0 0.0
        %1915 = vmatprep.subr.mxu0 0.0
        %1916 = vmatpush1.msra.mxu0 0.0
        %1917 = vmatprep.subr.mxu0 0.0
        %1918 = vmatpush1.msra.mxu0 0.0
        %1919 = vmatprep.subr.mxu0 0.0
        %1920 = vmatpush1.msra.mxu0 0.0
        %1921 = vmatprep.subr.mxu0 0.0
        %1922 = vmatpush1.msra.mxu0 0.0
        %1923 = vmatprep.subr.mxu0 0.0
        %1924 = vmatpush1.msra.mxu0 0.0
        %1925 = vmatprep.subr.mxu0 0.0
        %1926 = vmatpush1.msra.mxu0 0.0
        %1927 = vmatprep.subr.mxu0 0.0
        %1928 = vmatpush1.msra.mxu0 0.0
        %1929 = vmatprep.subr.mxu0 0.0
        %1930 = vmatpush1.msra.mxu0 0.0
        %1931 = vmatprep.subr.mxu0 0.0
        %1932 = vmatpush1.msra.mxu0 0.0
        %1933 = vmatprep.subr.mxu0 0.0
        %1934 = vmatpush1.msra.mxu0 0.0
        %1935 = vmatprep.subr.mxu0 0.0
        %1936 = vmatpush1.msra.mxu0 0.0
        %1937 = vmatprep.subr.mxu0 0.0
        %1938 = vmatpush1.msra.mxu0 0.0
        %1939 = vmatprep.subr.mxu0 0.0
        %1940 = vmatpush1.msra.mxu0 0.0
        %1941 = vmatprep.subr.mxu0 0.0
        %1942 = vmatpush1.msra.mxu0 0.0
        %1943 = vmatprep.subr.mxu0 0.0
        %1944 = vmatpush1.msra.mxu0 0.0
        %1945 = vmatprep.mubr.f32.mxu0 0.0
        %1946 = vmatmul.mubr.f32.gmra.mrb[0].mxu0 %v1879
        %v1947 = vpop.f32.mrb[0].mxu0
        %v1948 = vadd.f32 %v1876, %v1947
        %v1949 = vpop.f32.mrb[0].mxu0
        %1950 = vdwg.mxu0
        %v1951 = vmul.f32 %v1948, 0.5
        %v1952 = vmul.f32 %v1948, 0.044715
        %v1953 = vmul.f32 %v1952, %v1948
        %v1954 = vmul.f32 %v1953, %v1948
        %v1955 = vadd.f32 %v1948, %v1954
        %v1956 = vmul.f32 %v1955, 0.7978846
        %v1957 = vtanh.pop %v1956
        %v1958 = vadd.f32 %v1957, 1.0
        %v1959 = vmul.f32 %v1951, %v1958
        %v1960 = vld [vmem:[%s14] sm:$0xff]
        %v1961 = vld [vmem:[%s14 + $0x8] sm:$0xff]
        %v1962 = vld [vmem:[%s14 + $0x10] sm:$0xff]
        %v1963 = vld [vmem:[%s14 + $0x18] sm:$0xff]
        %v1964 = vld [vmem:[%s14 + $0x20] sm:$0xff]
        %v1965 = vld [vmem:[%s14 + $0x28] sm:$0xff]
        %v1966 = vld [vmem:[%s14 + $0x30] sm:$0xff]
        %v1967 = vld [vmem:[%s14 + $0x38] sm:$0xff]
        %v1968 = vld [vmem:[%s15] sm:$0x1]
        %v1970 = vlaneseq
        %v1971 = vshrl.u32 %v1970, 7
        %v1972 = vsub.s32 0, %v1971
        %v1973 = vrot.slane %v1968, %v1972
        %vm1975 = vcmask 523264
        %v1977 = vsel %vm1975, %v1959, 0
        %1979 = vmatprep.subr.mxu0 0.0
        %1980 = vmatpush1.msra.mxu0 %v1960
        %1981 = vmatprep.subr.mxu0 0.0
        %1982 = vmatpush1.msra.mxu0 %v1961
        %1983 = vmatprep.subr.mxu0 0.0
        %1984 = vmatpush1.msra.mxu0 %v1962
        %1985 = vmatprep.subr.mxu0 0.0
        %1986 = vmatpush1.msra.mxu0 %v1963
        %1987 = vmatprep.subr.mxu0 0.0
        %1988 = vmatpush1.msra.mxu0 %v1964
        %1989 = vmatprep.subr.mxu0 0.0
        %1990 = vmatpush1.msra.mxu0 %v1965
        %1991 = vmatprep.subr.mxu0 0.0
        %1992 = vmatpush1.msra.mxu0 %v1966
        %1993 = vmatprep.subr.mxu0 0.0
        %1994 = vmatpush1.msra.mxu0 %v1967
        %1995 = vmatprep.subr.mxu0 0.0
        %1996 = vmatpush1.msra.mxu0 0.0
        %1997 = vmatprep.subr.mxu0 0.0
        %1998 = vmatpush1.msra.mxu0 0.0
        %1999 = vmatprep.subr.mxu0 0.0
        %2000 = vmatpush1.msra.mxu0 0.0
        %2001 = vmatprep.subr.mxu0 0.0
        %2002 = vmatpush1.msra.mxu0 0.0
        %2003 = vmatprep.subr.mxu0 0.0
        %2004 = vmatpush1.msra.mxu0 0.0
        %2005 = vmatprep.subr.mxu0 0.0
        %2006 = vmatpush1.msra.mxu0 0.0
        %2007 = vmatprep.subr.mxu0 0.0
        %2008 = vmatpush1.msra.mxu0 0.0
        %2009 = vmatprep.subr.mxu0 0.0
        %2010 = vmatpush1.msra.mxu0 0.0
        %2011 = vmatprep.subr.mxu0 0.0
        %2012 = vmatpush1.msra.mxu0 0.0
        %2013 = vmatprep.subr.mxu0 0.0
        %2014 = vmatpush1.msra.mxu0 0.0
        %2015 = vmatprep.subr.mxu0 0.0
        %2016 = vmatpush1.msra.mxu0 0.0
        %2017 = vmatprep.subr.mxu0 0.0
        %2018 = vmatpush1.msra.mxu0 0.0
        %2019 = vmatprep.subr.mxu0 0.0
        %2020 = vmatpush1.msra.mxu0 0.0
        %2021 = vmatprep.subr.mxu0 0.0
        %2022 = vmatpush1.msra.mxu0 0.0
        %2023 = vmatprep.subr.mxu0 0.0
        %2024 = vmatpush1.msra.mxu0 0.0
        %2025 = vmatprep.subr.mxu0 0.0
        %2026 = vmatpush1.msra.mxu0 0.0
        %2027 = vmatprep.subr.mxu0 0.0
        %2028 = vmatpush1.msra.mxu0 0.0
        %2029 = vmatprep.subr.mxu0 0.0
        %2030 = vmatpush1.msra.mxu0 0.0
        %2031 = vmatprep.subr.mxu0 0.0
        %2032 = vmatpush1.msra.mxu0 0.0
        %2033 = vmatprep.subr.mxu0 0.0
        %2034 = vmatpush1.msra.mxu0 0.0
        %2035 = vmatprep.subr.mxu0 0.0
        %2036 = vmatpush1.msra.mxu0 0.0
        %2037 = vmatprep.subr.mxu0 0.0
        %2038 = vmatpush1.msra.mxu0 0.0
        %2039 = vmatprep.subr.mxu0 0.0
        %2040 = vmatpush1.msra.mxu0 0.0
        %2041 = vmatprep.subr.mxu0 0.0
        %2042 = vmatpush1.msra.mxu0 0.0
        %2043 = vmatprep.mubr.f32.mxu0 0.0
        %2044 = vmatmul.mubr.f32.gmra.mrb[0].mxu0 %v1977
        %v2045 = vpop.f32.mrb[0].mxu0
        %v2046 = vadd.f32 %v1973, %v2045
        %v2047 = vpop.f32.mrb[0].mxu0
        %2048 = vdwg.mxu0
        %v2049 = vadd.f32 %v1837, %v2046
        %s2050 = scalar_lea.vmem [#allocation6], 1
        %v2051 = vld [vmem:[%s2050] sm:$0x1]
        %s2052 = scalar_lea.vmem [#allocation7], 1
        %v2053 = vld [vmem:[%s2052] sm:$0x1]
        %v2054 = vsel %vm751, %v2049, 0.0
        %2055 = vadd.xlane.f32.xlu0 %v2054
        %v2056 = vpop.xlane.xlu0 %2055
        %v2057 = vmul.f32 %v2056, %v755
        %v2058 = vsub.f32 %v2049, %v2057
        %v2059 = vmul.f32 %v2058, %v2058
        %v2060 = vsel %vm751, %v2059, 0.0
        %2061 = vadd.xlane.f32.xlu0 %v2060
        %v2062 = vpop.xlane.xlu0 %2061
        %v2063 = vmul.f32 %v2062, %v755
        %v2064 = vadd.f32 %v2063, 1e-05
        %v2065 = vrsqrt.pop %v2064
        %v2066 = vmul.f32 %v2058, %v2065
        %v2068 = vlaneseq
        %v2069 = vshrl.u32 %v2068, 7
        %v2070 = vsub.s32 0, %v2069
        %v2071 = vrot.slane %v2051, %v2070
        %v2073 = vmul.f32 %v2066, %v2071
        %v2075 = vlaneseq
        %v2076 = vshrl.u32 %v2075, 7
        %v2077 = vsub.s32 0, %v2076
        %v2078 = vrot.slane %v2053, %v2077
        %v2080 = vadd.f32 %v2073, %v2078
        %s2081 = scalar_lea.vmem %s6, 32
        %v2082 = vld [vmem:[%s2081] sm:$0xff]
        %v2083 = vld [vmem:[%s2081 + $0x8] sm:$0xff]
        %v2084 = vld [vmem:[%s2081 + $0x10] sm:$0xff]
        %v2085 = vld [vmem:[%s2081 + $0x18] sm:$0xff]
        %s2086 = scalar_lea.vmem [#allocation9], 1
        %v2087 = vld [vmem:[%s2086] sm:$0x1]
        %v2089 = vlaneseq
        %v2090 = vshrl.u32 %v2089, 7
        %v2091 = vsub.s32 0, %v2090
        %v2092 = vrot.slane %v2087, %v2091
        %v2095 = vsel %vm751, %v2080, 0
        %2097 = vmatprep.subr.mxu0 0.0
        %2098 = vmatpush1.msra.mxu0 %v2082
        %2099 = vmatprep.subr.mxu0 0.0
        %2100 = vmatpush1.msra.mxu0 %v2083
        %2101 = vmatprep.subr.mxu0 0.0
        %2102 = vmatpush1.msra.mxu0 %v2084
        %2103 = vmatprep.subr.mxu0 0.0
        %2104 = vmatpush1.msra.mxu0 %v2085
        %2105 = vmatprep.subr.mxu0 0.0
        %2106 = vmatpush1.msra.mxu0 0.0
        %2107 = vmatprep.subr.mxu0 0.0
        %2108 = vmatpush1.msra.mxu0 0.0
        %2109 = vmatprep.subr.mxu0 0.0
        %2110 = vmatpush1.msra.mxu0 0.0
        %2111 = vmatprep.subr.mxu0 0.0
        %2112 = vmatpush1.msra.mxu0 0.0
        %2113 = vmatprep.subr.mxu0 0.0
        %2114 = vmatpush1.msra.mxu0 0.0
        %2115 = vmatprep.subr.mxu0 0.0
        %2116 = vmatpush1.msra.mxu0 0.0
        %2117 = vmatprep.subr.mxu0 0.0
        %2118 = vmatpush1.msra.mxu0 0.0
        %2119 = vmatprep.subr.mxu0 0.0
        %2120 = vmatpush1.msra.mxu0 0.0
        %2121 = vmatprep.subr.mxu0 0.0
        %2122 = vmatpush1.msra.mxu0 0.0
        %2123 = vmatprep.subr.mxu0 0.0
        %2124 = vmatpush1.msra.mxu0 0.0
        %2125 = vmatprep.subr.mxu0 0.0
        %2126 = vmatpush1.msra.mxu0 0.0
        %2127 = vmatprep.subr.mxu0 0.0
        %2128 = vmatpush1.msra.mxu0 0.0
        %2129 = vmatprep.subr.mxu0 0.0
        %2130 = vmatpush1.msra.mxu0 0.0
        %2131 = vmatprep.subr.mxu0 0.0
        %2132 = vmatpush1.msra.mxu0 0.0
        %2133 = vmatprep.subr.mxu0 0.0
        %2134 = vmatpush1.msra.mxu0 0.0
        %2135 = vmatprep.subr.mxu0 0.0
        %2136 = vmatpush1.msra.mxu0 0.0
        %2137 = vmatprep.subr.mxu0 0.0
        %2138 = vmatpush1.msra.mxu0 0.0
        %2139 = vmatprep.subr.mxu0 0.0
        %2140 = vmatpush1.msra.mxu0 0.0
        %2141 = vmatprep.subr.mxu0 0.0
        %2142 = vmatpush1.msra.mxu0 0.0
        %2143 = vmatprep.subr.mxu0 0.0
        %2144 = vmatpush1.msra.mxu0 0.0
        %2145 = vmatprep.subr.mxu0 0.0
        %2146 = vmatpush1.msra.mxu0 0.0
        %2147 = vmatprep.subr.mxu0 0.0
        %2148 = vmatpush1.msra.mxu0 0.0
        %2149 = vmatprep.subr.mxu0 0.0
        %2150 = vmatpush1.msra.mxu0 0.0
        %2151 = vmatprep.subr.mxu0 0.0
        %2152 = vmatpush1.msra.mxu0 0.0
        %2153 = vmatprep.subr.mxu0 0.0
        %2154 = vmatpush1.msra.mxu0 0.0
        %2155 = vmatprep.subr.mxu0 0.0
        %2156 = vmatpush1.msra.mxu0 0.0
        %2157 = vmatprep.subr.mxu0 0.0
        %2158 = vmatpush1.msra.mxu0 0.0
        %2159 = vmatprep.subr.mxu0 0.0
        %2160 = vmatpush1.msra.mxu0 0.0
        %2161 = vmatprep.mubr.f32.mxu0 0.0
        %2162 = vmatmul.mubr.f32.gmra.mrb[0].mxu0 %v2095
        %v2163 = vpop.f32.mrb[0].mxu0
        %v2164 = vadd.f32 %v2092, %v2163
        %v2165 = vpop.f32.mrb[0].mxu0
        %2166 = vdwg.mxu0
        %2168 = vrot.lane.b32.xlu0 %v2164, 96
        %v2169 = vpop.permute.xlu0 %2168
        %v2170 = vsel %vm867, %v2164, 0
        %v2172 = vsel %vm867, %v2169, 0
        %2174 = vmatprep.subr.mxu0 0.0
        %2175 = vmatpush1.xpose.msra.mxu0 %v2172
        %2176 = vmatprep.subr.mxu0 0.0
        %2177 = vmatpush1.xpose.msra.mxu0 0.0
        %2178 = vmatprep.subr.mxu0 0.0
        %2179 = vmatpush1.xpose.msra.mxu0 0.0
        %2180 = vmatprep.subr.mxu0 0.0
        %2181 = vmatpush1.xpose.msra.mxu0 0.0
        %2182 = vmatprep.subr.mxu0 0.0
        %2183 = vmatpush1.xpose.msra.mxu0 0.0
        %2184 = vmatprep.subr.mxu0 0.0
        %2185 = vmatpush1.xpose.msra.mxu0 0.0
        %2186 = vmatprep.subr.mxu0 0.0
        %2187 = vmatpush1.xpose.msra.mxu0 0.0
        %2188 = vmatprep.subr.mxu0 0.0
        %2189 = vmatpush1.xpose.msra.mxu0 0.0
        %2190 = vmatprep.subr.mxu0 0.0
        %2191 = vmatpush1.xpose.msra.mxu0 0.0
        %2192 = vmatprep.subr.mxu0 0.0
        %2193 = vmatpush1.xpose.msra.mxu0 0.0
        %2194 = vmatprep.subr.mxu0 0.0
        %2195 = vmatpush1.xpose.msra.mxu0 0.0
        %2196 = vmatprep.subr.mxu0 0.0
        %2197 = vmatpush1.xpose.msra.mxu0 0.0
        %2198 = vmatprep.subr.mxu0 0.0
        %2199 = vmatpush1.xpose.msra.mxu0 0.0
        %2200 = vmatprep.subr.mxu0 0.0
        %2201 = vmatpush1.xpose.msra.mxu0 0.0
        %2202 = vmatprep.subr.mxu0 0.0
        %2203 = vmatpush1.xpose.msra.mxu0 0.0
        %2204 = vmatprep.subr.mxu0 0.0
        %2205 = vmatpush1.xpose.msra.mxu0 0.0
        %2206 = vmatprep.subr.mxu0 0.0
        %2207 = vmatpush1.xpose.msra.mxu0 0.0
        %2208 = vmatprep.subr.mxu0 0.0
        %2209 = vmatpush1.xpose.msra.mxu0 0.0
        %2210 = vmatprep.subr.mxu0 0.0
        %2211 = vmatpush1.xpose.msra.mxu0 0.0
        %2212 = vmatprep.subr.mxu0 0.0
        %2213 = vmatpush1.xpose.msra.mxu0 0.0
        %2214 = vmatprep.subr.mxu0 0.0
        %2215 = vmatpush1.xpose.msra.mxu0 0.0
        %2216 = vmatprep.subr.mxu0 0.0
        %2217 = vmatpush1.xpose.msra.mxu0 0.0
        %2218 = vmatprep.subr.mxu0 0.0
        %2219 = vmatpush1.xpose.msra.mxu0 0.0
        %2220 = vmatprep.subr.mxu0 0.0
        %2221 = vmatpush1.xpose.msra.mxu0 0.0
        %2222 = vmatprep.subr.mxu0 0.0
        %2223 = vmatpush1.xpose.msra.mxu0 0.0
        %2224 = vmatprep.subr.mxu0 0.0
        %2225 = vmatpush1.xpose.msra.mxu0 0.0
        %2226 = vmatprep.subr.mxu0 0.0
        %2227 = vmatpush1.xpose.msra.mxu0 0.0
        %2228 = vmatprep.subr.mxu0 0.0
        %2229 = vmatpush1.xpose.msra.mxu0 0.0
        %2230 = vmatprep.subr.mxu0 0.0
        %2231 = vmatpush1.xpose.msra.mxu0 0.0
        %2232 = vmatprep.subr.mxu0 0.0
        %2233 = vmatpush1.xpose.msra.mxu0 0.0
        %2234 = vmatprep.subr.mxu0 0.0
        %2235 = vmatpush1.xpose.msra.mxu0 0.0
        %2236 = vmatprep.subr.mxu0 0.0
        %2237 = vmatpush1.xpose.msra.mxu0 0.0
        %2238 = vmatprep.mubr.f32.mxu0 0.0
        %2239 = vmatmul.mubr.f32.gmra.mrb[0].mxu0 %v2170
        %v2240 = vpop.f32.mrb[0].mxu0
        %v2241 = vadd.f32 0.0, %v2240
        %v2242 = vpop.f32.mrb[0].mxu0
        %2243 = vdwg.mxu0
        %v2244 = vmul.f32 %v2241, 0.35355338
        %v2245 = vsel %vm867, %v2244, -inf
        %2246 = vmax.xlane.f32.xlu0 %v2245
        %v2247 = vpop.xlane.xlu0 %2246
        %v2248 = vsub.f32 %v2244, %v2247
        %v2249 = vmul.f32 %v2248, 1.442695
        %v2250 = vpow.pop %v2249
        %v2251 = vsel %vm867, %v2250, 0.0
        %2252 = vadd.xlane.f32.xlu0 %v2251
        %v2253 = vpop.xlane.xlu0 %2252
        %v2254 = vrcp.pop %v2253
        %v2255 = vmul.f32 %v2250, %v2254
        %2256 = vrot.lane.b32.xlu0 %v2164, 64
        %v2257 = vpop.permute.xlu0 %2256
        %v2260 = vsel %vm867, %v2255, 0
        %2262 = vmatprep.subr.mxu0 0.0
        %2263 = vmatpush1.msra.mxu0 %v2257
        %2264 = vmatprep.subr.mxu0 0.0
        %2265 = vmatpush1.msra.mxu0 0.0
        %2266 = vmatprep.subr.mxu0 0.0
        %2267 = vmatpush1.msra.mxu0 0.0
        %2268 = vmatprep.subr.mxu0 0.0
        %2269 = vmatpush1.msra.mxu0 0.0
        %2270 = vmatprep.subr.mxu0 0.0
        %2271 = vmatpush1.msra.mxu0 0.0
        %2272 = vmatprep.subr.mxu0 0.0
        %2273 = vmatpush1.msra.mxu0 0.0
        %2274 = vmatprep.subr.mxu0 0.0
        %2275 = vmatpush1.msra.mxu0 0.0
        %2276 = vmatprep.subr.mxu0 0.0
        %2277 = vmatpush1.msra.mxu0 0.0
        %2278 = vmatprep.subr.mxu0 0.0
        %2279 = vmatpush1.msra.mxu0 0.0
        %2280 = vmatprep.subr.mxu0 0.0
        %2281 = vmatpush1.msra.mxu0 0.0
        %2282 = vmatprep.subr.mxu0 0.0
        %2283 = vmatpush1.msra.mxu0 0.0
        %2284 = vmatprep.subr.mxu0 0.0
        %2285 = vmatpush1.msra.mxu0 0.0
        %2286 = vmatprep.subr.mxu0 0.0
        %2287 = vmatpush1.msra.mxu0 0.0
        %2288 = vmatprep.subr.mxu0 0.0
        %2289 = vmatpush1.msra.mxu0 0.0
        %2290 = vmatprep.subr.mxu0 0.0
        %2291 = vmatpush1.msra.mxu0 0.0
        %2292 = vmatprep.subr.mxu0 0.0
        %2293 = vmatpush1.msra.mxu0 0.0
        %2294 = vmatprep.subr.mxu0 0.0
        %2295 = vmatpush1.msra.mxu0 0.0
        %2296 = vmatprep.subr.mxu0 0.0
        %2297 = vmatpush1.msra.mxu0 0.0
        %2298 = vmatprep.subr.mxu0 0.0
        %2299 = vmatpush1.msra.mxu0 0.0
        %2300 = vmatprep.subr.mxu0 0.0
        %2301 = vmatpush1.msra.mxu0 0.0
        %2302 = vmatprep.subr.mxu0 0.0
        %2303 = vmatpush1.msra.mxu0 0.0
        %2304 = vmatprep.subr.mxu0 0.0
        %2305 = vmatpush1.msra.mxu0 0.0
        %2306 = vmatprep.subr.mxu0 0.0
        %2307 = vmatpush1.msra.mxu0 0.0
        %2308 = vmatprep.subr.mxu0 0.0
        %2309 = vmatpush1.msra.mxu0 0.0
        %2310 = vmatprep.subr.mxu0 0.0
        %2311 = vmatpush1.msra.mxu0 0.0
        %2312 = vmatprep.subr.mxu0 0.0
        %2313 = vmatpush1.msra.mxu0 0.0
        %2314 = vmatprep.subr.mxu0 0.0
        %2315 = vmatpush1.msra.mxu0 0.0
        %2316 = vmatprep.subr.mxu0 0.0
        %2317 = vmatpush1.msra.mxu0 0.0
        %2318 = vmatprep.subr.mxu0 0.0
        %2319 = vmatpush1.msra.mxu0 0.0
        %2320 = vmatprep.subr.mxu0 0.0
        %2321 = vmatpush1.msra.mxu0 0.0
        %2322 = vmatprep.subr.mxu0 0.0
        %2323 = vmatpush1.msra.mxu0 0.0
        %2324 = vmatprep.subr.mxu0 0.0
        %2325 = vmatpush1.msra.mxu0 0.0
        %2326 = vmatprep.mubr.f32.mxu0 0.0
        %2327 = vmatmul.mubr.f32.gmra.mrb[0].mxu0 %v2260
        %v2328 = vpop.f32.mrb[0].mxu0
        %v2329 = vadd.f32 0.0, %v2328
        %v2330 = vpop.f32.mrb[0].mxu0
        %2331 = vdwg.mxu0
        %s2332 = scalar_lea.vmem %s8, 32
        %v2333 = vld [vmem:[%s2332] sm:$0xff]
        %2334 = vrot.lane.b32.xlu0 %v2164, 120
        %v2335 = vpop.permute.xlu0 %2334
        %2336 = vrot.lane.b32.xlu0 %v2164, 88
        %v2337 = vpop.permute.xlu0 %2336
        %v2338 = vsel %vm867, %v2335, 0
        %v2340 = vsel %vm867, %v2337, 0
        %2342 = vmatprep.subr.mxu0 0.0
        %2343 = vmatpush1.xpose.msra.mxu0 %v2340
        %2344 = vmatprep.subr.mxu0 0.0
        %2345 = vmatpush1.xpose.msra.mxu0 0.0
        %2346 = vmatprep.subr.mxu0 0.0
        %2347 = vmatpush1.xpose.msra.mxu0 0.0
        %2348 = vmatprep.subr.mxu0 0.0
        %2349 = vmatpush1.xpose.msra.mxu0 0.0
        %2350 = vmatprep.subr.mxu0 0.0
        %2351 = vmatpush1.xpose.msra.mxu0 0.0
        %2352 = vmatprep.subr.mxu0 0.0
        %2353 = vmatpush1.xpose.msra.mxu0 0.0
        %2354 = vmatprep.subr.mxu0 0.0
        %2355 = vmatpush1.xpose.msra.mxu0 0.0
        %2356 = vmatprep.subr.mxu0 0.0
        %2357 = vmatpush1.xpose.msra.mxu0 0.0
        %2358 = vmatprep.subr.mxu0 0.0
        %2359 = vmatpush1.xpose.msra.mxu0 0.0
        %2360 = vmatprep.subr.mxu0 0.0
        %2361 = vmatpush1.xpose.msra.mxu0 0.0
        %2362 = vmatprep.subr.mxu0 0.0
        %2363 = vmatpush1.xpose.msra.mxu0 0.0
        %2364 = vmatprep.subr.mxu0 0.0
        %2365 = vmatpush1.xpose.msra.mxu0 0.0
        %2366 = vmatprep.subr.mxu0 0.0
        %2367 = vmatpush1.xpose.msra.mxu0 0.0
        %2368 = vmatprep.subr.mxu0 0.0
        %2369 = vmatpush1.xpose.msra.mxu0 0.0
        %2370 = vmatprep.subr.mxu0 0.0
        %2371 = vmatpush1.xpose.msra.mxu0 0.0
        %2372 = vmatprep.subr.mxu0 0.0
        %2373 = vmatpush1.xpose.msra.mxu0 0.0
        %2374 = vmatprep.subr.mxu0 0.0
        %2375 = vmatpush1.xpose.msra.mxu0 0.0
        %2376 = vmatprep.subr.mxu0 0.0
        %2377 = vmatpush1.xpose.msra.mxu0 0.0
        %2378 = vmatprep.subr.mxu0 0.0
        %2379 = vmatpush1.xpose.msra.mxu0 0.0
        %2380 = vmatprep.subr.mxu0 0.0
        %2381 = vmatpush1.xpose.msra.mxu0 0.0
        %2382 = vmatprep.subr.mxu0 0.0
        %2383 = vmatpush1.xpose.msra.mxu0 0.0
        %2384 = vmatprep.subr.mxu0 0.0
        %2385 = vmatpush1.xpose.msra.mxu0 0.0
        %2386 = vmatprep.subr.mxu0 0.0
        %2387 = vmatpush1.xpose.msra.mxu0 0.0
        %2388 = vmatprep.subr.mxu0 0.0
        %2389 = vmatpush1.xpose.msra.mxu0 0.0
        %2390 = vmatprep.subr.mxu0 0.0
        %2391 = vmatpush1.xpose.msra.mxu0 0.0
        %2392 = vmatprep.subr.mxu0 0.0
        %2393 = vmatpush1.xpose.msra.mxu0 0.0
        %2394 = vmatprep.subr.mxu0 0.0
        %2395 = vmatpush1.xpose.msra.mxu0 0.0
        %2396 = vmatprep.subr.mxu0 0.0
        %2397 = vmatpush1.xpose.msra.mxu0 0.0
        %2398 = vmatprep.subr.mxu0 0.0
        %2399 = vmatpush1.xpose.msra.mxu0 0.0
        %2400 = vmatprep.subr.mxu0 0.0
        %2401 = vmatpush1.xpose.msra.mxu0 0.0
        %2402 = vmatprep.subr.mxu0 0.0
        %2403 = vmatpush1.xpose.msra.mxu0 0.0
        %2404 = vmatprep.subr.mxu0 0.0
        %2405 = vmatpush1.xpose.msra.mxu0 0.0
        %2406 = vmatprep.mubr.f32.mxu0 0.0
        %2407 = vmatmul.mubr.f32.gmra.mrb[0].mxu0 %v2338
        %v2408 = vpop.f32.mrb[0].mxu0
        %v2409 = vadd.f32 0.0, %v2408
        %v2410 = vpop.f32.mrb[0].mxu0
        %2411 = vdwg.mxu0
        %v2412 = vmul.f32 %v2409, 0.35355338
        %v2413 = vsel %vm867, %v2412, -inf
        %2414 = vmax.xlane.f32.xlu0 %v2413
        %v2415 = vpop.xlane.xlu0 %2414
        %v2416 = vsub.f32 %v2412, %v2415
        %v2417 = vmul.f32 %v2416, 1.442695
        %v2418 = vpow.pop %v2417
        %v2419 = vsel %vm867, %v2418, 0.0
        %2420 = vadd.xlane.f32.xlu0 %v2419
        %v2421 = vpop.xlane.xlu0 %2420
        %v2422 = vrcp.pop %v2421
        %v2423 = vmul.f32 %v2418, %v2422
        %2424 = vrot.lane.b32.xlu0 %v2164, 56
        %v2425 = vpop.permute.xlu0 %2424
        %v2428 = vsel %vm867, %v2423, 0
        %2430 = vmatprep.subr.mxu0 0.0
        %2431 = vmatpush1.msra.mxu0 %v2425
        %2432 = vmatprep.subr.mxu0 0.0
        %2433 = vmatpush1.msra.mxu0 0.0
        %2434 = vmatprep.subr.mxu0 0.0
        %2435 = vmatpush1.msra.mxu0 0.0
        %2436 = vmatprep.subr.mxu0 0.0
        %2437 = vmatpush1.msra.mxu0 0.0
        %2438 = vmatprep.subr.mxu0 0.0
        %2439 = vmatpush1.msra.mxu0 0.0
        %2440 = vmatprep.subr.mxu0 0.0
        %2441 = vmatpush1.msra.mxu0 0.0
        %2442 = vmatprep.subr.mxu0 0.0
        %2443 = vmatpush1.msra.mxu0 0.0
        %2444 = vmatprep.subr.mxu0 0.0
        %2445 = vmatpush1.msra.mxu0 0.0
        %2446 = vmatprep.subr.mxu0 0.0
        %2447 = vmatpush1.msra.mxu0 0.0
        %2448 = vmatprep.subr.mxu0 0.0
        %2449 = vmatpush1.msra.mxu0 0.0
        %2450 = vmatprep.subr.mxu0 0.0
        %2451 = vmatpush1.msra.mxu0 0.0
        %2452 = vmatprep.subr.mxu0 0.0
        %2453 = vmatpush1.msra.mxu0 0.0
        %2454 = vmatprep.subr.mxu0 0.0
        %2455 = vmatpush1.msra.mxu0 0.0
        %2456 = vmatprep.subr.mxu0 0.0
        %2457 = vmatpush1.msra.mxu0 0.0
        %2458 = vmatprep.subr.mxu0 0.0
        %2459 = vmatpush1.msra.mxu0 0.0
        %2460 = vmatprep.subr.mxu0 0.0
        %2461 = vmatpush1.msra.mxu0 0.0
        %2462 = vmatprep.subr.mxu0 0.0
        %2463 = vmatpush1.msra.mxu0 0.0
        %2464 = vmatprep.subr.mxu0 0.0
        %2465 = vmatpush1.msra.mxu0 0.0
        %2466 = vmatprep.subr.mxu0 0.0
        %2467 = vmatpush1.msra.mxu0 0.0
        %2468 = vmatprep.subr.mxu0 0.0
        %2469 = vmatpush1.msra.mxu0 0.0
        %2470 = vmatprep.subr.mxu0 0.0
        %2471 = vmatpush1.msra.mxu0 0.0
        %2472 = vmatprep.subr.mxu0 0.0
        %2473 = vmatpush1.msra.mxu0 0.0
        %2474 = vmatprep.subr.mxu0 0.0
        %2475 = vmatpush1.msra.mxu0 0.0
        %2476 = vmatprep.subr.mxu0 0.0
        %2477 = vmatpush1.msra.mxu0 0.0
        %2478 = vmatprep.subr.mxu0 0.0
        %2479 = vmatpush1.msra.mxu0 0.0
        %2480 = vmatprep.subr.mxu0 0.0
        %2481 = vmatpush1.msra.mxu0 0.0
        %2482 = vmatprep.subr.mxu0 0.0
        %2483 = vmatpush1.msra.mxu0 0.0
        %2484 = vmatprep.subr.mxu0 0.0
        %2485 = vmatpush1.msra.mxu0 0.0
        %2486 = vmatprep.subr.mxu0 0.0
        %2487 = vmatpush1.msra.mxu0 0.0
        %2488 = vmatprep.subr.mxu0 0.0
        %2489 = vmatpush1.msra.mxu0 0.0
        %2490 = vmatprep.subr.mxu0 0.0
        %2491 = vmatpush1.msra.mxu0 0.0
        %2492 = vmatprep.subr.mxu0 0.0
        %2493 = vmatpush1.msra.mxu0 0.0
        %2494 = vmatprep.mubr.f32.mxu0 0.0
        %2495 = vmatmul.mubr.f32.gmra.mrb[0].mxu0 %v2428
        %v2496 = vpop.f32.mrb[0].mxu0
        %v2497 = vadd.f32 0.0, %v2496
        %v2498 = vpop.f32.mrb[0].mxu0
        %2499 = vdwg.mxu0
        %s2500 = scalar_lea.vmem %s8, 40
        %v2501 = vld [vmem:[%s2500] sm:$0xff]
        %v2503 = vsel %vm867, %v2497, 0
        %2505 = vmatprep.subr.mxu0 0.0
        %2506 = vmatpush1.msra.mxu0 %v2501
        %2507 = vmatprep.subr.mxu0 0.0
        %2508 = vmatpush1.msra.mxu0 0.0
        %2509 = vmatprep.subr.mxu0 0.0
        %2510 = vmatpush1.msra.mxu0 0.0
        %2511 = vmatprep.subr.mxu0 0.0
        %2512 = vmatpush1.msra.mxu0 0.0
        %2513 = vmatprep.subr.mxu0 0.0
        %2514 = vmatpush1.msra.mxu0 0.0
        %2515 = vmatprep.subr.mxu0 0.0
        %2516 = vmatpush1.msra.mxu0 0.0
        %2517 = vmatprep.subr.mxu0 0.0
        %2518 = vmatpush1.msra.mxu0 0.0
        %2519 = vmatprep.subr.mxu0 0.0
        %2520 = vmatpush1.msra.mxu0 0.0
        %2521 = vmatprep.subr.mxu0 0.0
        %2522 = vmatpush1.msra.mxu0 0.0
        %2523 = vmatprep.subr.mxu0 0.0
        %2524 = vmatpush1.msra.mxu0 0.0
        %2525 = vmatprep.subr.mxu0 0.0
        %2526 = vmatpush1.msra.mxu0 0.0
        %2527 = vmatprep.subr.mxu0 0.0
        %2528 = vmatpush1.msra.mxu0 0.0
        %2529 = vmatprep.subr.mxu0 0.0
        %2530 = vmatpush1.msra.mxu0 0.0
        %2531 = vmatprep.subr.mxu0 0.0
        %2532 = vmatpush1.msra.mxu0 0.0
        %2533 = vmatprep.subr.mxu0 0.0
        %2534 = vmatpush1.msra.mxu0 0.0
        %2535 = vmatprep.subr.mxu0 0.0
        %2536 = vmatpush1.msra.mxu0 0.0
        %2537 = vmatprep.subr.mxu0 0.0
        %2538 = vmatpush1.msra.mxu0 0.0
        %2539 = vmatprep.subr.mxu0 0.0
        %2540 = vmatpush1.msra.mxu0 0.0
        %2541 = vmatprep.subr.mxu0 0.0
        %2542 = vmatpush1.msra.mxu0 0.0
        %2543 = vmatprep.subr.mxu0 0.0
        %2544 = vmatpush1.msra.mxu0 0.0
        %2545 = vmatprep.subr.mxu0 0.0
        %2546 = vmatpush1.msra.mxu0 0.0
        %2547 = vmatprep.subr.mxu0 0.0
        %2548 = vmatpush1.msra.mxu0 0.0
        %2549 = vmatprep.subr.mxu0 0.0
        %2550 = vmatpush1.msra.mxu0 0.0
        %2551 = vmatprep.subr.mxu0 0.0
        %2552 = vmatpush1.msra.mxu0 0.0
        %2553 = vmatprep.subr.mxu0 0.0
        %2554 = vmatpush1.msra.mxu0 0.0
        %2555 = vmatprep.subr.mxu0 0.0
        %2556 = vmatpush1.msra.mxu0 0.0
        %2557 = vmatprep.subr.mxu0 0.0
        %2558 = vmatpush1.msra.mxu0 0.0
        %2559 = vmatprep.subr.mxu0 0.0
        %2560 = vmatpush1.msra.mxu0 0.0
        %2561 = vmatprep.subr.mxu0 0.0
        %2562 = vmatpush1.msra.mxu0 0.0
        %2563 = vmatprep.subr.mxu0 0.0
        %2564 = vmatpush1.msra.mxu0 0.0
        %2565 = vmatprep.subr.mxu0 0.0
        %2566 = vmatpush1.msra.mxu0 0.0
        %2567 = vmatprep.subr.mxu0 0.0
        %2568 = vmatpush1.msra.mxu0 0.0
        %2569 = vmatprep.mubr.f32.mxu0 0.0
        %2570 = vmatmul.mubr.f32.gmra.mrb[0].mxu0 %v2503
        %v2571 = vpop.f32.mrb[0].mxu0
        %v2572 = vadd.f32 0.0, %v2571
        %v2573 = vpop.f32.mrb[0].mxu0
        %2574 = vdwg.mxu0
        %v2576 = vsel %vm867, %v2329, 0
        %2578 = vmatprep.subr.mxu0 0.0
        %2579 = vmatpush1.msra.mxu0 %v2333
        %2580 = vmatprep.subr.mxu0 0.0
        %2581 = vmatpush1.msra.mxu0 0.0
        %2582 = vmatprep.subr.mxu0 0.0
        %2583 = vmatpush1.msra.mxu0 0.0
        %2584 = vmatprep.subr.mxu0 0.0
        %2585 = vmatpush1.msra.mxu0 0.0
        %2586 = vmatprep.subr.mxu0 0.0
        %2587 = vmatpush1.msra.mxu0 0.0
        %2588 = vmatprep.subr.mxu0 0.0
        %2589 = vmatpush1.msra.mxu0 0.0
        %2590 = vmatprep.subr.mxu0 0.0
        %2591 = vmatpush1.msra.mxu0 0.0
        %2592 = vmatprep.subr.mxu0 0.0
        %2593 = vmatpush1.msra.mxu0 0.0
        %2594 = vmatprep.subr.mxu0 0.0
        %2595 = vmatpush1.msra.mxu0 0.0
        %2596 = vmatprep.subr.mxu0 0.0
        %2597 = vmatpush1.msra.mxu0 0.0
        %2598 = vmatprep.subr.mxu0 0.0
        %2599 = vmatpush1.msra.mxu0 0.0
        %2600 = vmatprep.subr.mxu0 0.0
        %2601 = vmatpush1.msra.mxu0 0.0
        %2602 = vmatprep.subr.mxu0 0.0
        %2603 = vmatpush1.msra.mxu0 0.0
        %2604 = vmatprep.subr.mxu0 0.0
        %2605 = vmatpush1.msra.mxu0 0.0
        %2606 = vmatprep.subr.mxu0 0.0
        %2607 = vmatpush1.msra.mxu0 0.0
        %2608 = vmatprep.subr.mxu0 0.0
        %2609 = vmatpush1.msra.mxu0 0.0
        %2610 = vmatprep.subr.mxu0 0.0
        %2611 = vmatpush1.msra.mxu0 0.0
        %2612 = vmatprep.subr.mxu0 0.0
        %2613 = vmatpush1.msra.mxu0 0.0
        %2614 = vmatprep.subr.mxu0 0.0
        %2615 = vmatpush1.msra.mxu0 0.0
        %2616 = vmatprep.subr.mxu0 0.0
        %2617 = vmatpush1.msra.mxu0 0.0
        %2618 = vmatprep.subr.mxu0 0.0
        %2619 = vmatpush1.msra.mxu0 0.0
        %2620 = vmatprep.subr.mxu0 0.0
        %2621 = vmatpush1.msra.mxu0 0.0
        %2622 = vmatprep.subr.mxu0 0.0
        %2623 = vmatpush1.msra.mxu0 0.0
        %2624 = vmatprep.subr.mxu0 0.0
        %2625 = vmatpush1.msra.mxu0 0.0
        %2626 = vmatprep.subr.mxu0 0.0
        %2627 = vmatpush1.msra.mxu0 0.0
        %2628 = vmatprep.subr.mxu0 0.0
        %2629 = vmatpush1.msra.mxu0 0.0
        %2630 = vmatprep.subr.mxu0 0.0
        %2631 = vmatpush1.msra.mxu0 0.0
        %2632 = vmatprep.subr.mxu0 0.0
        %2633 = vmatpush1.msra.mxu0 0.0
        %2634 = vmatprep.subr.mxu0 0.0
        %2635 = vmatpush1.msra.mxu0 0.0
        %2636 = vmatprep.subr.mxu0 0.0
        %2637 = vmatpush1.msra.mxu0 0.0
        %2638 = vmatprep.subr.mxu0 0.0
        %2639 = vmatpush1.msra.mxu0 0.0
        %2640 = vmatprep.subr.mxu0 0.0
        %2641 = vmatpush1.msra.mxu0 0.0
        %2642 = vmatprep.mubr.f32.mxu0 0.0
        %2643 = vmatmul.mubr.f32.gmra.mrb[0].mxu0 %v2576
        %v2644 = vpop.f32.mrb[0].mxu0
        %v2645 = vadd.f32 %v2572, %v2644
        %v2646 = vpop.f32.mrb[0].mxu0
        %2647 = vdwg.mxu0
        %2648 = vrot.lane.b32.xlu0 %v2164, 112
        %v2649 = vpop.permute.xlu0 %2648
        %2650 = vrot.lane.b32.xlu0 %v2164, 80
        %v2651 = vpop.permute.xlu0 %2650
        %v2652 = vsel %vm867, %v2649, 0
        %v2654 = vsel %vm867, %v2651, 0
        %2656 = vmatprep.subr.mxu0 0.0
        %2657 = vmatpush1.xpose.msra.mxu0 %v2654
        %2658 = vmatprep.subr.mxu0 0.0
        %2659 = vmatpush1.xpose.msra.mxu0 0.0
        %2660 = vmatprep.subr.mxu0 0.0
        %2661 = vmatpush1.xpose.msra.mxu0 0.0
        %2662 = vmatprep.subr.mxu0 0.0
        %2663 = vmatpush1.xpose.msra.mxu0 0.0
        %2664 = vmatprep.subr.mxu0 0.0
        %2665 = vmatpush1.xpose.msra.mxu0 0.0
        %2666 = vmatprep.subr.mxu0 0.0
        %2667 = vmatpush1.xpose.msra.mxu0 0.0
        %2668 = vmatprep.subr.mxu0 0.0
        %2669 = vmatpush1.xpose.msra.mxu0 0.0
        %2670 = vmatprep.subr.mxu0 0.0
        %2671 = vmatpush1.xpose.msra.mxu0 0.0
        %2672 = vmatprep.subr.mxu0 0.0
        %2673 = vmatpush1.xpose.msra.mxu0 0.0
        %2674 = vmatprep.subr.mxu0 0.0
        %2675 = vmatpush1.xpose.msra.mxu0 0.0
        %2676 = vmatprep.subr.mxu0 0.0
        %2677 = vmatpush1.xpose.msra.mxu0 0.0
        %2678 = vmatprep.subr.mxu0 0.0
        %2679 = vmatpush1.xpose.msra.mxu0 0.0
        %2680 = vmatprep.subr.mxu0 0.0
        %2681 = vmatpush1.xpose.msra.mxu0 0.0
        %2682 = vmatprep.subr.mxu0 0.0
        %2683 = vmatpush1.xpose.msra.mxu0 0.0
        %2684 = vmatprep.subr.mxu0 0.0
        %2685 = vmatpush1.xpose.msra.mxu0 0.0
        %2686 = vmatprep.subr.mxu0 0.0
        %2687 = vmatpush1.xpose.msra.mxu0 0.0
        %2688 = vmatprep.subr.mxu0 0.0
        %2689 = vmatpush1.xpose.msra.mxu0 0.0
        %2690 = vmatprep.subr.mxu0 0.0
        %2691 = vmatpush1.xpose.msra.mxu0 0.0
        %2692 = vmatprep.subr.mxu0 0.0
        %2693 = vmatpush1.xpose.msra.mxu0 0.0
        %2694 = vmatprep.subr.mxu0 0.0
        %2695 = vmatpush1.xpose.msra.mxu0 0.0
        %2696 = vmatprep.subr.mxu0 0.0
        %2697 = vmatpush1.xpose.msra.mxu0 0.0
        %2698 = vmatprep.subr.mxu0 0.0
        %2699 = vmatpush1.xpose.msra.mxu0 0.0
        %2700 = vmatprep.subr.mxu0 0.0
        %2701 = vmatpush1.xpose.msra.mxu0 0.0
        %2702 = vmatprep.subr.mxu0 0.0
        %2703 = vmatpush1.xpose.msra.mxu0 0.0
        %2704 = vmatprep.subr.mxu0 0.0
        %2705 = vmatpush1.xpose.msra.mxu0 0.0
        %2706 = vmatprep.subr.mxu0 0.0
        %2707 = vmatpush1.xpose.msra.mxu0 0.0
        %2708 = vmatprep.subr.mxu0 0.0
        %2709 = vmatpush1.xpose.msra.mxu0 0.0
        %2710 = vmatprep.subr.mxu0 0.0
        %2711 = vmatpush1.xpose.msra.mxu0 0.0
        %2712 = vmatprep.subr.mxu0 0.0
        %2713 = vmatpush1.xpose.msra.mxu0 0.0
        %2714 = vmatprep.subr.mxu0 0.0
        %2715 = vmatpush1.xpose.msra.mxu0 0.0
        %2716 = vmatprep.subr.mxu0 0.0
        %2717 = vmatpush1.xpose.msra.mxu0 0.0
        %2718 = vmatprep.subr.mxu0 0.0
        %2719 = vmatpush1.xpose.msra.mxu0 0.0
        %2720 = vmatprep.mubr.f32.mxu0 0.0
        %2721 = vmatmul.mubr.f32.gmra.mrb[0].mxu0 %v2652
        %v2722 = vpop.f32.mrb[0].mxu0
        %v2723 = vadd.f32 0.0, %v2722
        %v2724 = vpop.f32.mrb[0].mxu0
        %2725 = vdwg.mxu0
        %v2726 = vmul.f32 %v2723, 0.35355338
        %v2727 = vsel %vm867, %v2726, -inf
        %2728 = vmax.xlane.f32.xlu0 %v2727
        %v2729 = vpop.xlane.xlu0 %2728
        %v2730 = vsub.f32 %v2726, %v2729
        %v2731 = vmul.f32 %v2730, 1.442695
        %v2732 = vpow.pop %v2731
        %v2733 = vsel %vm867, %v2732, 0.0
        %2734 = vadd.xlane.f32.xlu0 %v2733
        %v2735 = vpop.xlane.xlu0 %2734
        %v2736 = vrcp.pop %v2735
        %v2737 = vmul.f32 %v2732, %v2736
        %2738 = vrot.lane.b32.xlu0 %v2164, 48
        %v2739 = vpop.permute.xlu0 %2738
        %v2742 = vsel %vm867, %v2737, 0
        %2744 = vmatprep.subr.mxu0 0.0
        %2745 = vmatpush1.msra.mxu0 %v2739
        %2746 = vmatprep.subr.mxu0 0.0
        %2747 = vmatpush1.msra.mxu0 0.0
        %2748 = vmatprep.subr.mxu0 0.0
        %2749 = vmatpush1.msra.mxu0 0.0
        %2750 = vmatprep.subr.mxu0 0.0
        %2751 = vmatpush1.msra.mxu0 0.0
        %2752 = vmatprep.subr.mxu0 0.0
        %2753 = vmatpush1.msra.mxu0 0.0
        %2754 = vmatprep.subr.mxu0 0.0
        %2755 = vmatpush1.msra.mxu0 0.0
        %2756 = vmatprep.subr.mxu0 0.0
        %2757 = vmatpush1.msra.mxu0 0.0
        %2758 = vmatprep.subr.mxu0 0.0
        %2759 = vmatpush1.msra.mxu0 0.0
        %2760 = vmatprep.subr.mxu0 0.0
        %2761 = vmatpush1.msra.mxu0 0.0
        %2762 = vmatprep.subr.mxu0 0.0
        %2763 = vmatpush1.msra.mxu0 0.0
        %2764 = vmatprep.subr.mxu0 0.0
        %2765 = vmatpush1.msra.mxu0 0.0
        %2766 = vmatprep.subr.mxu0 0.0
        %2767 = vmatpush1.msra.mxu0 0.0
        %2768 = vmatprep.subr.mxu0 0.0
        %2769 = vmatpush1.msra.mxu0 0.0
        %2770 = vmatprep.subr.mxu0 0.0
        %2771 = vmatpush1.msra.mxu0 0.0
        %2772 = vmatprep.subr.mxu0 0.0
        %2773 = vmatpush1.msra.mxu0 0.0
        %2774 = vmatprep.subr.mxu0 0.0
        %2775 = vmatpush1.msra.mxu0 0.0
        %2776 = vmatprep.subr.mxu0 0.0
        %2777 = vmatpush1.msra.mxu0 0.0
        %2778 = vmatprep.subr.mxu0 0.0
        %2779 = vmatpush1.msra.mxu0 0.0
        %2780 = vmatprep.subr.mxu0 0.0
        %2781 = vmatpush1.msra.mxu0 0.0
        %2782 = vmatprep.subr.mxu0 0.0
        %2783 = vmatpush1.msra.mxu0 0.0
        %2784 = vmatprep.subr.mxu0 0.0
        %2785 = vmatpush1.msra.mxu0 0.0
        %2786 = vmatprep.subr.mxu0 0.0
        %2787 = vmatpush1.msra.mxu0 0.0
        %2788 = vmatprep.subr.mxu0 0.0
        %2789 = vmatpush1.msra.mxu0 0.0
        %2790 = vmatprep.subr.mxu0 0.0
        %2791 = vmatpush1.msra.mxu0 0.0
        %2792 = vmatprep.subr.mxu0 0.0
        %2793 = vmatpush1.msra.mxu0 0.0
        %2794 = vmatprep.subr.mxu0 0.0
        %2795 = vmatpush1.msra.mxu0 0.0
        %2796 = vmatprep.subr.mxu0 0.0
        %2797 = vmatpush1.msra.mxu0 0.0
        %2798 = vmatprep.subr.mxu0 0.0
        %2799 = vmatpush1.msra.mxu0 0.0
        %2800 = vmatprep.subr.mxu0 0.0
        %2801 = vmatpush1.msra.mxu0 0.0
        %2802 = vmatprep.subr.mxu0 0.0
        %2803 = vmatpush1.msra.mxu0 0.0
        %2804 = vmatprep.subr.mxu0 0.0
        %2805 = vmatpush1.msra.mxu0 0.0
        %2806 = vmatprep.subr.mxu0 0.0
        %2807 = vmatpush1.msra.mxu0 0.0
        %2808 = vmatprep.mubr.f32.mxu0 0.0
        %2809 = vmatmul.mubr.f32.gmra.mrb[0].mxu0 %v2742
        %v2810 = vpop.f32.mrb[0].mxu0
        %v2811 = vadd.f32 0.0, %v2810
        %v2812 = vpop.f32.mrb[0].mxu0
        %2813 = vdwg.mxu0
        %s2814 = scalar_lea.vmem %s8, 48
        %v2815 = vld [vmem:[%s2814] sm:$0xff]
        %v2817 = vsel %vm867, %v2811, 0
        %2819 = vmatprep.subr.mxu0 0.0
        %2820 = vmatpush1.msra.mxu0 %v2815
        %2821 = vmatprep.subr.mxu0 0.0
        %2822 = vmatpush1.msra.mxu0 0.0
        %2823 = vmatprep.subr.mxu0 0.0
        %2824 = vmatpush1.msra.mxu0 0.0
        %2825 = vmatprep.subr.mxu0 0.0
        %2826 = vmatpush1.msra.mxu0 0.0
        %2827 = vmatprep.subr.mxu0 0.0
        %2828 = vmatpush1.msra.mxu0 0.0
        %2829 = vmatprep.subr.mxu0 0.0
        %2830 = vmatpush1.msra.mxu0 0.0
        %2831 = vmatprep.subr.mxu0 0.0
        %2832 = vmatpush1.msra.mxu0 0.0
        %2833 = vmatprep.subr.mxu0 0.0
        %2834 = vmatpush1.msra.mxu0 0.0
        %2835 = vmatprep.subr.mxu0 0.0
        %2836 = vmatpush1.msra.mxu0 0.0
        %2837 = vmatprep.subr.mxu0 0.0
        %2838 = vmatpush1.msra.mxu0 0.0
        %2839 = vmatprep.subr.mxu0 0.0
        %2840 = vmatpush1.msra.mxu0 0.0
        %2841 = vmatprep.subr.mxu0 0.0
        %2842 = vmatpush1.msra.mxu0 0.0
        %2843 = vmatprep.subr.mxu0 0.0
        %2844 = vmatpush1.msra.mxu0 0.0
        %2845 = vmatprep.subr.mxu0 0.0
        %2846 = vmatpush1.msra.mxu0 0.0
        %2847 = vmatprep.subr.mxu0 0.0
        %2848 = vmatpush1.msra.mxu0 0.0
        %2849 = vmatprep.subr.mxu0 0.0
        %2850 = vmatpush1.msra.mxu0 0.0
        %2851 = vmatprep.subr.mxu0 0.0
        %2852 = vmatpush1.msra.mxu0 0.0
        %2853 = vmatprep.subr.mxu0 0.0
        %2854 = vmatpush1.msra.mxu0 0.0
        %2855 = vmatprep.subr.mxu0 0.0
        %2856 = vmatpush1.msra.mxu0 0.0
        %2857 = vmatprep.subr.mxu0 0.0
        %2858 = vmatpush1.msra.mxu0 0.0
        %2859 = vmatprep.subr.mxu0 0.0
        %2860 = vmatpush1.msra.mxu0 0.0
        %2861 = vmatprep.subr.mxu0 0.0
        %2862 = vmatpush1.msra.mxu0 0.0
        %2863 = vmatprep.subr.mxu0 0.0
        %2864 = vmatpush1.msra.mxu0 0.0
        %2865 = vmatprep.subr.mxu0 0.0
        %2866 = vmatpush1.msra.mxu0 0.0
        %2867 = vmatprep.subr.mxu0 0.0
        %2868 = vmatpush1.msra.mxu0 0.0
        %2869 = vmatprep.subr.mxu0 0.0
        %2870 = vmatpush1.msra.mxu0 0.0
        %2871 = vmatprep.subr.mxu0 0.0
        %2872 = vmatpush1.msra.mxu0 0.0
        %2873 = vmatprep.subr.mxu0 0.0
        %2874 = vmatpush1.msra.mxu0 0.0
        %2875 = vmatprep.subr.mxu0 0.0
        %2876 = vmatpush1.msra.mxu0 0.0
        %2877 = vmatprep.subr.mxu0 0.0
        %2878 = vmatpush1.msra.mxu0 0.0
        %2879 = vmatprep.subr.mxu0 0.0
        %2880 = vmatpush1.msra.mxu0 0.0
        %2881 = vmatprep.subr.mxu0 0.0
        %2882 = vmatpush1.msra.mxu0 0.0
        %2883 = vmatprep.mubr.f32.mxu0 0.0
        %2884 = vmatmul.mubr.f32.gmra.mrb[0].mxu0 %v2817
        %v2885 = vpop.f32.mrb[0].mxu0
        %v2886 = vadd.f32 0.0, %v2885
        %v2887 = vpop.f32.mrb[0].mxu0
        %2888 = vdwg.mxu0
        %v2889 = vadd.f32 %v2645, %v2886
        %2890 = vrot.lane.b32.xlu0 %v2164, 104
        %v2891 = vpop.permute.xlu0 %2890
        %2892 = vrot.lane.b32.xlu0 %v2164, 72
        %v2893 = vpop.permute.xlu0 %2892
        %v2894 = vsel %vm867, %v2891, 0
        %v2896 = vsel %vm867, %v2893, 0
        %2898 = vmatprep.subr.mxu0 0.0
        %2899 = vmatpush1.xpose.msra.mxu0 %v2896
        %2900 = vmatprep.subr.mxu0 0.0
        %2901 = vmatpush1.xpose.msra.mxu0 0.0
        %2902 = vmatprep.subr.mxu0 0.0
        %2903 = vmatpush1.xpose.msra.mxu0 0.0
        %2904 = vmatprep.subr.mxu0 0.0
        %2905 = vmatpush1.xpose.msra.mxu0 0.0
        %2906 = vmatprep.subr.mxu0 0.0
        %2907 = vmatpush1.xpose.msra.mxu0 0.0
        %2908 = vmatprep.subr.mxu0 0.0
        %2909 = vmatpush1.xpose.msra.mxu0 0.0
        %2910 = vmatprep.subr.mxu0 0.0
        %2911 = vmatpush1.xpose.msra.mxu0 0.0
        %2912 = vmatprep.subr.mxu0 0.0
        %2913 = vmatpush1.xpose.msra.mxu0 0.0
        %2914 = vmatprep.subr.mxu0 0.0
        %2915 = vmatpush1.xpose.msra.mxu0 0.0
        %2916 = vmatprep.subr.mxu0 0.0
        %2917 = vmatpush1.xpose.msra.mxu0 0.0
        %2918 = vmatprep.subr.mxu0 0.0
        %2919 = vmatpush1.xpose.msra.mxu0 0.0
        %2920 = vmatprep.subr.mxu0 0.0
        %2921 = vmatpush1.xpose.msra.mxu0 0.0
        %2922 = vmatprep.subr.mxu0 0.0
        %2923 = vmatpush1.xpose.msra.mxu0 0.0
        %2924 = vmatprep.subr.mxu0 0.0
        %2925 = vmatpush1.xpose.msra.mxu0 0.0
        %2926 = vmatprep.subr.mxu0 0.0
        %2927 = vmatpush1.xpose.msra.mxu0 0.0
        %2928 = vmatprep.subr.mxu0 0.0
        %2929 = vmatpush1.xpose.msra.mxu0 0.0
        %2930 = vmatprep.subr.mxu0 0.0
        %2931 = vmatpush1.xpose.msra.mxu0 0.0
        %2932 = vmatprep.subr.mxu0 0.0
        %2933 = vmatpush1.xpose.msra.mxu0 0.0
        %2934 = vmatprep.subr.mxu0 0.0
        %2935 = vmatpush1.xpose.msra.mxu0 0.0
        %2936 = vmatprep.subr.mxu0 0.0
        %2937 = vmatpush1.xpose.msra.mxu0 0.0
        %2938 = vmatprep.subr.mxu0 0.0
        %2939 = vmatpush1.xpose.msra.mxu0 0.0
        %2940 = vmatprep.subr.mxu0 0.0
        %2941 = vmatpush1.xpose.msra.mxu0 0.0
        %2942 = vmatprep.subr.mxu0 0.0
        %2943 = vmatpush1.xpose.msra.mxu0 0.0
        %2944 = vmatprep.subr.mxu0 0.0
        %2945 = vmatpush1.xpose.msra.mxu0 0.0
        %2946 = vmatprep.subr.mxu0 0.0
        %2947 = vmatpush1.xpose.msra.mxu0 0.0
        %2948 = vmatprep.subr.mxu0 0.0
        %2949 = vmatpush1.xpose.msra.mxu0 0.0
        %2950 = vmatprep.subr.mxu0 0.0
        %2951 = vmatpush1.xpose.msra.mxu0 0.0
        %2952 = vmatprep.subr.mxu0 0.0
        %2953 = vmatpush1.xpose.msra.mxu0 0.0
        %2954 = vmatprep.subr.mxu0 0.0
        %2955 = vmatpush1.xpose.msra.mxu0 0.0
        %2956 = vmatprep.subr.mxu0 0.0
        %2957 = vmatpush1.xpose.msra.mxu0 0.0
        %2958 = vmatprep.subr.mxu0 0.0
        %2959 = vmatpush1.xpose.msra.mxu0 0.0
        %2960 = vmatprep.subr.mxu0 0.0
        %2961 = vmatpush1.xpose.msra.mxu0 0.0
        %2962 = vmatprep.mubr.f32.mxu0 0.0
        %2963 = vmatmul.mubr.f32.gmra.mrb[0].mxu0 %v2894
        %v2964 = vpop.f32.mrb[0].mxu0
        %v2965 = vadd.f32 0.0, %v2964
        %v2966 = vpop.f32.mrb[0].mxu0
        %2967 = vdwg.mxu0
        %v2968 = vmul.f32 %v2965, 0.35355338
        %v2969 = vsel %vm867, %v2968, -inf
        %2970 = vmax.xlane.f32.xlu0 %v2969
        %v2971 = vpop.xlane.xlu0 %2970
        %v2972 = vsub.f32 %v2968, %v2971
        %v2973 = vmul.f32 %v2972, 1.442695
        %v2974 = vpow.pop %v2973
        %v2975 = vsel %vm867, %v2974, 0.0
        %2976 = vadd.xlane.f32.xlu0 %v2975
        %v2977 = vpop.xlane.xlu0 %2976
        %v2978 = vrcp.pop %v2977
        %v2979 = vmul.f32 %v2974, %v2978
        %2980 = vrot.lane.b32.xlu0 %v2164, 40
        %v2981 = vpop.permute.xlu0 %2980
        %v2984 = vsel %vm867, %v2979, 0
        %2986 = vmatprep.subr.mxu0 0.0
        %2987 = vmatpush1.msra.mxu0 %v2981
        %2988 = vmatprep.subr.mxu0 0.0
        %2989 = vmatpush1.msra.mxu0 0.0
        %2990 = vmatprep.subr.mxu0 0.0
        %2991 = vmatpush1.msra.mxu0 0.0
        %2992 = vmatprep.subr.mxu0 0.0
        %2993 = vmatpush1.msra.mxu0 0.0
        %2994 = vmatprep.subr.mxu0 0.0
        %2995 = vmatpush1.msra.mxu0 0.0
        %2996 = vmatprep.subr.mxu0 0.0
        %2997 = vmatpush1.msra.mxu0 0.0
        %2998 = vmatprep.subr.mxu0 0.0
        %2999 = vmatpush1.msra.mxu0 0.0
        %3000 = vmatprep.subr.mxu0 0.0
        %3001 = vmatpush1.msra.mxu0 0.0
        %3002 = vmatprep.subr.mxu0 0.0
        %3003 = vmatpush1.msra.mxu0 0.0
        %3004 = vmatprep.subr.mxu0 0.0
        %3005 = vmatpush1.msra.mxu0 0.0
        %3006 = vmatprep.subr.mxu0 0.0
        %3007 = vmatpush1.msra.mxu0 0.0
        %3008 = vmatprep.subr.mxu0 0.0
        %3009 = vmatpush1.msra.mxu0 0.0
        %3010 = vmatprep.subr.mxu0 0.0
        %3011 = vmatpush1.msra.mxu0 0.0
        %3012 = vmatprep.subr.mxu0 0.0
        %3013 = vmatpush1.msra.mxu0 0.0
        %3014 = vmatprep.subr.mxu0 0.0
        %3015 = vmatpush1.msra.mxu0 0.0
        %3016 = vmatprep.subr.mxu0 0.0
        %3017 = vmatpush1.msra.mxu0 0.0
        %3018 = vmatprep.subr.mxu0 0.0
        %3019 = vmatpush1.msra.mxu0 0.0
        %3020 = vmatprep.subr.mxu0 0.0
        %3021 = vmatpush1.msra.mxu0 0.0
        %3022 = vmatprep.subr.mxu0 0.0
        %3023 = vmatpush1.msra.mxu0 0.0
        %3024 = vmatprep.subr.mxu0 0.0
        %3025 = vmatpush1.msra.mxu0 0.0
        %3026 = vmatprep.subr.mxu0 0.0
        %3027 = vmatpush1.msra.mxu0 0.0
        %3028 = vmatprep.subr.mxu0 0.0
        %3029 = vmatpush1.msra.mxu0 0.0
        %3030 = vmatprep.subr.mxu0 0.0
        %3031 = vmatpush1.msra.mxu0 0.0
        %3032 = vmatprep.subr.mxu0 0.0
        %3033 = vmatpush1.msra.mxu0 0.0
        %3034 = vmatprep.subr.mxu0 0.0
        %3035 = vmatpush1.msra.mxu0 0.0
        %3036 = vmatprep.subr.mxu0 0.0
        %3037 = vmatpush1.msra.mxu0 0.0
        %3038 = vmatprep.subr.mxu0 0.0
        %3039 = vmatpush1.msra.mxu0 0.0
        %3040 = vmatprep.subr.mxu0 0.0
        %3041 = vmatpush1.msra.mxu0 0.0
        %3042 = vmatprep.subr.mxu0 0.0
        %3043 = vmatpush1.msra.mxu0 0.0
        %3044 = vmatprep.subr.mxu0 0.0
        %3045 = vmatpush1.msra.mxu0 0.0
        %3046 = vmatprep.subr.mxu0 0.0
        %3047 = vmatpush1.msra.mxu0 0.0
        %3048 = vmatprep.subr.mxu0 0.0
        %3049 = vmatpush1.msra.mxu0 0.0
        %3050 = vmatprep.mubr.f32.mxu0 0.0
        %3051 = vmatmul.mubr.f32.gmra.mrb[0].mxu0 %v2984
        %v3052 = vpop.f32.mrb[0].mxu0
        %v3053 = vadd.f32 0.0, %v3052
        %v3054 = vpop.f32.mrb[0].mxu0
        %3055 = vdwg.mxu0
        %s3056 = scalar_lea.vmem %s8, 56
        %v3057 = vld [vmem:[%s3056] sm:$0xff]
        %v3059 = vsel %vm867, %v3053, 0
        %3061 = vmatprep.subr.mxu0 0.0
        %3062 = vmatpush1.msra.mxu0 %v3057
        %3063 = vmatprep.subr.mxu0 0.0
        %3064 = vmatpush1.msra.mxu0 0.0
        %3065 = vmatprep.subr.mxu0 0.0
        %3066 = vmatpush1.msra.mxu0 0.0
        %3067 = vmatprep.subr.mxu0 0.0
        %3068 = vmatpush1.msra.mxu0 0.0
        %3069 = vmatprep.subr.mxu0 0.0
        %3070 = vmatpush1.msra.mxu0 0.0
        %3071 = vmatprep.subr.mxu0 0.0
        %3072 = vmatpush1.msra.mxu0 0.0
        %3073 = vmatprep.subr.mxu0 0.0
        %3074 = vmatpush1.msra.mxu0 0.0
        %3075 = vmatprep.subr.mxu0 0.0
        %3076 = vmatpush1.msra.mxu0 0.0
        %3077 = vmatprep.subr.mxu0 0.0
        %3078 = vmatpush1.msra.mxu0 0.0
        %3079 = vmatprep.subr.mxu0 0.0
        %3080 = vmatpush1.msra.mxu0 0.0
        %3081 = vmatprep.subr.mxu0 0.0
        %3082 = vmatpush1.msra.mxu0 0.0
        %3083 = vmatprep.subr.mxu0 0.0
        %3084 = vmatpush1.msra.mxu0 0.0
        %3085 = vmatprep.subr.mxu0 0.0
        %3086 = vmatpush1.msra.mxu0 0.0
        %3087 = vmatprep.subr.mxu0 0.0
        %3088 = vmatpush1.msra.mxu0 0.0
        %3089 = vmatprep.subr.mxu0 0.0
        %3090 = vmatpush1.msra.mxu0 0.0
        %3091 = vmatprep.subr.mxu0 0.0
        %3092 = vmatpush1.msra.mxu0 0.0
        %3093 = vmatprep.subr.mxu0 0.0
        %3094 = vmatpush1.msra.mxu0 0.0
        %3095 = vmatprep.subr.mxu0 0.0
        %3096 = vmatpush1.msra.mxu0 0.0
        %3097 = vmatprep.subr.mxu0 0.0
        %3098 = vmatpush1.msra.mxu0 0.0
        %3099 = vmatprep.subr.mxu0 0.0
        %3100 = vmatpush1.msra.mxu0 0.0
        %3101 = vmatprep.subr.mxu0 0.0
        %3102 = vmatpush1.msra.mxu0 0.0
        %3103 = vmatprep.subr.mxu0 0.0
        %3104 = vmatpush1.msra.mxu0 0.0
        %3105 = vmatprep.subr.mxu0 0.0
        %3106 = vmatpush1.msra.mxu0 0.0
        %3107 = vmatprep.subr.mxu0 0.0
        %3108 = vmatpush1.msra.mxu0 0.0
        %3109 = vmatprep.subr.mxu0 0.0
        %3110 = vmatpush1.msra.mxu0 0.0
        %3111 = vmatprep.subr.mxu0 0.0
        %3112 = vmatpush1.msra.mxu0 0.0
        %3113 = vmatprep.subr.mxu0 0.0
        %3114 = vmatpush1.msra.mxu0 0.0
        %3115 = vmatprep.subr.mxu0 0.0
        %3116 = vmatpush1.msra.mxu0 0.0
        %3117 = vmatprep.subr.mxu0 0.0
        %3118 = vmatpush1.msra.mxu0 0.0
        %3119 = vmatprep.subr.mxu0 0.0
        %3120 = vmatpush1.msra.mxu0 0.0
        %3121 = vmatprep.subr.mxu0 0.0
        %3122 = vmatpush1.msra.mxu0 0.0
        %3123 = vmatprep.subr.mxu0 0.0
        %3124 = vmatpush1.msra.mxu0 0.0
        %3125 = vmatprep.mubr.f32.mxu0 0.0
        %3126 = vmatmul.mubr.f32.gmra.mrb[0].mxu0 %v3059
        %v3127 = vpop.f32.mrb[0].mxu0
        %v3128 = vadd.f32 0.0, %v3127
        %v3129 = vpop.f32.mrb[0].mxu0
        %3130 = vdwg.mxu0
        %v3131 = vadd.f32 %v2889, %v3128
        %v3132 = vadd.f32 %v2049, %v3131
        %s3133 = scalar_lea.vmem [#allocation10], 1
        %v3134 = vld [vmem:[%s3133] sm:$0x1]
        %v3136 = vlaneseq
        %v3137 = vshrl.u32 %v3136, 7
        %v3138 = vsub.s32 0, %v3137
        %v3139 = vrot.slane %v3134, %v3138
        %v3141 = vadd.f32 %v3132, %v3139
        %s3142 = scalar_lea.vmem [#allocation12], 1
        %v3143 = vld [vmem:[%s3142] sm:$0x1]
        %s3144 = scalar_lea.vmem [#allocation13], 1
        %v3145 = vld [vmem:[%s3144] sm:$0x1]
        %v3146 = vsel %vm751, %v3141, 0.0
        %3147 = vadd.xlane.f32.xlu0 %v3146
        %v3148 = vpop.xlane.xlu0 %3147
        %v3149 = vmul.f32 %v3148, %v755
        %v3150 = vsub.f32 %v3141, %v3149
        %v3151 = vmul.f32 %v3150, %v3150
        %v3152 = vsel %vm751, %v3151, 0.0
        %3153 = vadd.xlane.f32.xlu0 %v3152
        %v3154 = vpop.xlane.xlu0 %3153
        %v3155 = vmul.f32 %v3154, %v755
        %v3156 = vadd.f32 %v3155, 1e-05
        %v3157 = vrsqrt.pop %v3156
        %v3158 = vmul.f32 %v3150, %v3157
        %v3160 = vlaneseq
        %v3161 = vshrl.u32 %v3160, 7
        %v3162 = vsub.s32 0, %v3161
        %v3163 = vrot.slane %v3143, %v3162
        %v3165 = vmul.f32 %v3158, %v3163
        %v3167 = vlaneseq
        %v3168 = vshrl.u32 %v3167, 7
        %v3169 = vsub.s32 0, %v3168
        %v3170 = vrot.slane %v3145, %v3169
        %v3172 = vadd.f32 %v3165, %v3170
        %s3173 = scalar_lea.vmem %s12, 32
        %v3174 = vld [vmem:[%s3173] sm:$0xff]
        %v3175 = vld [vmem:[%s3173 + $0x8] sm:$0xff]
        %v3176 = vld [vmem:[%s3173 + $0x10] sm:$0xff]
        %v3177 = vld [vmem:[%s3173 + $0x18] sm:$0xff]
        %s3178 = scalar_lea.vmem [#allocation15], 1
        %v3179 = vld [vmem:[%s3178] sm:$0x1]
        %v3181 = vlaneseq
        %v3182 = vshrl.u32 %v3181, 7
        %v3183 = vsub.s32 0, %v3182
        %v3184 = vrot.slane %v3179, %v3183
        %v3187 = vsel %vm751, %v3172, 0
        %3189 = vmatprep.subr.mxu0 0.0
        %3190 = vmatpush1.msra.mxu0 %v3174
        %3191 = vmatprep.subr.mxu0 0.0
        %3192 = vmatpush1.msra.mxu0 %v3175
        %3193 = vmatprep.subr.mxu0 0.0
        %3194 = vmatpush1.msra.mxu0 %v3176
        %3195 = vmatprep.subr.mxu0 0.0
        %3196 = vmatpush1.msra.mxu0 %v3177
        %3197 = vmatprep.subr.mxu0 0.0
        %3198 = vmatpush1.msra.mxu0 0.0
        %3199 = vmatprep.subr.mxu0 0.0
        %3200 = vmatpush1.msra.mxu0 0.0
        %3201 = vmatprep.subr.mxu0 0.0
        %3202 = vmatpush1.msra.mxu0 0.0
        %3203 = vmatprep.subr.mxu0 0.0
        %3204 = vmatpush1.msra.mxu0 0.0
        %3205 = vmatprep.subr.mxu0 0.0
        %3206 = vmatpush1.msra.mxu0 0.0
        %3207 = vmatprep.subr.mxu0 0.0
        %3208 = vmatpush1.msra.mxu0 0.0
        %3209 = vmatprep.subr.mxu0 0.0
        %3210 = vmatpush1.msra.mxu0 0.0
        %3211 = vmatprep.subr.mxu0 0.0
        %3212 = vmatpush1.msra.mxu0 0.0
        %3213 = vmatprep.subr.mxu0 0.0
        %3214 = vmatpush1.msra.mxu0 0.0
        %3215 = vmatprep.subr.mxu0 0.0
        %3216 = vmatpush1.msra.mxu0 0.0
        %3217 = vmatprep.subr.mxu0 0.0
        %3218 = vmatpush1.msra.mxu0 0.0
        %3219 = vmatprep.subr.mxu0 0.0
        %3220 = vmatpush1.msra.mxu0 0.0
        %3221 = vmatprep.subr.mxu0 0.0
        %3222 = vmatpush1.msra.mxu0 0.0
        %3223 = vmatprep.subr.mxu0 0.0
        %3224 = vmatpush1.msra.mxu0 0.0
        %3225 = vmatprep.subr.mxu0 0.0
        %3226 = vmatpush1.msra.mxu0 0.0
        %3227 = vmatprep.subr.mxu0 0.0
        %3228 = vmatpush1.msra.mxu0 0.0
        %3229 = vmatprep.subr.mxu0 0.0
        %3230 = vmatpush1.msra.mxu0 0.0
        %3231 = vmatprep.subr.mxu0 0.0
        %3232 = vmatpush1.msra.mxu0 0.0
        %3233 = vmatprep.subr.mxu0 0.0
        %3234 = vmatpush1.msra.mxu0 0.0
        %3235 = vmatprep.subr.mxu0 0.0
        %3236 = vmatpush1.msra.mxu0 0.0
        %3237 = vmatprep.subr.mxu0 0.0
        %3238 = vmatpush1.msra.mxu0 0.0
        %3239 = vmatprep.subr.mxu0 0.0
        %3240 = vmatpush1.msra.mxu0 0.0
        %3241 = vmatprep.subr.mxu0 0.0
        %3242 = vmatpush1.msra.mxu0 0.0
        %3243 = vmatprep.subr.mxu0 0.0
        %3244 = vmatpush1.msra.mxu0 0.0
        %3245 = vmatprep.subr.mxu0 0.0
        %3246 = vmatpush1.msra.mxu0 0.0
        %3247 = vmatprep.subr.mxu0 0.0
        %3248 = vmatpush1.msra.mxu0 0.0
        %3249 = vmatprep.subr.mxu0 0.0
        %3250 = vmatpush1.msra.mxu0 0.0
        %3251 = vmatprep.subr.mxu0 0.0
        %3252 = vmatpush1.msra.mxu0 0.0
        %3253 = vmatprep.mubr.f32.mxu0 0.0
        %3254 = vmatmul.mubr.f32.gmra.mrb[0].mxu0 %v3187
        %v3255 = vpop.f32.mrb[0].mxu0
        %v3256 = vadd.f32 %v3184, %v3255
        %v3257 = vpop.f32.mrb[0].mxu0
        %3258 = vdwg.mxu0
        %v3259 = vmul.f32 %v3256, 0.5
        %v3260 = vmul.f32 %v3256, 0.044715
        %v3261 = vmul.f32 %v3260, %v3256
        %v3262 = vmul.f32 %v3261, %v3256
        %v3263 = vadd.f32 %v3256, %v3262
        %v3264 = vmul.f32 %v3263, 0.7978846
        %v3265 = vtanh.pop %v3264
        %v3266 = vadd.f32 %v3265, 1.0
        %v3267 = vmul.f32 %v3259, %v3266
        %s3268 = scalar_lea.vmem %s14, 64
        %v3269 = vld [vmem:[%s3268] sm:$0xff]
        %v3270 = vld [vmem:[%s3268 + $0x8] sm:$0xff]
        %v3271 = vld [vmem:[%s3268 + $0x10] sm:$0xff]
        %v3272 = vld [vmem:[%s3268 + $0x18] sm:$0xff]
        %v3273 = vld [vmem:[%s3268 + $0x20] sm:$0xff]
        %v3274 = vld [vmem:[%s3268 + $0x28] sm:$0xff]
        %v3275 = vld [vmem:[%s3268 + $0x30] sm:$0xff]
        %v3276 = vld [vmem:[%s3268 + $0x38] sm:$0xff]
        %s3277 = scalar_lea.vmem %s15, 1
        %v3278 = vld [vmem:[%s3277] sm:$0x1]
        %v3280 = vlaneseq
        %v3281 = vshrl.u32 %v3280, 7
        %v3282 = vsub.s32 0, %v3281
        %v3283 = vrot.slane %v3278, %v3282
        %v3286 = vsel %vm1975, %v3267, 0
        %3288 = vmatprep.subr.mxu0 0.0
        %3289 = vmatpush1.msra.mxu0 %v3269
        %3290 = vmatprep.subr.mxu0 0.0
        %3291 = vmatpush1.msra.mxu0 %v3270
        %3292 = vmatprep.subr.mxu0 0.0
        %3293 = vmatpush1.msra.mxu0 %v3271
        %3294 = vmatprep.subr.mxu0 0.0
        %3295 = vmatpush1.msra.mxu0 %v3272
        %3296 = vmatprep.subr.mxu0 0.0
        %3297 = vmatpush1.msra.mxu0 %v3273
        %3298 = vmatprep.subr.mxu0 0.0
        %3299 = vmatpush1.msra.mxu0 %v3274
        %3300 = vmatprep.subr.mxu0 0.0
        %3301 = vmatpush1.msra.mxu0 %v3275
        %3302 = vmatprep.subr.mxu0 0.0
        %3303 = vmatpush1.msra.mxu0 %v3276
        %3304 = vmatprep.subr.mxu0 0.0
        %3305 = vmatpush1.msra.mxu0 0.0
        %3306 = vmatprep.subr.mxu0 0.0
        %3307 = vmatpush1.msra.mxu0 0.0
        %3308 = vmatprep.subr.mxu0 0.0
        %3309 = vmatpush1.msra.mxu0 0.0
        %3310 = vmatprep.subr.mxu0 0.0
        %3311 = vmatpush1.msra.mxu0 0.0
        %3312 = vmatprep.subr.mxu0 0.0
        %3313 = vmatpush1.msra.mxu0 0.0
        %3314 = vmatprep.subr.mxu0 0.0
        %3315 = vmatpush1.msra.mxu0 0.0
        %3316 = vmatprep.subr.mxu0 0.0
        %3317 = vmatpush1.msra.mxu0 0.0
        %3318 = vmatprep.subr.mxu0 0.0
        %3319 = vmatpush1.msra.mxu0 0.0
        %3320 = vmatprep.subr.mxu0 0.0
        %3321 = vmatpush1.msra.mxu0 0.0
        %3322 = vmatprep.subr.mxu0 0.0
        %3323 = vmatpush1.msra.mxu0 0.0
        %3324 = vmatprep.subr.mxu0 0.0
        %3325 = vmatpush1.msra.mxu0 0.0
        %3326 = vmatprep.subr.mxu0 0.0
        %3327 = vmatpush1.msra.mxu0 0.0
        %3328 = vmatprep.subr.mxu0 0.0
        %3329 = vmatpush1.msra.mxu0 0.0
        %3330 = vmatprep.subr.mxu0 0.0
        %3331 = vmatpush1.msra.mxu0 0.0
        %3332 = vmatprep.subr.mxu0 0.0
        %3333 = vmatpush1.msra.mxu0 0.0
        %3334 = vmatprep.subr.mxu0 0.0
        %3335 = vmatpush1.msra.mxu0 0.0
        %3336 = vmatprep.subr.mxu0 0.0
        %3337 = vmatpush1.msra.mxu0 0.0
        %3338 = vmatprep.subr.mxu0 0.0
        %3339 = vmatpush1.msra.mxu0 0.0
        %3340 = vmatprep.subr.mxu0 0.0
        %3341 = vmatpush1.msra.mxu0 0.0
        %3342 = vmatprep.subr.mxu0 0.0
        %3343 = vmatpush1.msra.mxu0 0.0
        %3344 = vmatprep.subr.mxu0 0.0
        %3345 = vmatpush1.msra.mxu0 0.0
        %3346 = vmatprep.subr.mxu0 0.0
        %3347 = vmatpush1.msra.mxu0 0.0
        %3348 = vmatprep.subr.mxu0 0.0
        %3349 = vmatpush1.msra.mxu0 0.0
        %3350 = vmatprep.subr.mxu0 0.0
        %3351 = vmatpush1.msra.mxu0 0.0
        %3352 = vmatprep.mubr.f32.mxu0 0.0
        %3353 = vmatmul.mubr.f32.gmra.mrb[0].mxu0 %v3286
        %v3354 = vpop.f32.mrb[0].mxu0
        %v3355 = vadd.f32 %v3283, %v3354
        %v3356 = vpop.f32.mrb[0].mxu0
        %3357 = vdwg.mxu0
        %v3358 = vadd.f32 %v3141, %v3355
        %v3359 = vld [vmem:[%s16] sm:$0xf]
        %v3361 = vsel %vm867, %v3359, 0
        %3363 = vmatprep.subr.mxu0 0.0
        %3364 = vmatpush1.msra.mxu0 %v3358
        %3365 = vmatprep.subr.mxu0 0.0
        %3366 = vmatpush1.msra.mxu0 0.0
        %3367 = vmatprep.subr.mxu0 0.0
        %3368 = vmatpush1.msra.mxu0 0.0
        %3369 = vmatprep.subr.mxu0 0.0
        %3370 = vmatpush1.msra.mxu0 0.0
        %3371 = vmatprep.subr.mxu0 0.0
        %3372 = vmatpush1.msra.mxu0 0.0
        %3373 = vmatprep.subr.mxu0 0.0
        %3374 = vmatpush1.msra.mxu0 0.0
        %3375 = vmatprep.subr.mxu0 0.0
        %3376 = vmatpush1.msra.mxu0 0.0
        %3377 = vmatprep.subr.mxu0 0.0
        %3378 = vmatpush1.msra.mxu0 0.0
        %3379 = vmatprep.subr.mxu0 0.0
        %3380 = vmatpush1.msra.mxu0 0.0
        %3381 = vmatprep.subr.mxu0 0.0
        %3382 = vmatpush1.msra.mxu0 0.0
        %3383 = vmatprep.subr.mxu0 0.0
        %3384 = vmatpush1.msra.mxu0 0.0
        %3385 = vmatprep.subr.mxu0 0.0
        %3386 = vmatpush1.msra.mxu0 0.0
        %3387 = vmatprep.subr.mxu0 0.0
        %3388 = vmatpush1.msra.mxu0 0.0
        %3389 = vmatprep.subr.mxu0 0.0
        %3390 = vmatpush1.msra.mxu0 0.0
        %3391 = vmatprep.subr.mxu0 0.0
        %3392 = vmatpush1.msra.mxu0 0.0
        %3393 = vmatprep.subr.mxu0 0.0
        %3394 = vmatpush1.msra.mxu0 0.0
        %3395 = vmatprep.subr.mxu0 0.0
        %3396 = vmatpush1.msra.mxu0 0.0
        %3397 = vmatprep.subr.mxu0 0.0
        %3398 = vmatpush1.msra.mxu0 0.0
        %3399 = vmatprep.subr.mxu0 0.0
        %3400 = vmatpush1.msra.mxu0 0.0
        %3401 = vmatprep.subr.mxu0 0.0
        %3402 = vmatpush1.msra.mxu0 0.0
        %3403 = vmatprep.subr.mxu0 0.0
        %3404 = vmatpush1.msra.mxu0 0.0
        %3405 = vmatprep.subr.mxu0 0.0
        %3406 = vmatpush1.msra.mxu0 0.0
        %3407 = vmatprep.subr.mxu0 0.0
        %3408 = vmatpush1.msra.mxu0 0.0
        %3409 = vmatprep.subr.mxu0 0.0
        %3410 = vmatpush1.msra.mxu0 0.0
        %3411 = vmatprep.subr.mxu0 0.0
        %3412 = vmatpush1.msra.mxu0 0.0
        %3413 = vmatprep.subr.mxu0 0.0
        %3414 = vmatpush1.msra.mxu0 0.0
        %3415 = vmatprep.subr.mxu0 0.0
        %3416 = vmatpush1.msra.mxu0 0.0
        %3417 = vmatprep.subr.mxu0 0.0
        %3418 = vmatpush1.msra.mxu0 0.0
        %3419 = vmatprep.subr.mxu0 0.0
        %3420 = vmatpush1.msra.mxu0 0.0
        %3421 = vmatprep.subr.mxu0 0.0
        %3422 = vmatpush1.msra.mxu0 0.0
        %3423 = vmatprep.subr.mxu0 0.0
        %3424 = vmatpush1.msra.mxu0 0.0
        %3425 = vmatprep.subr.mxu0 0.0
        %3426 = vmatpush1.msra.mxu0 0.0
        %3427 = vmatprep.mubr.f32.mxu0 0.0
        %3428 = vmatmul.mubr.f32.gmra.mrb[0].mxu0 %v3361
        %v3429 = vpop.f32.mrb[0].mxu0
        %v3430 = vadd.f32 0.0, %v3429
        %v3431 = vpop.f32.mrb[0].mxu0
        %3432 = vdwg.mxu0
        %v3433 = vld [vmem:[%s17] sm:$0xf]
        %v3434 = vmul.f32 %v3430, %v3433
        %vm3435 = vcmask 257024
        %v3436 = vsel %vm3435, %v3434, 0.0
        %3437 = vadd.xlane.f32.xlu0 %v3436
        %v3438 = vpop.xlane.xlu0 %3437
        %v3439 = vld [vmem:[%s18] sm:$0xf]
        %v3440 = vadd.f32 %v3438, %v3439
        %vm3441 = vcmask 3072
        %3442 = vst.msk [vmem:[%s724] sm:$0xf] %vm3441, %v3440
        %p3443 = scmp.lt.s32.totalorder %s35, 1
        %s3444 = scalar_select %p3443, %s35, 1
        %s3445 = smul.addr %s3444, 4
        %s3446 = scalar_lea.vmem %s19, %s3445
        // Predicated region
        $region133: #{tpu_custom_call.1} parent=95 // pred_check
          %p3447 = pneg %p457
        $region134: #{tpu_custom_call.1} parent=95 // pred_check_branch
          %3449 = sbr.rel (%p3447) target = $region136
        $region135: #{tpu_custom_call.1} parent=95 // pred_region
          _
        $region136: #{tpu_custom_call.1} parent=95 // pred_fallthru
          _
      $region96: #{tpu_custom_call.1} parent=5 // pred_fallthru
        _
      %p3450 = scmp.le.s32.totalorder 2, %s30
      // Predicated region
      $region137: #{tpu_custom_call.1} parent=5 // pred_check
        %p3451 = pneg %p3450
      $region138: #{tpu_custom_call.1} parent=5 // pred_check_branch
        %3453 = sbr.rel (%p3451) target = $region140
      $region139: #{tpu_custom_call.1} parent=5 // pred_region
        %s3454 = ssub.s32 %s30, 2
        // Predicated region
        $region141: #{tpu_custom_call.1} parent=139 // pred_check
          %p3455 = pneg %p463
        $region142: #{tpu_custom_call.1} parent=139 // pred_check_branch
          %3457 = sbr.rel (%p3455) target = $region144
        $region143: #{tpu_custom_call.1} parent=139 // pred_region
          %p3458 = scmp.lt.s32.totalorder %s36, 1
          %s3459 = scalar_select %p3458, %s36, 1
          %s3460 = smul.addr %s3459, 4
          %s3461 = scalar_lea.vmem %s19, %s3460
        $region144: #{tpu_custom_call.1} parent=139 // pred_fallthru
          _
      $region140: #{tpu_custom_call.1} parent=5 // pred_fallthru
        _
    $region6: #{tpu_custom_call.1} parent=1 // loop_footer
      %s34 = sadd.s32 1, %s30
    $region7: #{tpu_custom_call.1} parent=1 // loop_footer_branch
      %29 = sbr.rel target = $region3
    $region8: #{tpu_custom_call.1} parent=1 // loop_exit
      _
    %3462 = vsyncpa [#allocation3], 1
    %s3463 = scalar_lea.sflag [#allocation3], 1
    %3464 = vsyncpa %s3463, 1
    %3465 = vsyncpa [#allocation5], 1
    %3466 = vsyncpa [#allocation8], 1
    %3467 = vsyncpa [#allocation11], 1
    %3468 = vsyncpa [#allocation14], 1

</llo_original>
